<compile_context>
chip_gen: v7x
topology: tpu7x:2x2x1
jax: 0.10.0
libtpu: 0.0.40
codegen_flags: <defaults>
</compile_context>

<pallas_src>
import functools

import numpy as np
import jax
import jax.numpy as jnp
from jax import lax
from jax.experimental import pallas as pl
from jax.experimental.pallas import tpu as pltpu


def _spatial_gate_kernel(x_ref, w_ref, out_ref, pad_ref, gflat_ref, *, ks, H, W):
    """One batch element per grid step.

    x_ref    : (C, H*W)  VMEM — lane-dense flattened input block.
    w_ref    : (2*ks*ks + 1,) f32 SMEM — BN-folded conv taps (max-plane taps,
               then mean-plane taps) followed by the folded bias.
    out_ref  : (C, H*W)  VMEM — lane-dense output block.
    pad_ref  : (2, H+2p, W+2p) f32 VMEM scratch — zero-padded pooled planes.
    gflat_ref: (1, H*W)  f32 VMEM scratch — flattened sigmoid gate.
    """
    C, HW = x_ref.shape
    pad = (ks - 1) // 2
    f32 = jnp.float32

    # ---- fused ChannelPool: one pass over x, running max + running sum -----
    run_max = None
    run_sum = None
    c0 = 0
    while c0 < C:                                   # static loop, 8-sublane chunks
        cs = min(8, C - c0)
        xc = x_ref[c0:c0 + cs, :].astype(f32)       # one read feeds both reductions
        cmax = jnp.max(xc, axis=0, keepdims=True)   # (1, HW)
        csum = jnp.sum(xc, axis=0, keepdims=True)   # (1, HW)
        run_max = cmax if run_max is None else jnp.maximum(run_max, cmax)
        run_sum = csum if run_sum is None else run_sum + csum
        c0 += cs
    p_max = run_max                                 # (1, HW)
    p_mean = run_sum * (1.0 / C)                    # constant multiply, no divide

    # ---- repack pooled maps into small zero-padded 2-D planes (scratch) ----
    pad_ref[...] = jnp.zeros_like(pad_ref)          # border must be zero each step
    for y in range(H):
        pad_ref[0, pad + y:pad + y + 1, pad:pad + W] = p_max[:, y * W:(y + 1) * W]
        pad_ref[1, pad + y:pad + y + 1, pad:pad + W] = p_mean[:, y * W:(y + 1) * W]

    # ---- 7x7, 2->1 conv (BN folded): hoisted lane shifts, 4 accumulators ----
    bias = w_ref[2 * ks * ks]
    accs = [jnp.full((H, W), bias, f32)] + [jnp.zeros((H, W), f32) for _ in range(3)]
    t = 0
    for ci in range(2):
        for dx in range(ks):
            band = pad_ref[ci, :, dx:dx + W]        # (Hp, W): ONE lane shift / (plane, dx)
            for dy in range(ks):
                tap = w_ref[ci * ks * ks + dy * ks + dx]          # SMEM scalar
                accs[t % 4] = accs[t % 4] + tap * band[dy:dy + H, :]  # sublane slice
                t += 1
    acc = (accs[0] + accs[1]) + (accs[2] + accs[3])

    # ---- sigmoid on the EUP (tanh form, no VALU divide), flatten gate ------
    gate2d = 0.5 * jnp.tanh(0.5 * acc) + 0.5        # == sigmoid(acc), full precision
    for y in range(H):
        gflat_ref[:, y * W:(y + 1) * W] = gate2d[y:y + 1, :]

    # ---- lane-dense broadcast multiply + store ------------------------------
    gchunk = min(8, C)
    gate_b = jnp.broadcast_to(gflat_ref[...], (gchunk, HW))   # hoisted broadcast
    c0 = 0
    while c0 < C:
        cs = min(gchunk, C - c0)
        xb = x_ref[c0:c0 + cs, :].astype(f32)
        out_ref[c0:c0 + cs, :] = (xb * gate_b[:cs, :]).astype(out_ref.dtype)
        c0 += cs


def spatial_gate(x, conv_w, bn_gamma, bn_beta, bn_mean, bn_var, *, eps=1e-5):
    """SpatialGate forward.  x: (B, C, H, W).  conv_w: (2, ks, ks) — the PyTorch
    Conv2d weight (1, 2, ks, ks) with the output-channel axis squeezed.  BN
    parameters are scalars (the conv has a single output channel)."""
    B, C, H, W = x.shape
    ks = conv_w.shape[-1]
    pad = (ks - 1) // 2
    HW = H * W
    Hp, Wp = H + 2 * pad, W + 2 * pad

    # Fold eval-mode BatchNorm into the conv taps + a single bias.
    inv_std = bn_gamma / jnp.sqrt(bn_var + eps)
    w_eff = (conv_w.astype(jnp.float32) * inv_std).reshape(-1)        # (2*ks*ks,)
    b_eff = bn_beta - bn_mean * inv_std
    params = jnp.concatenate(
        [w_eff, jnp.reshape(b_eff, (1,)).astype(jnp.float32)])        # (2*ks*ks+1,)

    # Lane-dense layout: merge the minor spatial dims (free, no data movement).
    x_flat = x.reshape(B, C, HW)

    kernel = functools.partial(_spatial_gate_kernel, ks=ks, H=H, W=W)

    grid_spec = pltpu.PrefetchScalarGridSpec(
        num_scalar_prefetch=0,
        grid=(B,),                                   # one batch element per step
        in_specs=[
            pl.BlockSpec((None, C, HW), lambda b: (b, 0, 0)),          # x (flat)
            pl.BlockSpec(memory_space=pltpu.MemorySpace.SMEM),         # taps+bias
        ],
        out_specs=pl.BlockSpec((None, C, HW), lambda b: (b, 0, 0)),
        scratch_shapes=[
            pltpu.VMEM((2, Hp, Wp), jnp.float32),    # zero-padded pooled planes
            pltpu.VMEM((1, HW), jnp.float32),        # flattened gate
        ],
    )

    # Per-step VMEM: in + out blocks (double-buffered) + small scratch.  Raise
    # the scoped limit only as far as needed, capped below v7x's 64 MiB VMEM.
    block_bytes = 2 * 4 * C * HW                     # in + out, f32 upper bound
    vmem_limit = int(min(48 * 1024 * 1024,
                         max(32 * 1024 * 1024, 2 * block_bytes + (4 << 20))))

    out_flat = pl.pallas_call(
        kernel,
        grid_spec=grid_spec,
        out_shape=jax.ShapeDtypeStruct((B, C, HW), x.dtype),
        compiler_params=pltpu.CompilerParams(
            dimension_semantics=("parallel",),
            vmem_limit_bytes=vmem_limit),
    )(x_flat, params)
    return out_flat.reshape(B, C, H, W)


def _reference(x, conv_w, gamma, beta, mean, var, eps):
    """Pure-JAX reference matching the PyTorch module (eval-mode BN)."""
    ks = conv_w.shape[-1]
    p = (ks - 1) // 2
    x_max = jnp.max(x, axis=1, keepdims=True)
    x_mean = jnp.mean(x, axis=1, keepdims=True)
    xc = jnp.concatenate([x_max, x_mean], axis=1)                 # (B, 2, H, W)
    conv = lax.conv_general_dilated(
        xc, conv_w[None].astype(jnp.float32),
        window_strides=(1, 1), padding=((p, p), (p, p)),
        dimension_numbers=("NCHW", "OIHW", "NCHW"),
        precision=lax.Precision.HIGHEST)                          # (B, 1, H, W)
    bn = (conv - mean) * (gamma / jnp.sqrt(var + eps)) + beta
    return x * jax.nn.sigmoid(bn)


if __name__ == "__main__":
    B, C, H, W = 2, 4, 16, 16
    ks = 7

    root = jax.random.PRNGKey(0)
    kx, kw = jax.random.split(root, 2)

    x = jax.random.normal(kx, (B, C, H, W), jnp.float32)
    # PyTorch Conv2d default init bound = 1/sqrt(fan_in) = 1/sqrt(2*7*7)
    bound = float(1.0 / np.sqrt(2 * ks * ks))
    conv_w = jax.random.uniform(kw, (2, ks, ks), jnp.float32, -bound, bound)

    # Non-trivial eval-mode BatchNorm parameters so the BN fold is exercised.
    bn_gamma = jnp.float32(1.3)
    bn_beta = jnp.float32(-0.2)
    bn_mean = jnp.float32(0.05)
    bn_var = jnp.float32(0.8)

    out = spatial_gate(x, conv_w, bn_gamma, bn_beta, bn_mean, bn_var)
    out = jax.block_until_ready(out)

    ref = _reference(x, conv_w, bn_gamma, bn_beta, bn_mean, bn_var, eps=1e-5)
    np.testing.assert_allclose(np.asarray(out), np.asarray(ref),
                               rtol=2e-5, atol=2e-5)

    print("KERNEL_OK")
</pallas_src>

<mosaic_0001>
module attributes {stable_mosaic.version = 11 : i64} {
  func.func @_spatial_gate_kernel(%arg0: i32, %arg1: memref<1x4x256xf32, #tpu.memory_space<vmem>>, %arg2: memref<99xf32, #tpu.memory_space<smem>>, %arg3: memref<1x4x256xf32, #tpu.memory_space<vmem>>, %arg4: memref<2x22x22xf32, #tpu.memory_space<vmem>>, %arg5: memref<1x256xf32, #tpu.memory_space<vmem>>) attributes {dimension_semantics = [#tpu.dimension_semantics<parallel>], iteration_bounds = array<i64: 2>, scalar_prefetch = 0 : i64, scratch_operands = 2 : i64, tpu.core_type = #tpu.core_type<tc>, window_params = [{transform_indices = @transform_0, window_bounds = array<i64: 1, 4, 256>}, {transform_indices = @transform_1, window_bounds = array<i64: 99>}, {transform_indices = @transform_2, window_bounds = array<i64: 1, 4, 256>}]} {
    %c0 = arith.constant 0 : index
    %c0_0 = arith.constant 0 : index
    %c0_1 = arith.constant 0 : index
    %0 = vector.load %arg1[%c0, %c0_0, %c0_1] : memref<1x4x256xf32, #tpu.memory_space<vmem>>, vector<1x4x256xf32>
    %1 = vector.shape_cast %0 : vector<1x4x256xf32> to vector<4x256xf32>
    %cst = arith.constant dense<0xFF800000> : vector<256xf32>
    %2 = vector.multi_reduction <maximumf>, %1, %cst [0] : vector<4x256xf32> to vector<256xf32>
    %3 = vector.shape_cast %2 : vector<256xf32> to vector<1x256xf32>
    %cst_2 = arith.constant dense<0.000000e+00> : vector<256xf32>
    %4 = vector.multi_reduction <add>, %1, %cst_2 [0] : vector<4x256xf32> to vector<256xf32>
    %5 = vector.shape_cast %4 : vector<256xf32> to vector<1x256xf32>
    %cst_3 = arith.constant 2.500000e-01 : f32
    %6 = vector.broadcast %cst_3 : f32 to vector<1x256xf32>
    %7 = arith.mulf %5, %6 : vector<1x256xf32>
    %cst_4 = arith.constant 0.000000e+00 : f32
    %8 = vector.broadcast %cst_4 : f32 to vector<2x22x22xf32>
    %c0_5 = arith.constant 0 : index
    %c0_6 = arith.constant 0 : index
    %c0_7 = arith.constant 0 : index
    %9 = vector.load %arg4[%c0_5, %c0_6, %c0_7] : memref<2x22x22xf32, #tpu.memory_space<vmem>>, vector<2x22x22xf32>
    tpu.vector_store %arg4[%c0_5, %c0_6, %c0_7], %8 {strides = array<i32>} : memref<2x22x22xf32, #tpu.memory_space<vmem>>, vector<2x22x22xf32>,
    %10 = vector.extract_strided_slice %3 {offsets = [0, 0], sizes = [1, 16], strides = [1, 1]} : vector<1x256xf32> to vector<1x16xf32>
    %c0_8 = arith.constant 0 : index
    %c3 = arith.constant 3 : index
    %c3_9 = arith.constant 3 : index
    %11 = vector.load %arg4[%c0_8, %c3, %c3_9] : memref<2x22x22xf32, #tpu.memory_space<vmem>>, vector<1x1x16xf32>
    %12 = vector.shape_cast %11 : vector<1x1x16xf32> to vector<1x16xf32>
    %13 = vector.shape_cast %10 : vector<1x16xf32> to vector<1x1x16xf32>
    tpu.vector_store %arg4[%c0_8, %c3, %c3_9], %13 {strides = array<i32>} : memref<2x22x22xf32, #tpu.memory_space<vmem>>, vector<1x1x16xf32>,
    %14 = vector.extract_strided_slice %7 {offsets = [0, 0], sizes = [1, 16], strides = [1, 1]} : vector<1x256xf32> to vector<1x16xf32>
    %c1 = arith.constant 1 : index
    %c3_10 = arith.constant 3 : index
    %c3_11 = arith.constant 3 : index
    %15 = vector.load %arg4[%c1, %c3_10, %c3_11] : memref<2x22x22xf32, #tpu.memory_space<vmem>>, vector<1x1x16xf32>
    %16 = vector.shape_cast %15 : vector<1x1x16xf32> to vector<1x16xf32>
    %17 = vector.shape_cast %14 : vector<1x16xf32> to vector<1x1x16xf32>
    tpu.vector_store %arg4[%c1, %c3_10, %c3_11], %17 {strides = array<i32>} : memref<2x22x22xf32, #tpu.memory_space<vmem>>, vector<1x1x16xf32>,
    %18 = vector.extract_strided_slice %3 {offsets = [0, 16], sizes = [1, 16], strides = [1, 1]} : vector<1x256xf32> to vector<1x16xf32>
    %c0_12 = arith.constant 0 : index
    %c4 = arith.constant 4 : index
    %c3_13 = arith.constant 3 : index
    %19 = vector.load %arg4[%c0_12, %c4, %c3_13] : memref<2x22x22xf32, #tpu.memory_space<vmem>>, vector<1x1x16xf32>
    %20 = vector.shape_cast %19 : vector<1x1x16xf32> to vector<1x16xf32>
    %21 = vector.shape_cast %18 : vector<1x16xf32> to vector<1x1x16xf32>
    tpu.vector_store %arg4[%c0_12, %c4, %c3_13], %21 {strides = array<i32>} : memref<2x22x22xf32, #tpu.memory_space<vmem>>, vector<1x1x16xf32>,
    %22 = vector.extract_strided_slice %7 {offsets = [0, 16], sizes = [1, 16], strides = [1, 1]} : vector<1x256xf32> to vector<1x16xf32>
    %c1_14 = arith.constant 1 : index
    %c4_15 = arith.constant 4 : index
    %c3_16 = arith.constant 3 : index
    %23 = vector.load %arg4[%c1_14, %c4_15, %c3_16] : memref<2x22x22xf32, #tpu.memory_space<vmem>>, vector<1x1x16xf32>
    %24 = vector.shape_cast %23 : vector<1x1x16xf32> to vector<1x16xf32>
    %25 = vector.shape_cast %22 : vector<1x16xf32> to vector<1x1x16xf32>
    tpu.vector_store %arg4[%c1_14, %c4_15, %c3_16], %25 {strides = array<i32>} : memref<2x22x22xf32, #tpu.memory_space<vmem>>, vector<1x1x16xf32>,
    %26 = vector.extract_strided_slice %3 {offsets = [0, 32], sizes = [1, 16], strides = [1, 1]} : vector<1x256xf32> to vector<1x16xf32>
    %c0_17 = arith.constant 0 : index
    %c5 = arith.constant 5 : index
    %c3_18 = arith.constant 3 : index
    %27 = vector.load %arg4[%c0_17, %c5, %c3_18] : memref<2x22x22xf32, #tpu.memory_space<vmem>>, vector<1x1x16xf32>
    %28 = vector.shape_cast %27 : vector<1x1x16xf32> to vector<1x16xf32>
    %29 = vector.shape_cast %26 : vector<1x16xf32> to vector<1x1x16xf32>
    tpu.vector_store %arg4[%c0_17, %c5, %c3_18], %29 {strides = array<i32>} : memref<2x22x22xf32, #tpu.memory_space<vmem>>, vector<1x1x16xf32>,
    %30 = vector.extract_strided_slice %7 {offsets = [0, 32], sizes = [1, 16], strides = [1, 1]} : vector<1x256xf32> to vector<1x16xf32>
    %c1_19 = arith.constant 1 : index
    %c5_20 = arith.constant 5 : index
    %c3_21 = arith.constant 3 : index
    %31 = vector.load %arg4[%c1_19, %c5_20, %c3_21] : memref<2x22x22xf32, #tpu.memory_space<vmem>>, vector<1x1x16xf32>
    %32 = vector.shape_cast %31 : vector<1x1x16xf32> to vector<1x16xf32>
    %33 = vector.shape_cast %30 : vector<1x16xf32> to vector<1x1x16xf32>
    tpu.vector_store %arg4[%c1_19, %c5_20, %c3_21], %33 {strides = array<i32>} : memref<2x22x22xf32, #tpu.memory_space<vmem>>, vector<1x1x16xf32>,
    %34 = vector.extract_strided_slice %3 {offsets = [0, 48], sizes = [1, 16], strides = [1, 1]} : vector<1x256xf32> to vector<1x16xf32>
    %c0_22 = arith.constant 0 : index
    %c6 = arith.constant 6 : index
    %c3_23 = arith.constant 3 : index
    %35 = vector.load %arg4[%c0_22, %c6, %c3_23] : memref<2x22x22xf32, #tpu.memory_space<vmem>>, vector<1x1x16xf32>
    %36 = vector.shape_cast %35 : vector<1x1x16xf32> to vector<1x16xf32>
    %37 = vector.shape_cast %34 : vector<1x16xf32> to vector<1x1x16xf32>
    tpu.vector_store %arg4[%c0_22, %c6, %c3_23], %37 {strides = array<i32>} : memref<2x22x22xf32, #tpu.memory_space<vmem>>, vector<1x1x16xf32>,
    %38 = vector.extract_strided_slice %7 {offsets = [0, 48], sizes = [1, 16], strides = [1, 1]} : vector<1x256xf32> to vector<1x16xf32>
    %c1_24 = arith.constant 1 : index
    %c6_25 = arith.constant 6 : index
    %c3_26 = arith.constant 3 : index
    %39 = vector.load %arg4[%c1_24, %c6_25, %c3_26] : memref<2x22x22xf32, #tpu.memory_space<vmem>>, vector<1x1x16xf32>
    %40 = vector.shape_cast %39 : vector<1x1x16xf32> to vector<1x16xf32>
    %41 = vector.shape_cast %38 : vector<1x16xf32> to vector<1x1x16xf32>
    tpu.vector_store %arg4[%c1_24, %c6_25, %c3_26], %41 {strides = array<i32>} : memref<2x22x22xf32, #tpu.memory_space<vmem>>, vector<1x1x16xf32>,
    %42 = vector.extract_strided_slice %3 {offsets = [0, 64], sizes = [1, 16], strides = [1, 1]} : vector<1x256xf32> to vector<1x16xf32>
    %c0_27 = arith.constant 0 : index
    %c7 = arith.constant 7 : index
    %c3_28 = arith.constant 3 : index
    %43 = vector.load %arg4[%c0_27, %c7, %c3_28] : memref<2x22x22xf32, #tpu.memory_space<vmem>>, vector<1x1x16xf32>
    %44 = vector.shape_cast %43 : vector<1x1x16xf32> to vector<1x16xf32>
    %45 = vector.shape_cast %42 : vector<1x16xf32> to vector<1x1x16xf32>
    tpu.vector_store %arg4[%c0_27, %c7, %c3_28], %45 {strides = array<i32>} : memref<2x22x22xf32, #tpu.memory_space<vmem>>, vector<1x1x16xf32>,
    %46 = vector.extract_strided_slice %7 {offsets = [0, 64], sizes = [1, 16], strides = [1, 1]} : vector<1x256xf32> to vector<1x16xf32>
    %c1_29 = arith.constant 1 : index
    %c7_30 = arith.constant 7 : index
    %c3_31 = arith.constant 3 : index
    %47 = vector.load %arg4[%c1_29, %c7_30, %c3_31] : memref<2x22x22xf32, #tpu.memory_space<vmem>>, vector<1x1x16xf32>
    %48 = vector.shape_cast %47 : vector<1x1x16xf32> to vector<1x16xf32>
    %49 = vector.shape_cast %46 : vector<1x16xf32> to vector<1x1x16xf32>
    tpu.vector_store %arg4[%c1_29, %c7_30, %c3_31], %49 {strides = array<i32>} : memref<2x22x22xf32, #tpu.memory_space<vmem>>, vector<1x1x16xf32>,
    %50 = vector.extract_strided_slice %3 {offsets = [0, 80], sizes = [1, 16], strides = [1, 1]} : vector<1x256xf32> to vector<1x16xf32>
    %c0_32 = arith.constant 0 : index
    %c8 = arith.constant 8 : index
    %c3_33 = arith.constant 3 : index
    %51 = vector.load %arg4[%c0_32, %c8, %c3_33] : memref<2x22x22xf32, #tpu.memory_space<vmem>>, vector<1x1x16xf32>
    %52 = vector.shape_cast %51 : vector<1x1x16xf32> to vector<1x16xf32>
    %53 = vector.shape_cast %50 : vector<1x16xf32> to vector<1x1x16xf32>
    tpu.vector_store %arg4[%c0_32, %c8, %c3_33], %53 {strides = array<i32>} : memref<2x22x22xf32, #tpu.memory_space<vmem>>, vector<1x1x16xf32>,
    %54 = vector.extract_strided_slice %7 {offsets = [0, 80], sizes = [1, 16], strides = [1, 1]} : vector<1x256xf32> to vector<1x16xf32>
    %c1_34 = arith.constant 1 : index
    %c8_35 = arith.constant 8 : index
    %c3_36 = arith.constant 3 : index
    %55 = vector.load %arg4[%c1_34, %c8_35, %c3_36] : memref<2x22x22xf32, #tpu.memory_space<vmem>>, vector<1x1x16xf32>
    %56 = vector.shape_cast %55 : vector<1x1x16xf32> to vector<1x16xf32>
    %57 = vector.shape_cast %54 : vector<1x16xf32> to vector<1x1x16xf32>
    tpu.vector_store %arg4[%c1_34, %c8_35, %c3_36], %57 {strides = array<i32>} : memref<2x22x22xf32, #tpu.memory_space<vmem>>, vector<1x1x16xf32>,
    %58 = vector.extract_strided_slice %3 {offsets = [0, 96], sizes = [1, 16], strides = [1, 1]} : vector<1x256xf32> to vector<1x16xf32>
    %c0_37 = arith.constant 0 : index
    %c9 = arith.constant 9 : index
    %c3_38 = arith.constant 3 : index
    %59 = vector.load %arg4[%c0_37, %c9, %c3_38] : memref<2x22x22xf32, #tpu.memory_space<vmem>>, vector<1x1x16xf32>
    %60 = vector.shape_cast %59 : vector<1x1x16xf32> to vector<1x16xf32>
    %61 = vector.shape_cast %58 : vector<1x16xf32> to vector<1x1x16xf32>
    tpu.vector_store %arg4[%c0_37, %c9, %c3_38], %61 {strides = array<i32>} : memref<2x22x22xf32, #tpu.memory_space<vmem>>, vector<1x1x16xf32>,
    %62 = vector.extract_strided_slice %7 {offsets = [0, 96], sizes = [1, 16], strides = [1, 1]} : vector<1x256xf32> to vector<1x16xf32>
    %c1_39 = arith.constant 1 : index
    %c9_40 = arith.constant 9 : index
    %c3_41 = arith.constant 3 : index
    %63 = vector.load %arg4[%c1_39, %c9_40, %c3_41] : memref<2x22x22xf32, #tpu.memory_space<vmem>>, vector<1x1x16xf32>
    %64 = vector.shape_cast %63 : vector<1x1x16xf32> to vector<1x16xf32>
    %65 = vector.shape_cast %62 : vector<1x16xf32> to vector<1x1x16xf32>
    tpu.vector_store %arg4[%c1_39, %c9_40, %c3_41], %65 {strides = array<i32>} : memref<2x22x22xf32, #tpu.memory_space<vmem>>, vector<1x1x16xf32>,
    %66 = vector.extract_strided_slice %3 {offsets = [0, 112], sizes = [1, 16], strides = [1, 1]} : vector<1x256xf32> to vector<1x16xf32>
    %c0_42 = arith.constant 0 : index
    %c10 = arith.constant 10 : index
    %c3_43 = arith.constant 3 : index
    %67 = vector.load %arg4[%c0_42, %c10, %c3_43] : memref<2x22x22xf32, #tpu.memory_space<vmem>>, vector<1x1x16xf32>
    %68 = vector.shape_cast %67 : vector<1x1x16xf32> to vector<1x16xf32>
    %69 = vector.shape_cast %66 : vector<1x16xf32> to vector<1x1x16xf32>
    tpu.vector_store %arg4[%c0_42, %c10, %c3_43], %69 {strides = array<i32>} : memref<2x22x22xf32, #tpu.memory_space<vmem>>, vector<1x1x16xf32>,
    %70 = vector.extract_strided_slice %7 {offsets = [0, 112], sizes = [1, 16], strides = [1, 1]} : vector<1x256xf32> to vector<1x16xf32>
    %c1_44 = arith.constant 1 : index
    %c10_45 = arith.constant 10 : index
    %c3_46 = arith.constant 3 : index
    %71 = vector.load %arg4[%c1_44, %c10_45, %c3_46] : memref<2x22x22xf32, #tpu.memory_space<vmem>>, vector<1x1x16xf32>
    %72 = vector.shape_cast %71 : vector<1x1x16xf32> to vector<1x16xf32>
    %73 = vector.shape_cast %70 : vector<1x16xf32> to vector<1x1x16xf32>
    tpu.vector_store %arg4[%c1_44, %c10_45, %c3_46], %73 {strides = array<i32>} : memref<2x22x22xf32, #tpu.memory_space<vmem>>, vector<1x1x16xf32>,
    %74 = vector.extract_strided_slice %3 {offsets = [0, 128], sizes = [1, 16], strides = [1, 1]} : vector<1x256xf32> to vector<1x16xf32>
    %c0_47 = arith.constant 0 : index
    %c11 = arith.constant 11 : index
    %c3_48 = arith.constant 3 : index
    %75 = vector.load %arg4[%c0_47, %c11, %c3_48] : memref<2x22x22xf32, #tpu.memory_space<vmem>>, vector<1x1x16xf32>
    %76 = vector.shape_cast %75 : vector<1x1x16xf32> to vector<1x16xf32>
    %77 = vector.shape_cast %74 : vector<1x16xf32> to vector<1x1x16xf32>
    tpu.vector_store %arg4[%c0_47, %c11, %c3_48], %77 {strides = array<i32>} : memref<2x22x22xf32, #tpu.memory_space<vmem>>, vector<1x1x16xf32>,
    %78 = vector.extract_strided_slice %7 {offsets = [0, 128], sizes = [1, 16], strides = [1, 1]} : vector<1x256xf32> to vector<1x16xf32>
    %c1_49 = arith.constant 1 : index
    %c11_50 = arith.constant 11 : index
    %c3_51 = arith.constant 3 : index
    %79 = vector.load %arg4[%c1_49, %c11_50, %c3_51] : memref<2x22x22xf32, #tpu.memory_space<vmem>>, vector<1x1x16xf32>
    %80 = vector.shape_cast %79 : vector<1x1x16xf32> to vector<1x16xf32>
    %81 = vector.shape_cast %78 : vector<1x16xf32> to vector<1x1x16xf32>
    tpu.vector_store %arg4[%c1_49, %c11_50, %c3_51], %81 {strides = array<i32>} : memref<2x22x22xf32, #tpu.memory_space<vmem>>, vector<1x1x16xf32>,
    %82 = vector.extract_strided_slice %3 {offsets = [0, 144], sizes = [1, 16], strides = [1, 1]} : vector<1x256xf32> to vector<1x16xf32>
    %c0_52 = arith.constant 0 : index
    %c12 = arith.constant 12 : index
    %c3_53 = arith.constant 3 : index
    %83 = vector.load %arg4[%c0_52, %c12, %c3_53] : memref<2x22x22xf32, #tpu.memory_space<vmem>>, vector<1x1x16xf32>
    %84 = vector.shape_cast %83 : vector<1x1x16xf32> to vector<1x16xf32>
    %85 = vector.shape_cast %82 : vector<1x16xf32> to vector<1x1x16xf32>
    tpu.vector_store %arg4[%c0_52, %c12, %c3_53], %85 {strides = array<i32>} : memref<2x22x22xf32, #tpu.memory_space<vmem>>, vector<1x1x16xf32>,
    %86 = vector.extract_strided_slice %7 {offsets = [0, 144], sizes = [1, 16], strides = [1, 1]} : vector<1x256xf32> to vector<1x16xf32>
    %c1_54 = arith.constant 1 : index
    %c12_55 = arith.constant 12 : index
    %c3_56 = arith.constant 3 : index
    %87 = vector.load %arg4[%c1_54, %c12_55, %c3_56] : memref<2x22x22xf32, #tpu.memory_space<vmem>>, vector<1x1x16xf32>
    %88 = vector.shape_cast %87 : vector<1x1x16xf32> to vector<1x16xf32>
    %89 = vector.shape_cast %86 : vector<1x16xf32> to vector<1x1x16xf32>
    tpu.vector_store %arg4[%c1_54, %c12_55, %c3_56], %89 {strides = array<i32>} : memref<2x22x22xf32, #tpu.memory_space<vmem>>, vector<1x1x16xf32>,
    %90 = vector.extract_strided_slice %3 {offsets = [0, 160], sizes = [1, 16], strides = [1, 1]} : vector<1x256xf32> to vector<1x16xf32>
    %c0_57 = arith.constant 0 : index
    %c13 = arith.constant 13 : index
    %c3_58 = arith.constant 3 : index
    %91 = vector.load %arg4[%c0_57, %c13, %c3_58] : memref<2x22x22xf32, #tpu.memory_space<vmem>>, vector<1x1x16xf32>
    %92 = vector.shape_cast %91 : vector<1x1x16xf32> to vector<1x16xf32>
    %93 = vector.shape_cast %90 : vector<1x16xf32> to vector<1x1x16xf32>
    tpu.vector_store %arg4[%c0_57, %c13, %c3_58], %93 {strides = array<i32>} : memref<2x22x22xf32, #tpu.memory_space<vmem>>, vector<1x1x16xf32>,
    %94 = vector.extract_strided_slice %7 {offsets = [0, 160], sizes = [1, 16], strides = [1, 1]} : vector<1x256xf32> to vector<1x16xf32>
    %c1_59 = arith.constant 1 : index
    %c13_60 = arith.constant 13 : index
    %c3_61 = arith.constant 3 : index
    %95 = vector.load %arg4[%c1_59, %c13_60, %c3_61] : memref<2x22x22xf32, #tpu.memory_space<vmem>>, vector<1x1x16xf32>
    %96 = vector.shape_cast %95 : vector<1x1x16xf32> to vector<1x16xf32>
    %97 = vector.shape_cast %94 : vector<1x16xf32> to vector<1x1x16xf32>
    tpu.vector_store %arg4[%c1_59, %c13_60, %c3_61], %97 {strides = array<i32>} : memref<2x22x22xf32, #tpu.memory_space<vmem>>, vector<1x1x16xf32>,
    %98 = vector.extract_strided_slice %3 {offsets = [0, 176], sizes = [1, 16], strides = [1, 1]} : vector<1x256xf32> to vector<1x16xf32>
    %c0_62 = arith.constant 0 : index
    %c14 = arith.constant 14 : index
    %c3_63 = arith.constant 3 : index
    %99 = vector.load %arg4[%c0_62, %c14, %c3_63] : memref<2x22x22xf32, #tpu.memory_space<vmem>>, vector<1x1x16xf32>
    %100 = vector.shape_cast %99 : vector<1x1x16xf32> to vector<1x16xf32>
    %101 = vector.shape_cast %98 : vector<1x16xf32> to vector<1x1x16xf32>
    tpu.vector_store %arg4[%c0_62, %c14, %c3_63], %101 {strides = array<i32>} : memref<2x22x22xf32, #tpu.memory_space<vmem>>, vector<1x1x16xf32>,
    %102 = vector.extract_strided_slice %7 {offsets = [0, 176], sizes = [1, 16], strides = [1, 1]} : vector<1x256xf32> to vector<1x16xf32>
    %c1_64 = arith.constant 1 : index
    %c14_65 = arith.constant 14 : index
    %c3_66 = arith.constant 3 : index
    %103 = vector.load %arg4[%c1_64, %c14_65, %c3_66] : memref<2x22x22xf32, #tpu.memory_space<vmem>>, vector<1x1x16xf32>
    %104 = vector.shape_cast %103 : vector<1x1x16xf32> to vector<1x16xf32>
    %105 = vector.shape_cast %102 : vector<1x16xf32> to vector<1x1x16xf32>
    tpu.vector_store %arg4[%c1_64, %c14_65, %c3_66], %105 {strides = array<i32>} : memref<2x22x22xf32, #tpu.memory_space<vmem>>, vector<1x1x16xf32>,
    %106 = vector.extract_strided_slice %3 {offsets = [0, 192], sizes = [1, 16], strides = [1, 1]} : vector<1x256xf32> to vector<1x16xf32>
    %c0_67 = arith.constant 0 : index
    %c15 = arith.constant 15 : index
    %c3_68 = arith.constant 3 : index
    %107 = vector.load %arg4[%c0_67, %c15, %c3_68] : memref<2x22x22xf32, #tpu.memory_space<vmem>>, vector<1x1x16xf32>
    %108 = vector.shape_cast %107 : vector<1x1x16xf32> to vector<1x16xf32>
    %109 = vector.shape_cast %106 : vector<1x16xf32> to vector<1x1x16xf32>
    tpu.vector_store %arg4[%c0_67, %c15, %c3_68], %109 {strides = array<i32>} : memref<2x22x22xf32, #tpu.memory_space<vmem>>, vector<1x1x16xf32>,
    %110 = vector.extract_strided_slice %7 {offsets = [0, 192], sizes = [1, 16], strides = [1, 1]} : vector<1x256xf32> to vector<1x16xf32>
    %c1_69 = arith.constant 1 : index
    %c15_70 = arith.constant 15 : index
    %c3_71 = arith.constant 3 : index
    %111 = vector.load %arg4[%c1_69, %c15_70, %c3_71] : memref<2x22x22xf32, #tpu.memory_space<vmem>>, vector<1x1x16xf32>
    %112 = vector.shape_cast %111 : vector<1x1x16xf32> to vector<1x16xf32>
    %113 = vector.shape_cast %110 : vector<1x16xf32> to vector<1x1x16xf32>
    tpu.vector_store %arg4[%c1_69, %c15_70, %c3_71], %113 {strides = array<i32>} : memref<2x22x22xf32, #tpu.memory_space<vmem>>, vector<1x1x16xf32>,
    %114 = vector.extract_strided_slice %3 {offsets = [0, 208], sizes = [1, 16], strides = [1, 1]} : vector<1x256xf32> to vector<1x16xf32>
    %c0_72 = arith.constant 0 : index
    %c16 = arith.constant 16 : index
    %c3_73 = arith.constant 3 : index
    %115 = vector.load %arg4[%c0_72, %c16, %c3_73] : memref<2x22x22xf32, #tpu.memory_space<vmem>>, vector<1x1x16xf32>
    %116 = vector.shape_cast %115 : vector<1x1x16xf32> to vector<1x16xf32>
    %117 = vector.shape_cast %114 : vector<1x16xf32> to vector<1x1x16xf32>
    tpu.vector_store %arg4[%c0_72, %c16, %c3_73], %117 {strides = array<i32>} : memref<2x22x22xf32, #tpu.memory_space<vmem>>, vector<1x1x16xf32>,
    %118 = vector.extract_strided_slice %7 {offsets = [0, 208], sizes = [1, 16], strides = [1, 1]} : vector<1x256xf32> to vector<1x16xf32>
    %c1_74 = arith.constant 1 : index
    %c16_75 = arith.constant 16 : index
    %c3_76 = arith.constant 3 : index
    %119 = vector.load %arg4[%c1_74, %c16_75, %c3_76] : memref<2x22x22xf32, #tpu.memory_space<vmem>>, vector<1x1x16xf32>
    %120 = vector.shape_cast %119 : vector<1x1x16xf32> to vector<1x16xf32>
    %121 = vector.shape_cast %118 : vector<1x16xf32> to vector<1x1x16xf32>
    tpu.vector_store %arg4[%c1_74, %c16_75, %c3_76], %121 {strides = array<i32>} : memref<2x22x22xf32, #tpu.memory_space<vmem>>, vector<1x1x16xf32>,
    %122 = vector.extract_strided_slice %3 {offsets = [0, 224], sizes = [1, 16], strides = [1, 1]} : vector<1x256xf32> to vector<1x16xf32>
    %c0_77 = arith.constant 0 : index
    %c17 = arith.constant 17 : index
    %c3_78 = arith.constant 3 : index
    %123 = vector.load %arg4[%c0_77, %c17, %c3_78] : memref<2x22x22xf32, #tpu.memory_space<vmem>>, vector<1x1x16xf32>
    %124 = vector.shape_cast %123 : vector<1x1x16xf32> to vector<1x16xf32>
    %125 = vector.shape_cast %122 : vector<1x16xf32> to vector<1x1x16xf32>
    tpu.vector_store %arg4[%c0_77, %c17, %c3_78], %125 {strides = array<i32>} : memref<2x22x22xf32, #tpu.memory_space<vmem>>, vector<1x1x16xf32>,
    %126 = vector.extract_strided_slice %7 {offsets = [0, 224], sizes = [1, 16], strides = [1, 1]} : vector<1x256xf32> to vector<1x16xf32>
    %c1_79 = arith.constant 1 : index
    %c17_80 = arith.constant 17 : index
    %c3_81 = arith.constant 3 : index
    %127 = vector.load %arg4[%c1_79, %c17_80, %c3_81] : memref<2x22x22xf32, #tpu.memory_space<vmem>>, vector<1x1x16xf32>
    %128 = vector.shape_cast %127 : vector<1x1x16xf32> to vector<1x16xf32>
    %129 = vector.shape_cast %126 : vector<1x16xf32> to vector<1x1x16xf32>
    tpu.vector_store %arg4[%c1_79, %c17_80, %c3_81], %129 {strides = array<i32>} : memref<2x22x22xf32, #tpu.memory_space<vmem>>, vector<1x1x16xf32>,
    %130 = vector.extract_strided_slice %3 {offsets = [0, 240], sizes = [1, 16], strides = [1, 1]} : vector<1x256xf32> to vector<1x16xf32>
    %c0_82 = arith.constant 0 : index
    %c18 = arith.constant 18 : index
    %c3_83 = arith.constant 3 : index
    %131 = vector.load %arg4[%c0_82, %c18, %c3_83] : memref<2x22x22xf32, #tpu.memory_space<vmem>>, vector<1x1x16xf32>
    %132 = vector.shape_cast %131 : vector<1x1x16xf32> to vector<1x16xf32>
    %133 = vector.shape_cast %130 : vector<1x16xf32> to vector<1x1x16xf32>
    tpu.vector_store %arg4[%c0_82, %c18, %c3_83], %133 {strides = array<i32>} : memref<2x22x22xf32, #tpu.memory_space<vmem>>, vector<1x1x16xf32>,
    %134 = vector.extract_strided_slice %7 {offsets = [0, 240], sizes = [1, 16], strides = [1, 1]} : vector<1x256xf32> to vector<1x16xf32>
    %c1_84 = arith.constant 1 : index
    %c18_85 = arith.constant 18 : index
    %c3_86 = arith.constant 3 : index
    %135 = vector.load %arg4[%c1_84, %c18_85, %c3_86] : memref<2x22x22xf32, #tpu.memory_space<vmem>>, vector<1x1x16xf32>
    %136 = vector.shape_cast %135 : vector<1x1x16xf32> to vector<1x16xf32>
    %137 = vector.shape_cast %134 : vector<1x16xf32> to vector<1x1x16xf32>
    tpu.vector_store %arg4[%c1_84, %c18_85, %c3_86], %137 {strides = array<i32>} : memref<2x22x22xf32, #tpu.memory_space<vmem>>, vector<1x1x16xf32>,
    %c98 = arith.constant 98 : index
    %138 = memref.load %arg2[%c98] : memref<99xf32, #tpu.memory_space<smem>>
    %139 = vector.broadcast %138 : f32 to vector<16x16xf32>
    %cst_87 = arith.constant 0.000000e+00 : f32
    %140 = vector.broadcast %cst_87 : f32 to vector<16x16xf32>
    %cst_88 = arith.constant 0.000000e+00 : f32
    %141 = vector.broadcast %cst_88 : f32 to vector<16x16xf32>
    %cst_89 = arith.constant 0.000000e+00 : f32
    %142 = vector.broadcast %cst_89 : f32 to vector<16x16xf32>
    %c0_90 = arith.constant 0 : index
    %c0_91 = arith.constant 0 : index
    %c0_92 = arith.constant 0 : index
    %143 = vector.load %arg4[%c0_90, %c0_91, %c0_92] : memref<2x22x22xf32, #tpu.memory_space<vmem>>, vector<1x22x16xf32>
    %144 = vector.shape_cast %143 : vector<1x22x16xf32> to vector<22x16xf32>
    %c0_93 = arith.constant 0 : index
    %145 = memref.load %arg2[%c0_93] : memref<99xf32, #tpu.memory_space<smem>>
    %146 = vector.extract_strided_slice %144 {offsets = [0, 0], sizes = [16, 16], strides = [1, 1]} : vector<22x16xf32> to vector<16x16xf32>
    %147 = vector.broadcast %145 : f32 to vector<16x16xf32>
    %148 = arith.mulf %147, %146 : vector<16x16xf32>
    %149 = arith.addf %139, %148 : vector<16x16xf32>
    %c7_94 = arith.constant 7 : index
    %150 = memref.load %arg2[%c7_94] : memref<99xf32, #tpu.memory_space<smem>>
    %151 = vector.extract_strided_slice %144 {offsets = [1, 0], sizes = [16, 16], strides = [1, 1]} : vector<22x16xf32> to vector<16x16xf32>
    %152 = vector.broadcast %150 : f32 to vector<16x16xf32>
    %153 = arith.mulf %152, %151 : vector<16x16xf32>
    %154 = arith.addf %140, %153 : vector<16x16xf32>
    %c14_95 = arith.constant 14 : index
    %155 = memref.load %arg2[%c14_95] : memref<99xf32, #tpu.memory_space<smem>>
    %156 = vector.extract_strided_slice %144 {offsets = [2, 0], sizes = [16, 16], strides = [1, 1]} : vector<22x16xf32> to vector<16x16xf32>
    %157 = vector.broadcast %155 : f32 to vector<16x16xf32>
    %158 = arith.mulf %157, %156 : vector<16x16xf32>
    %159 = arith.addf %141, %158 : vector<16x16xf32>
    %c21 = arith.constant 21 : index
    %160 = memref.load %arg2[%c21] : memref<99xf32, #tpu.memory_space<smem>>
    %161 = vector.extract_strided_slice %144 {offsets = [3, 0], sizes = [16, 16], strides = [1, 1]} : vector<22x16xf32> to vector<16x16xf32>
    %162 = vector.broadcast %160 : f32 to vector<16x16xf32>
    %163 = arith.mulf %162, %161 : vector<16x16xf32>
    %164 = arith.addf %142, %163 : vector<16x16xf32>
    %c28 = arith.constant 28 : index
    %165 = memref.load %arg2[%c28] : memref<99xf32, #tpu.memory_space<smem>>
    %166 = vector.extract_strided_slice %144 {offsets = [4, 0], sizes = [16, 16], strides = [1, 1]} : vector<22x16xf32> to vector<16x16xf32>
    %167 = vector.broadcast %165 : f32 to vector<16x16xf32>
    %168 = arith.mulf %167, %166 : vector<16x16xf32>
    %169 = arith.addf %149, %168 : vector<16x16xf32>
    %c35 = arith.constant 35 : index
    %170 = memref.load %arg2[%c35] : memref<99xf32, #tpu.memory_space<smem>>
    %171 = vector.extract_strided_slice %144 {offsets = [5, 0], sizes = [16, 16], strides = [1, 1]} : vector<22x16xf32> to vector<16x16xf32>
    %172 = vector.broadcast %170 : f32 to vector<16x16xf32>
    %173 = arith.mulf %172, %171 : vector<16x16xf32>
    %174 = arith.addf %154, %173 : vector<16x16xf32>
    %c42 = arith.constant 42 : index
    %175 = memref.load %arg2[%c42] : memref<99xf32, #tpu.memory_space<smem>>
    %176 = vector.extract_strided_slice %144 {offsets = [6, 0], sizes = [16, 16], strides = [1, 1]} : vector<22x16xf32> to vector<16x16xf32>
    %177 = vector.broadcast %175 : f32 to vector<16x16xf32>
    %178 = arith.mulf %177, %176 : vector<16x16xf32>
    %179 = arith.addf %159, %178 : vector<16x16xf32>
    %c0_96 = arith.constant 0 : index
    %c0_97 = arith.constant 0 : index
    %c1_98 = arith.constant 1 : index
    %180 = vector.load %arg4[%c0_96, %c0_97, %c1_98] : memref<2x22x22xf32, #tpu.memory_space<vmem>>, vector<1x22x16xf32>
    %181 = vector.shape_cast %180 : vector<1x22x16xf32> to vector<22x16xf32>
    %c1_99 = arith.constant 1 : index
    %182 = memref.load %arg2[%c1_99] : memref<99xf32, #tpu.memory_space<smem>>
    %183 = vector.extract_strided_slice %181 {offsets = [0, 0], sizes = [16, 16], strides = [1, 1]} : vector<22x16xf32> to vector<16x16xf32>
    %184 = vector.broadcast %182 : f32 to vector<16x16xf32>
    %185 = arith.mulf %184, %183 : vector<16x16xf32>
    %186 = arith.addf %164, %185 : vector<16x16xf32>
    %c8_100 = arith.constant 8 : index
    %187 = memref.load %arg2[%c8_100] : memref<99xf32, #tpu.memory_space<smem>>
    %188 = vector.extract_strided_slice %181 {offsets = [1, 0], sizes = [16, 16], strides = [1, 1]} : vector<22x16xf32> to vector<16x16xf32>
    %189 = vector.broadcast %187 : f32 to vector<16x16xf32>
    %190 = arith.mulf %189, %188 : vector<16x16xf32>
    %191 = arith.addf %169, %190 : vector<16x16xf32>
    %c15_101 = arith.constant 15 : index
    %192 = memref.load %arg2[%c15_101] : memref<99xf32, #tpu.memory_space<smem>>
    %193 = vector.extract_strided_slice %181 {offsets = [2, 0], sizes = [16, 16], strides = [1, 1]} : vector<22x16xf32> to vector<16x16xf32>
    %194 = vector.broadcast %192 : f32 to vector<16x16xf32>
    %195 = arith.mulf %194, %193 : vector<16x16xf32>
    %196 = arith.addf %174, %195 : vector<16x16xf32>
    %c22 = arith.constant 22 : index
    %197 = memref.load %arg2[%c22] : memref<99xf32, #tpu.memory_space<smem>>
    %198 = vector.extract_strided_slice %181 {offsets = [3, 0], sizes = [16, 16], strides = [1, 1]} : vector<22x16xf32> to vector<16x16xf32>
    %199 = vector.broadcast %197 : f32 to vector<16x16xf32>
    %200 = arith.mulf %199, %198 : vector<16x16xf32>
    %201 = arith.addf %179, %200 : vector<16x16xf32>
    %c29 = arith.constant 29 : index
    %202 = memref.load %arg2[%c29] : memref<99xf32, #tpu.memory_space<smem>>
    %203 = vector.extract_strided_slice %181 {offsets = [4, 0], sizes = [16, 16], strides = [1, 1]} : vector<22x16xf32> to vector<16x16xf32>
    %204 = vector.broadcast %202 : f32 to vector<16x16xf32>
    %205 = arith.mulf %204, %203 : vector<16x16xf32>
    %206 = arith.addf %186, %205 : vector<16x16xf32>
    %c36 = arith.constant 36 : index
    %207 = memref.load %arg2[%c36] : memref<99xf32, #tpu.memory_space<smem>>
    %208 = vector.extract_strided_slice %181 {offsets = [5, 0], sizes = [16, 16], strides = [1, 1]} : vector<22x16xf32> to vector<16x16xf32>
    %209 = vector.broadcast %207 : f32 to vector<16x16xf32>
    %210 = arith.mulf %209, %208 : vector<16x16xf32>
    %211 = arith.addf %191, %210 : vector<16x16xf32>
    %c43 = arith.constant 43 : index
    %212 = memref.load %arg2[%c43] : memref<99xf32, #tpu.memory_space<smem>>
    %213 = vector.extract_strided_slice %181 {offsets = [6, 0], sizes = [16, 16], strides = [1, 1]} : vector<22x16xf32> to vector<16x16xf32>
    %214 = vector.broadcast %212 : f32 to vector<16x16xf32>
    %215 = arith.mulf %214, %213 : vector<16x16xf32>
    %216 = arith.addf %196, %215 : vector<16x16xf32>
    %c0_102 = arith.constant 0 : index
    %c0_103 = arith.constant 0 : index
    %c2 = arith.constant 2 : index
    %217 = vector.load %arg4[%c0_102, %c0_103, %c2] : memref<2x22x22xf32, #tpu.memory_space<vmem>>, vector<1x22x16xf32>
    %218 = vector.shape_cast %217 : vector<1x22x16xf32> to vector<22x16xf32>
    %c2_104 = arith.constant 2 : index
    %219 = memref.load %arg2[%c2_104] : memref<99xf32, #tpu.memory_space<smem>>
    %220 = vector.extract_strided_slice %218 {offsets = [0, 0], sizes = [16, 16], strides = [1, 1]} : vector<22x16xf32> to vector<16x16xf32>
    %221 = vector.broadcast %219 : f32 to vector<16x16xf32>
    %222 = arith.mulf %221, %220 : vector<16x16xf32>
    %223 = arith.addf %201, %222 : vector<16x16xf32>
    %c9_105 = arith.constant 9 : index
    %224 = memref.load %arg2[%c9_105] : memref<99xf32, #tpu.memory_space<smem>>
    %225 = vector.extract_strided_slice %218 {offsets = [1, 0], sizes = [16, 16], strides = [1, 1]} : vector<22x16xf32> to vector<16x16xf32>
    %226 = vector.broadcast %224 : f32 to vector<16x16xf32>
    %227 = arith.mulf %226, %225 : vector<16x16xf32>
    %228 = arith.addf %206, %227 : vector<16x16xf32>
    %c16_106 = arith.constant 16 : index
    %229 = memref.load %arg2[%c16_106] : memref<99xf32, #tpu.memory_space<smem>>
    %230 = vector.extract_strided_slice %218 {offsets = [2, 0], sizes = [16, 16], strides = [1, 1]} : vector<22x16xf32> to vector<16x16xf32>
    %231 = vector.broadcast %229 : f32 to vector<16x16xf32>
    %232 = arith.mulf %231, %230 : vector<16x16xf32>
    %233 = arith.addf %211, %232 : vector<16x16xf32>
    %c23 = arith.constant 23 : index
    %234 = memref.load %arg2[%c23] : memref<99xf32, #tpu.memory_space<smem>>
    %235 = vector.extract_strided_slice %218 {offsets = [3, 0], sizes = [16, 16], strides = [1, 1]} : vector<22x16xf32> to vector<16x16xf32>
    %236 = vector.broadcast %234 : f32 to vector<16x16xf32>
    %237 = arith.mulf %236, %235 : vector<16x16xf32>
    %238 = arith.addf %216, %237 : vector<16x16xf32>
    %c30 = arith.constant 30 : index
    %239 = memref.load %arg2[%c30] : memref<99xf32, #tpu.memory_space<smem>>
    %240 = vector.extract_strided_slice %218 {offsets = [4, 0], sizes = [16, 16], strides = [1, 1]} : vector<22x16xf32> to vector<16x16xf32>
    %241 = vector.broadcast %239 : f32 to vector<16x16xf32>
    %242 = arith.mulf %241, %240 : vector<16x16xf32>
    %243 = arith.addf %223, %242 : vector<16x16xf32>
    %c37 = arith.constant 37 : index
    %244 = memref.load %arg2[%c37] : memref<99xf32, #tpu.memory_space<smem>>
    %245 = vector.extract_strided_slice %218 {offsets = [5, 0], sizes = [16, 16], strides = [1, 1]} : vector<22x16xf32> to vector<16x16xf32>
    %246 = vector.broadcast %244 : f32 to vector<16x16xf32>
    %247 = arith.mulf %246, %245 : vector<16x16xf32>
    %248 = arith.addf %228, %247 : vector<16x16xf32>
    %c44 = arith.constant 44 : index
    %249 = memref.load %arg2[%c44] : memref<99xf32, #tpu.memory_space<smem>>
    %250 = vector.extract_strided_slice %218 {offsets = [6, 0], sizes = [16, 16], strides = [1, 1]} : vector<22x16xf32> to vector<16x16xf32>
    %251 = vector.broadcast %249 : f32 to vector<16x16xf32>
    %252 = arith.mulf %251, %250 : vector<16x16xf32>
    %253 = arith.addf %233, %252 : vector<16x16xf32>
    %c0_107 = arith.constant 0 : index
    %c0_108 = arith.constant 0 : index
    %c3_109 = arith.constant 3 : index
    %254 = vector.load %arg4[%c0_107, %c0_108, %c3_109] : memref<2x22x22xf32, #tpu.memory_space<vmem>>, vector<1x22x16xf32>
    %255 = vector.shape_cast %254 : vector<1x22x16xf32> to vector<22x16xf32>
    %c3_110 = arith.constant 3 : index
    %256 = memref.load %arg2[%c3_110] : memref<99xf32, #tpu.memory_space<smem>>
    %257 = vector.extract_strided_slice %255 {offsets = [0, 0], sizes = [16, 16], strides = [1, 1]} : vector<22x16xf32> to vector<16x16xf32>
    %258 = vector.broadcast %256 : f32 to vector<16x16xf32>
    %259 = arith.mulf %258, %257 : vector<16x16xf32>
    %260 = arith.addf %238, %259 : vector<16x16xf32>
    %c10_111 = arith.constant 10 : index
    %261 = memref.load %arg2[%c10_111] : memref<99xf32, #tpu.memory_space<smem>>
    %262 = vector.extract_strided_slice %255 {offsets = [1, 0], sizes = [16, 16], strides = [1, 1]} : vector<22x16xf32> to vector<16x16xf32>
    %263 = vector.broadcast %261 : f32 to vector<16x16xf32>
    %264 = arith.mulf %263, %262 : vector<16x16xf32>
    %265 = arith.addf %243, %264 : vector<16x16xf32>
    %c17_112 = arith.constant 17 : index
    %266 = memref.load %arg2[%c17_112] : memref<99xf32, #tpu.memory_space<smem>>
    %267 = vector.extract_strided_slice %255 {offsets = [2, 0], sizes = [16, 16], strides = [1, 1]} : vector<22x16xf32> to vector<16x16xf32>
    %268 = vector.broadcast %266 : f32 to vector<16x16xf32>
    %269 = arith.mulf %268, %267 : vector<16x16xf32>
    %270 = arith.addf %248, %269 : vector<16x16xf32>
    %c24 = arith.constant 24 : index
    %271 = memref.load %arg2[%c24] : memref<99xf32, #tpu.memory_space<smem>>
    %272 = vector.extract_strided_slice %255 {offsets = [3, 0], sizes = [16, 16], strides = [1, 1]} : vector<22x16xf32> to vector<16x16xf32>
    %273 = vector.broadcast %271 : f32 to vector<16x16xf32>
    %274 = arith.mulf %273, %272 : vector<16x16xf32>
    %275 = arith.addf %253, %274 : vector<16x16xf32>
    %c31 = arith.constant 31 : index
    %276 = memref.load %arg2[%c31] : memref<99xf32, #tpu.memory_space<smem>>
    %277 = vector.extract_strided_slice %255 {offsets = [4, 0], sizes = [16, 16], strides = [1, 1]} : vector<22x16xf32> to vector<16x16xf32>
    %278 = vector.broadcast %276 : f32 to vector<16x16xf32>
    %279 = arith.mulf %278, %277 : vector<16x16xf32>
    %280 = arith.addf %260, %279 : vector<16x16xf32>
    %c38 = arith.constant 38 : index
    %281 = memref.load %arg2[%c38] : memref<99xf32, #tpu.memory_space<smem>>
    %282 = vector.extract_strided_slice %255 {offsets = [5, 0], sizes = [16, 16], strides = [1, 1]} : vector<22x16xf32> to vector<16x16xf32>
    %283 = vector.broadcast %281 : f32 to vector<16x16xf32>
    %284 = arith.mulf %283, %282 : vector<16x16xf32>
    %285 = arith.addf %265, %284 : vector<16x16xf32>
    %c45 = arith.constant 45 : index
    %286 = memref.load %arg2[%c45] : memref<99xf32, #tpu.memory_space<smem>>
    %287 = vector.extract_strided_slice %255 {offsets = [6, 0], sizes = [16, 16], strides = [1, 1]} : vector<22x16xf32> to vector<16x16xf32>
    %288 = vector.broadcast %286 : f32 to vector<16x16xf32>
    %289 = arith.mulf %288, %287 : vector<16x16xf32>
    %290 = arith.addf %270, %289 : vector<16x16xf32>
    %c0_113 = arith.constant 0 : index
    %c0_114 = arith.constant 0 : index
    %c4_115 = arith.constant 4 : index
    %291 = vector.load %arg4[%c0_113, %c0_114, %c4_115] : memref<2x22x22xf32, #tpu.memory_space<vmem>>, vector<1x22x16xf32>
    %292 = vector.shape_cast %291 : vector<1x22x16xf32> to vector<22x16xf32>
    %c4_116 = arith.constant 4 : index
    %293 = memref.load %arg2[%c4_116] : memref<99xf32, #tpu.memory_space<smem>>
    %294 = vector.extract_strided_slice %292 {offsets = [0, 0], sizes = [16, 16], strides = [1, 1]} : vector<22x16xf32> to vector<16x16xf32>
    %295 = vector.broadcast %293 : f32 to vector<16x16xf32>
    %296 = arith.mulf %295, %294 : vector<16x16xf32>
    %297 = arith.addf %275, %296 : vector<16x16xf32>
    %c11_117 = arith.constant 11 : index
    %298 = memref.load %arg2[%c11_117] : memref<99xf32, #tpu.memory_space<smem>>
    %299 = vector.extract_strided_slice %292 {offsets = [1, 0], sizes = [16, 16], strides = [1, 1]} : vector<22x16xf32> to vector<16x16xf32>
    %300 = vector.broadcast %298 : f32 to vector<16x16xf32>
    %301 = arith.mulf %300, %299 : vector<16x16xf32>
    %302 = arith.addf %280, %301 : vector<16x16xf32>
    %c18_118 = arith.constant 18 : index
    %303 = memref.load %arg2[%c18_118] : memref<99xf32, #tpu.memory_space<smem>>
    %304 = vector.extract_strided_slice %292 {offsets = [2, 0], sizes = [16, 16], strides = [1, 1]} : vector<22x16xf32> to vector<16x16xf32>
    %305 = vector.broadcast %303 : f32 to vector<16x16xf32>
    %306 = arith.mulf %305, %304 : vector<16x16xf32>
    %307 = arith.addf %285, %306 : vector<16x16xf32>
    %c25 = arith.constant 25 : index
    %308 = memref.load %arg2[%c25] : memref<99xf32, #tpu.memory_space<smem>>
    %309 = vector.extract_strided_slice %292 {offsets = [3, 0], sizes = [16, 16], strides = [1, 1]} : vector<22x16xf32> to vector<16x16xf32>
    %310 = vector.broadcast %308 : f32 to vector<16x16xf32>
    %311 = arith.mulf %310, %309 : vector<16x16xf32>
    %312 = arith.addf %290, %311 : vector<16x16xf32>
    %c32 = arith.constant 32 : index
    %313 = memref.load %arg2[%c32] : memref<99xf32, #tpu.memory_space<smem>>
    %314 = vector.extract_strided_slice %292 {offsets = [4, 0], sizes = [16, 16], strides = [1, 1]} : vector<22x16xf32> to vector<16x16xf32>
    %315 = vector.broadcast %313 : f32 to vector<16x16xf32>
    %316 = arith.mulf %315, %314 : vector<16x16xf32>
    %317 = arith.addf %297, %316 : vector<16x16xf32>
    %c39 = arith.constant 39 : index
    %318 = memref.load %arg2[%c39] : memref<99xf32, #tpu.memory_space<smem>>
    %319 = vector.extract_strided_slice %292 {offsets = [5, 0], sizes = [16, 16], strides = [1, 1]} : vector<22x16xf32> to vector<16x16xf32>
    %320 = vector.broadcast %318 : f32 to vector<16x16xf32>
    %321 = arith.mulf %320, %319 : vector<16x16xf32>
    %322 = arith.addf %302, %321 : vector<16x16xf32>
    %c46 = arith.constant 46 : index
    %323 = memref.load %arg2[%c46] : memref<99xf32, #tpu.memory_space<smem>>
    %324 = vector.extract_strided_slice %292 {offsets = [6, 0], sizes = [16, 16], strides = [1, 1]} : vector<22x16xf32> to vector<16x16xf32>
    %325 = vector.broadcast %323 : f32 to vector<16x16xf32>
    %326 = arith.mulf %325, %324 : vector<16x16xf32>
    %327 = arith.addf %307, %326 : vector<16x16xf32>
    %c0_119 = arith.constant 0 : index
    %c0_120 = arith.constant 0 : index
    %c5_121 = arith.constant 5 : index
    %328 = vector.load %arg4[%c0_119, %c0_120, %c5_121] : memref<2x22x22xf32, #tpu.memory_space<vmem>>, vector<1x22x16xf32>
    %329 = vector.shape_cast %328 : vector<1x22x16xf32> to vector<22x16xf32>
    %c5_122 = arith.constant 5 : index
    %330 = memref.load %arg2[%c5_122] : memref<99xf32, #tpu.memory_space<smem>>
    %331 = vector.extract_strided_slice %329 {offsets = [0, 0], sizes = [16, 16], strides = [1, 1]} : vector<22x16xf32> to vector<16x16xf32>
    %332 = vector.broadcast %330 : f32 to vector<16x16xf32>
    %333 = arith.mulf %332, %331 : vector<16x16xf32>
    %334 = arith.addf %312, %333 : vector<16x16xf32>
    %c12_123 = arith.constant 12 : index
    %335 = memref.load %arg2[%c12_123] : memref<99xf32, #tpu.memory_space<smem>>
    %336 = vector.extract_strided_slice %329 {offsets = [1, 0], sizes = [16, 16], strides = [1, 1]} : vector<22x16xf32> to vector<16x16xf32>
    %337 = vector.broadcast %335 : f32 to vector<16x16xf32>
    %338 = arith.mulf %337, %336 : vector<16x16xf32>
    %339 = arith.addf %317, %338 : vector<16x16xf32>
    %c19 = arith.constant 19 : index
    %340 = memref.load %arg2[%c19] : memref<99xf32, #tpu.memory_space<smem>>
    %341 = vector.extract_strided_slice %329 {offsets = [2, 0], sizes = [16, 16], strides = [1, 1]} : vector<22x16xf32> to vector<16x16xf32>
    %342 = vector.broadcast %340 : f32 to vector<16x16xf32>
    %343 = arith.mulf %342, %341 : vector<16x16xf32>
    %344 = arith.addf %322, %343 : vector<16x16xf32>
    %c26 = arith.constant 26 : index
    %345 = memref.load %arg2[%c26] : memref<99xf32, #tpu.memory_space<smem>>
    %346 = vector.extract_strided_slice %329 {offsets = [3, 0], sizes = [16, 16], strides = [1, 1]} : vector<22x16xf32> to vector<16x16xf32>
    %347 = vector.broadcast %345 : f32 to vector<16x16xf32>
    %348 = arith.mulf %347, %346 : vector<16x16xf32>
    %349 = arith.addf %327, %348 : vector<16x16xf32>
    %c33 = arith.constant 33 : index
    %350 = memref.load %arg2[%c33] : memref<99xf32, #tpu.memory_space<smem>>
    %351 = vector.extract_strided_slice %329 {offsets = [4, 0], sizes = [16, 16], strides = [1, 1]} : vector<22x16xf32> to vector<16x16xf32>
    %352 = vector.broadcast %350 : f32 to vector<16x16xf32>
    %353 = arith.mulf %352, %351 : vector<16x16xf32>
    %354 = arith.addf %334, %353 : vector<16x16xf32>
    %c40 = arith.constant 40 : index
    %355 = memref.load %arg2[%c40] : memref<99xf32, #tpu.memory_space<smem>>
    %356 = vector.extract_strided_slice %329 {offsets = [5, 0], sizes = [16, 16], strides = [1, 1]} : vector<22x16xf32> to vector<16x16xf32>
    %357 = vector.broadcast %355 : f32 to vector<16x16xf32>
    %358 = arith.mulf %357, %356 : vector<16x16xf32>
    %359 = arith.addf %339, %358 : vector<16x16xf32>
    %c47 = arith.constant 47 : index
    %360 = memref.load %arg2[%c47] : memref<99xf32, #tpu.memory_space<smem>>
    %361 = vector.extract_strided_slice %329 {offsets = [6, 0], sizes = [16, 16], strides = [1, 1]} : vector<22x16xf32> to vector<16x16xf32>
    %362 = vector.broadcast %360 : f32 to vector<16x16xf32>
    %363 = arith.mulf %362, %361 : vector<16x16xf32>
    %364 = arith.addf %344, %363 : vector<16x16xf32>
    %c0_124 = arith.constant 0 : index
    %c0_125 = arith.constant 0 : index
    %c6_126 = arith.constant 6 : index
    %365 = vector.load %arg4[%c0_124, %c0_125, %c6_126] : memref<2x22x22xf32, #tpu.memory_space<vmem>>, vector<1x22x16xf32>
    %366 = vector.shape_cast %365 : vector<1x22x16xf32> to vector<22x16xf32>
    %c6_127 = arith.constant 6 : index
    %367 = memref.load %arg2[%c6_127] : memref<99xf32, #tpu.memory_space<smem>>
    %368 = vector.extract_strided_slice %366 {offsets = [0, 0], sizes = [16, 16], strides = [1, 1]} : vector<22x16xf32> to vector<16x16xf32>
    %369 = vector.broadcast %367 : f32 to vector<16x16xf32>
    %370 = arith.mulf %369, %368 : vector<16x16xf32>
    %371 = arith.addf %349, %370 : vector<16x16xf32>
    %c13_128 = arith.constant 13 : index
    %372 = memref.load %arg2[%c13_128] : memref<99xf32, #tpu.memory_space<smem>>
    %373 = vector.extract_strided_slice %366 {offsets = [1, 0], sizes = [16, 16], strides = [1, 1]} : vector<22x16xf32> to vector<16x16xf32>
    %374 = vector.broadcast %372 : f32 to vector<16x16xf32>
    %375 = arith.mulf %374, %373 : vector<16x16xf32>
    %376 = arith.addf %354, %375 : vector<16x16xf32>
    %c20 = arith.constant 20 : index
    %377 = memref.load %arg2[%c20] : memref<99xf32, #tpu.memory_space<smem>>
    %378 = vector.extract_strided_slice %366 {offsets = [2, 0], sizes = [16, 16], strides = [1, 1]} : vector<22x16xf32> to vector<16x16xf32>
    %379 = vector.broadcast %377 : f32 to vector<16x16xf32>
    %380 = arith.mulf %379, %378 : vector<16x16xf32>
    %381 = arith.addf %359, %380 : vector<16x16xf32>
    %c27 = arith.constant 27 : index
    %382 = memref.load %arg2[%c27] : memref<99xf32, #tpu.memory_space<smem>>
    %383 = vector.extract_strided_slice %366 {offsets = [3, 0], sizes = [16, 16], strides = [1, 1]} : vector<22x16xf32> to vector<16x16xf32>
    %384 = vector.broadcast %382 : f32 to vector<16x16xf32>
    %385 = arith.mulf %384, %383 : vector<16x16xf32>
    %386 = arith.addf %364, %385 : vector<16x16xf32>
    %c34 = arith.constant 34 : index
    %387 = memref.load %arg2[%c34] : memref<99xf32, #tpu.memory_space<smem>>
    %388 = vector.extract_strided_slice %366 {offsets = [4, 0], sizes = [16, 16], strides = [1, 1]} : vector<22x16xf32> to vector<16x16xf32>
    %389 = vector.broadcast %387 : f32 to vector<16x16xf32>
    %390 = arith.mulf %389, %388 : vector<16x16xf32>
    %391 = arith.addf %371, %390 : vector<16x16xf32>
    %c41 = arith.constant 41 : index
    %392 = memref.load %arg2[%c41] : memref<99xf32, #tpu.memory_space<smem>>
    %393 = vector.extract_strided_slice %366 {offsets = [5, 0], sizes = [16, 16], strides = [1, 1]} : vector<22x16xf32> to vector<16x16xf32>
    %394 = vector.broadcast %392 : f32 to vector<16x16xf32>
    %395 = arith.mulf %394, %393 : vector<16x16xf32>
    %396 = arith.addf %376, %395 : vector<16x16xf32>
    %c48 = arith.constant 48 : index
    %397 = memref.load %arg2[%c48] : memref<99xf32, #tpu.memory_space<smem>>
    %398 = vector.extract_strided_slice %366 {offsets = [6, 0], sizes = [16, 16], strides = [1, 1]} : vector<22x16xf32> to vector<16x16xf32>
    %399 = vector.broadcast %397 : f32 to vector<16x16xf32>
    %400 = arith.mulf %399, %398 : vector<16x16xf32>
    %401 = arith.addf %381, %400 : vector<16x16xf32>
    %c1_129 = arith.constant 1 : index
    %c0_130 = arith.constant 0 : index
    %c0_131 = arith.constant 0 : index
    %402 = vector.load %arg4[%c1_129, %c0_130, %c0_131] : memref<2x22x22xf32, #tpu.memory_space<vmem>>, vector<1x22x16xf32>
    %403 = vector.shape_cast %402 : vector<1x22x16xf32> to vector<22x16xf32>
    %c49 = arith.constant 49 : index
    %404 = memref.load %arg2[%c49] : memref<99xf32, #tpu.memory_space<smem>>
    %405 = vector.extract_strided_slice %403 {offsets = [0, 0], sizes = [16, 16], strides = [1, 1]} : vector<22x16xf32> to vector<16x16xf32>
    %406 = vector.broadcast %404 : f32 to vector<16x16xf32>
    %407 = arith.mulf %406, %405 : vector<16x16xf32>
    %408 = arith.addf %386, %407 : vector<16x16xf32>
    %c56 = arith.constant 56 : index
    %409 = memref.load %arg2[%c56] : memref<99xf32, #tpu.memory_space<smem>>
    %410 = vector.extract_strided_slice %403 {offsets = [1, 0], sizes = [16, 16], strides = [1, 1]} : vector<22x16xf32> to vector<16x16xf32>
    %411 = vector.broadcast %409 : f32 to vector<16x16xf32>
    %412 = arith.mulf %411, %410 : vector<16x16xf32>
    %413 = arith.addf %391, %412 : vector<16x16xf32>
    %c63 = arith.constant 63 : index
    %414 = memref.load %arg2[%c63] : memref<99xf32, #tpu.memory_space<smem>>
    %415 = vector.extract_strided_slice %403 {offsets = [2, 0], sizes = [16, 16], strides = [1, 1]} : vector<22x16xf32> to vector<16x16xf32>
    %416 = vector.broadcast %414 : f32 to vector<16x16xf32>
    %417 = arith.mulf %416, %415 : vector<16x16xf32>
    %418 = arith.addf %396, %417 : vector<16x16xf32>
    %c70 = arith.constant 70 : index
    %419 = memref.load %arg2[%c70] : memref<99xf32, #tpu.memory_space<smem>>
    %420 = vector.extract_strided_slice %403 {offsets = [3, 0], sizes = [16, 16], strides = [1, 1]} : vector<22x16xf32> to vector<16x16xf32>
    %421 = vector.broadcast %419 : f32 to vector<16x16xf32>
    %422 = arith.mulf %421, %420 : vector<16x16xf32>
    %423 = arith.addf %401, %422 : vector<16x16xf32>
    %c77 = arith.constant 77 : index
    %424 = memref.load %arg2[%c77] : memref<99xf32, #tpu.memory_space<smem>>
    %425 = vector.extract_strided_slice %403 {offsets = [4, 0], sizes = [16, 16], strides = [1, 1]} : vector<22x16xf32> to vector<16x16xf32>
    %426 = vector.broadcast %424 : f32 to vector<16x16xf32>
    %427 = arith.mulf %426, %425 : vector<16x16xf32>
    %428 = arith.addf %408, %427 : vector<16x16xf32>
    %c84 = arith.constant 84 : index
    %429 = memref.load %arg2[%c84] : memref<99xf32, #tpu.memory_space<smem>>
    %430 = vector.extract_strided_slice %403 {offsets = [5, 0], sizes = [16, 16], strides = [1, 1]} : vector<22x16xf32> to vector<16x16xf32>
    %431 = vector.broadcast %429 : f32 to vector<16x16xf32>
    %432 = arith.mulf %431, %430 : vector<16x16xf32>
    %433 = arith.addf %413, %432 : vector<16x16xf32>
    %c91 = arith.constant 91 : index
    %434 = memref.load %arg2[%c91] : memref<99xf32, #tpu.memory_space<smem>>
    %435 = vector.extract_strided_slice %403 {offsets = [6, 0], sizes = [16, 16], strides = [1, 1]} : vector<22x16xf32> to vector<16x16xf32>
    %436 = vector.broadcast %434 : f32 to vector<16x16xf32>
    %437 = arith.mulf %436, %435 : vector<16x16xf32>
    %438 = arith.addf %418, %437 : vector<16x16xf32>
    %c1_132 = arith.constant 1 : index
    %c0_133 = arith.constant 0 : index
    %c1_134 = arith.constant 1 : index
    %439 = vector.load %arg4[%c1_132, %c0_133, %c1_134] : memref<2x22x22xf32, #tpu.memory_space<vmem>>, vector<1x22x16xf32>
    %440 = vector.shape_cast %439 : vector<1x22x16xf32> to vector<22x16xf32>
    %c50 = arith.constant 50 : index
    %441 = memref.load %arg2[%c50] : memref<99xf32, #tpu.memory_space<smem>>
    %442 = vector.extract_strided_slice %440 {offsets = [0, 0], sizes = [16, 16], strides = [1, 1]} : vector<22x16xf32> to vector<16x16xf32>
    %443 = vector.broadcast %441 : f32 to vector<16x16xf32>
    %444 = arith.mulf %443, %442 : vector<16x16xf32>
    %445 = arith.addf %423, %444 : vector<16x16xf32>
    %c57 = arith.constant 57 : index
    %446 = memref.load %arg2[%c57] : memref<99xf32, #tpu.memory_space<smem>>
    %447 = vector.extract_strided_slice %440 {offsets = [1, 0], sizes = [16, 16], strides = [1, 1]} : vector<22x16xf32> to vector<16x16xf32>
    %448 = vector.broadcast %446 : f32 to vector<16x16xf32>
    %449 = arith.mulf %448, %447 : vector<16x16xf32>
    %450 = arith.addf %428, %449 : vector<16x16xf32>
    %c64 = arith.constant 64 : index
    %451 = memref.load %arg2[%c64] : memref<99xf32, #tpu.memory_space<smem>>
    %452 = vector.extract_strided_slice %440 {offsets = [2, 0], sizes = [16, 16], strides = [1, 1]} : vector<22x16xf32> to vector<16x16xf32>
    %453 = vector.broadcast %451 : f32 to vector<16x16xf32>
    %454 = arith.mulf %453, %452 : vector<16x16xf32>
    %455 = arith.addf %433, %454 : vector<16x16xf32>
    %c71 = arith.constant 71 : index
    %456 = memref.load %arg2[%c71] : memref<99xf32, #tpu.memory_space<smem>>
    %457 = vector.extract_strided_slice %440 {offsets = [3, 0], sizes = [16, 16], strides = [1, 1]} : vector<22x16xf32> to vector<16x16xf32>
    %458 = vector.broadcast %456 : f32 to vector<16x16xf32>
    %459 = arith.mulf %458, %457 : vector<16x16xf32>
    %460 = arith.addf %438, %459 : vector<16x16xf32>
    %c78 = arith.constant 78 : index
    %461 = memref.load %arg2[%c78] : memref<99xf32, #tpu.memory_space<smem>>
    %462 = vector.extract_strided_slice %440 {offsets = [4, 0], sizes = [16, 16], strides = [1, 1]} : vector<22x16xf32> to vector<16x16xf32>
    %463 = vector.broadcast %461 : f32 to vector<16x16xf32>
    %464 = arith.mulf %463, %462 : vector<16x16xf32>
    %465 = arith.addf %445, %464 : vector<16x16xf32>
    %c85 = arith.constant 85 : index
    %466 = memref.load %arg2[%c85] : memref<99xf32, #tpu.memory_space<smem>>
    %467 = vector.extract_strided_slice %440 {offsets = [5, 0], sizes = [16, 16], strides = [1, 1]} : vector<22x16xf32> to vector<16x16xf32>
    %468 = vector.broadcast %466 : f32 to vector<16x16xf32>
    %469 = arith.mulf %468, %467 : vector<16x16xf32>
    %470 = arith.addf %450, %469 : vector<16x16xf32>
    %c92 = arith.constant 92 : index
    %471 = memref.load %arg2[%c92] : memref<99xf32, #tpu.memory_space<smem>>
    %472 = vector.extract_strided_slice %440 {offsets = [6, 0], sizes = [16, 16], strides = [1, 1]} : vector<22x16xf32> to vector<16x16xf32>
    %473 = vector.broadcast %471 : f32 to vector<16x16xf32>
    %474 = arith.mulf %473, %472 : vector<16x16xf32>
    %475 = arith.addf %455, %474 : vector<16x16xf32>
    %c1_135 = arith.constant 1 : index
    %c0_136 = arith.constant 0 : index
    %c2_137 = arith.constant 2 : index
    %476 = vector.load %arg4[%c1_135, %c0_136, %c2_137] : memref<2x22x22xf32, #tpu.memory_space<vmem>>, vector<1x22x16xf32>
    %477 = vector.shape_cast %476 : vector<1x22x16xf32> to vector<22x16xf32>
    %c51 = arith.constant 51 : index
    %478 = memref.load %arg2[%c51] : memref<99xf32, #tpu.memory_space<smem>>
    %479 = vector.extract_strided_slice %477 {offsets = [0, 0], sizes = [16, 16], strides = [1, 1]} : vector<22x16xf32> to vector<16x16xf32>
    %480 = vector.broadcast %478 : f32 to vector<16x16xf32>
    %481 = arith.mulf %480, %479 : vector<16x16xf32>
    %482 = arith.addf %460, %481 : vector<16x16xf32>
    %c58 = arith.constant 58 : index
    %483 = memref.load %arg2[%c58] : memref<99xf32, #tpu.memory_space<smem>>
    %484 = vector.extract_strided_slice %477 {offsets = [1, 0], sizes = [16, 16], strides = [1, 1]} : vector<22x16xf32> to vector<16x16xf32>
    %485 = vector.broadcast %483 : f32 to vector<16x16xf32>
    %486 = arith.mulf %485, %484 : vector<16x16xf32>
    %487 = arith.addf %465, %486 : vector<16x16xf32>
    %c65 = arith.constant 65 : index
    %488 = memref.load %arg2[%c65] : memref<99xf32, #tpu.memory_space<smem>>
    %489 = vector.extract_strided_slice %477 {offsets = [2, 0], sizes = [16, 16], strides = [1, 1]} : vector<22x16xf32> to vector<16x16xf32>
    %490 = vector.broadcast %488 : f32 to vector<16x16xf32>
    %491 = arith.mulf %490, %489 : vector<16x16xf32>
    %492 = arith.addf %470, %491 : vector<16x16xf32>
    %c72 = arith.constant 72 : index
    %493 = memref.load %arg2[%c72] : memref<99xf32, #tpu.memory_space<smem>>
    %494 = vector.extract_strided_slice %477 {offsets = [3, 0], sizes = [16, 16], strides = [1, 1]} : vector<22x16xf32> to vector<16x16xf32>
    %495 = vector.broadcast %493 : f32 to vector<16x16xf32>
    %496 = arith.mulf %495, %494 : vector<16x16xf32>
    %497 = arith.addf %475, %496 : vector<16x16xf32>
    %c79 = arith.constant 79 : index
    %498 = memref.load %arg2[%c79] : memref<99xf32, #tpu.memory_space<smem>>
    %499 = vector.extract_strided_slice %477 {offsets = [4, 0], sizes = [16, 16], strides = [1, 1]} : vector<22x16xf32> to vector<16x16xf32>
    %500 = vector.broadcast %498 : f32 to vector<16x16xf32>
    %501 = arith.mulf %500, %499 : vector<16x16xf32>
    %502 = arith.addf %482, %501 : vector<16x16xf32>
    %c86 = arith.constant 86 : index
    %503 = memref.load %arg2[%c86] : memref<99xf32, #tpu.memory_space<smem>>
    %504 = vector.extract_strided_slice %477 {offsets = [5, 0], sizes = [16, 16], strides = [1, 1]} : vector<22x16xf32> to vector<16x16xf32>
    %505 = vector.broadcast %503 : f32 to vector<16x16xf32>
    %506 = arith.mulf %505, %504 : vector<16x16xf32>
    %507 = arith.addf %487, %506 : vector<16x16xf32>
    %c93 = arith.constant 93 : index
    %508 = memref.load %arg2[%c93] : memref<99xf32, #tpu.memory_space<smem>>
    %509 = vector.extract_strided_slice %477 {offsets = [6, 0], sizes = [16, 16], strides = [1, 1]} : vector<22x16xf32> to vector<16x16xf32>
    %510 = vector.broadcast %508 : f32 to vector<16x16xf32>
    %511 = arith.mulf %510, %509 : vector<16x16xf32>
    %512 = arith.addf %492, %511 : vector<16x16xf32>
    %c1_138 = arith.constant 1 : index
    %c0_139 = arith.constant 0 : index
    %c3_140 = arith.constant 3 : index
    %513 = vector.load %arg4[%c1_138, %c0_139, %c3_140] : memref<2x22x22xf32, #tpu.memory_space<vmem>>, vector<1x22x16xf32>
    %514 = vector.shape_cast %513 : vector<1x22x16xf32> to vector<22x16xf32>
    %c52 = arith.constant 52 : index
    %515 = memref.load %arg2[%c52] : memref<99xf32, #tpu.memory_space<smem>>
    %516 = vector.extract_strided_slice %514 {offsets = [0, 0], sizes = [16, 16], strides = [1, 1]} : vector<22x16xf32> to vector<16x16xf32>
    %517 = vector.broadcast %515 : f32 to vector<16x16xf32>
    %518 = arith.mulf %517, %516 : vector<16x16xf32>
    %519 = arith.addf %497, %518 : vector<16x16xf32>
    %c59 = arith.constant 59 : index
    %520 = memref.load %arg2[%c59] : memref<99xf32, #tpu.memory_space<smem>>
    %521 = vector.extract_strided_slice %514 {offsets = [1, 0], sizes = [16, 16], strides = [1, 1]} : vector<22x16xf32> to vector<16x16xf32>
    %522 = vector.broadcast %520 : f32 to vector<16x16xf32>
    %523 = arith.mulf %522, %521 : vector<16x16xf32>
    %524 = arith.addf %502, %523 : vector<16x16xf32>
    %c66 = arith.constant 66 : index
    %525 = memref.load %arg2[%c66] : memref<99xf32, #tpu.memory_space<smem>>
    %526 = vector.extract_strided_slice %514 {offsets = [2, 0], sizes = [16, 16], strides = [1, 1]} : vector<22x16xf32> to vector<16x16xf32>
    %527 = vector.broadcast %525 : f32 to vector<16x16xf32>
    %528 = arith.mulf %527, %526 : vector<16x16xf32>
    %529 = arith.addf %507, %528 : vector<16x16xf32>
    %c73 = arith.constant 73 : index
    %530 = memref.load %arg2[%c73] : memref<99xf32, #tpu.memory_space<smem>>
    %531 = vector.extract_strided_slice %514 {offsets = [3, 0], sizes = [16, 16], strides = [1, 1]} : vector<22x16xf32> to vector<16x16xf32>
    %532 = vector.broadcast %530 : f32 to vector<16x16xf32>
    %533 = arith.mulf %532, %531 : vector<16x16xf32>
    %534 = arith.addf %512, %533 : vector<16x16xf32>
    %c80 = arith.constant 80 : index
    %535 = memref.load %arg2[%c80] : memref<99xf32, #tpu.memory_space<smem>>
    %536 = vector.extract_strided_slice %514 {offsets = [4, 0], sizes = [16, 16], strides = [1, 1]} : vector<22x16xf32> to vector<16x16xf32>
    %537 = vector.broadcast %535 : f32 to vector<16x16xf32>
    %538 = arith.mulf %537, %536 : vector<16x16xf32>
    %539 = arith.addf %519, %538 : vector<16x16xf32>
    %c87 = arith.constant 87 : index
    %540 = memref.load %arg2[%c87] : memref<99xf32, #tpu.memory_space<smem>>
    %541 = vector.extract_strided_slice %514 {offsets = [5, 0], sizes = [16, 16], strides = [1, 1]} : vector<22x16xf32> to vector<16x16xf32>
    %542 = vector.broadcast %540 : f32 to vector<16x16xf32>
    %543 = arith.mulf %542, %541 : vector<16x16xf32>
    %544 = arith.addf %524, %543 : vector<16x16xf32>
    %c94 = arith.constant 94 : index
    %545 = memref.load %arg2[%c94] : memref<99xf32, #tpu.memory_space<smem>>
    %546 = vector.extract_strided_slice %514 {offsets = [6, 0], sizes = [16, 16], strides = [1, 1]} : vector<22x16xf32> to vector<16x16xf32>
    %547 = vector.broadcast %545 : f32 to vector<16x16xf32>
    %548 = arith.mulf %547, %546 : vector<16x16xf32>
    %549 = arith.addf %529, %548 : vector<16x16xf32>
    %c1_141 = arith.constant 1 : index
    %c0_142 = arith.constant 0 : index
    %c4_143 = arith.constant 4 : index
    %550 = vector.load %arg4[%c1_141, %c0_142, %c4_143] : memref<2x22x22xf32, #tpu.memory_space<vmem>>, vector<1x22x16xf32>
    %551 = vector.shape_cast %550 : vector<1x22x16xf32> to vector<22x16xf32>
    %c53 = arith.constant 53 : index
    %552 = memref.load %arg2[%c53] : memref<99xf32, #tpu.memory_space<smem>>
    %553 = vector.extract_strided_slice %551 {offsets = [0, 0], sizes = [16, 16], strides = [1, 1]} : vector<22x16xf32> to vector<16x16xf32>
    %554 = vector.broadcast %552 : f32 to vector<16x16xf32>
    %555 = arith.mulf %554, %553 : vector<16x16xf32>
    %556 = arith.addf %534, %555 : vector<16x16xf32>
    %c60 = arith.constant 60 : index
    %557 = memref.load %arg2[%c60] : memref<99xf32, #tpu.memory_space<smem>>
    %558 = vector.extract_strided_slice %551 {offsets = [1, 0], sizes = [16, 16], strides = [1, 1]} : vector<22x16xf32> to vector<16x16xf32>
    %559 = vector.broadcast %557 : f32 to vector<16x16xf32>
    %560 = arith.mulf %559, %558 : vector<16x16xf32>
    %561 = arith.addf %539, %560 : vector<16x16xf32>
    %c67 = arith.constant 67 : index
    %562 = memref.load %arg2[%c67] : memref<99xf32, #tpu.memory_space<smem>>
    %563 = vector.extract_strided_slice %551 {offsets = [2, 0], sizes = [16, 16], strides = [1, 1]} : vector<22x16xf32> to vector<16x16xf32>
    %564 = vector.broadcast %562 : f32 to vector<16x16xf32>
    %565 = arith.mulf %564, %563 : vector<16x16xf32>
    %566 = arith.addf %544, %565 : vector<16x16xf32>
    %c74 = arith.constant 74 : index
    %567 = memref.load %arg2[%c74] : memref<99xf32, #tpu.memory_space<smem>>
    %568 = vector.extract_strided_slice %551 {offsets = [3, 0], sizes = [16, 16], strides = [1, 1]} : vector<22x16xf32> to vector<16x16xf32>
    %569 = vector.broadcast %567 : f32 to vector<16x16xf32>
    %570 = arith.mulf %569, %568 : vector<16x16xf32>
    %571 = arith.addf %549, %570 : vector<16x16xf32>
    %c81 = arith.constant 81 : index
    %572 = memref.load %arg2[%c81] : memref<99xf32, #tpu.memory_space<smem>>
    %573 = vector.extract_strided_slice %551 {offsets = [4, 0], sizes = [16, 16], strides = [1, 1]} : vector<22x16xf32> to vector<16x16xf32>
    %574 = vector.broadcast %572 : f32 to vector<16x16xf32>
    %575 = arith.mulf %574, %573 : vector<16x16xf32>
    %576 = arith.addf %556, %575 : vector<16x16xf32>
    %c88 = arith.constant 88 : index
    %577 = memref.load %arg2[%c88] : memref<99xf32, #tpu.memory_space<smem>>
    %578 = vector.extract_strided_slice %551 {offsets = [5, 0], sizes = [16, 16], strides = [1, 1]} : vector<22x16xf32> to vector<16x16xf32>
    %579 = vector.broadcast %577 : f32 to vector<16x16xf32>
    %580 = arith.mulf %579, %578 : vector<16x16xf32>
    %581 = arith.addf %561, %580 : vector<16x16xf32>
    %c95 = arith.constant 95 : index
    %582 = memref.load %arg2[%c95] : memref<99xf32, #tpu.memory_space<smem>>
    %583 = vector.extract_strided_slice %551 {offsets = [6, 0], sizes = [16, 16], strides = [1, 1]} : vector<22x16xf32> to vector<16x16xf32>
    %584 = vector.broadcast %582 : f32 to vector<16x16xf32>
    %585 = arith.mulf %584, %583 : vector<16x16xf32>
    %586 = arith.addf %566, %585 : vector<16x16xf32>
    %c1_144 = arith.constant 1 : index
    %c0_145 = arith.constant 0 : index
    %c5_146 = arith.constant 5 : index
    %587 = vector.load %arg4[%c1_144, %c0_145, %c5_146] : memref<2x22x22xf32, #tpu.memory_space<vmem>>, vector<1x22x16xf32>
    %588 = vector.shape_cast %587 : vector<1x22x16xf32> to vector<22x16xf32>
    %c54 = arith.constant 54 : index
    %589 = memref.load %arg2[%c54] : memref<99xf32, #tpu.memory_space<smem>>
    %590 = vector.extract_strided_slice %588 {offsets = [0, 0], sizes = [16, 16], strides = [1, 1]} : vector<22x16xf32> to vector<16x16xf32>
    %591 = vector.broadcast %589 : f32 to vector<16x16xf32>
    %592 = arith.mulf %591, %590 : vector<16x16xf32>
    %593 = arith.addf %571, %592 : vector<16x16xf32>
    %c61 = arith.constant 61 : index
    %594 = memref.load %arg2[%c61] : memref<99xf32, #tpu.memory_space<smem>>
    %595 = vector.extract_strided_slice %588 {offsets = [1, 0], sizes = [16, 16], strides = [1, 1]} : vector<22x16xf32> to vector<16x16xf32>
    %596 = vector.broadcast %594 : f32 to vector<16x16xf32>
    %597 = arith.mulf %596, %595 : vector<16x16xf32>
    %598 = arith.addf %576, %597 : vector<16x16xf32>
    %c68 = arith.constant 68 : index
    %599 = memref.load %arg2[%c68] : memref<99xf32, #tpu.memory_space<smem>>
    %600 = vector.extract_strided_slice %588 {offsets = [2, 0], sizes = [16, 16], strides = [1, 1]} : vector<22x16xf32> to vector<16x16xf32>
    %601 = vector.broadcast %599 : f32 to vector<16x16xf32>
    %602 = arith.mulf %601, %600 : vector<16x16xf32>
    %603 = arith.addf %581, %602 : vector<16x16xf32>
    %c75 = arith.constant 75 : index
    %604 = memref.load %arg2[%c75] : memref<99xf32, #tpu.memory_space<smem>>
    %605 = vector.extract_strided_slice %588 {offsets = [3, 0], sizes = [16, 16], strides = [1, 1]} : vector<22x16xf32> to vector<16x16xf32>
    %606 = vector.broadcast %604 : f32 to vector<16x16xf32>
    %607 = arith.mulf %606, %605 : vector<16x16xf32>
    %608 = arith.addf %586, %607 : vector<16x16xf32>
    %c82 = arith.constant 82 : index
    %609 = memref.load %arg2[%c82] : memref<99xf32, #tpu.memory_space<smem>>
    %610 = vector.extract_strided_slice %588 {offsets = [4, 0], sizes = [16, 16], strides = [1, 1]} : vector<22x16xf32> to vector<16x16xf32>
    %611 = vector.broadcast %609 : f32 to vector<16x16xf32>
    %612 = arith.mulf %611, %610 : vector<16x16xf32>
    %613 = arith.addf %593, %612 : vector<16x16xf32>
    %c89 = arith.constant 89 : index
    %614 = memref.load %arg2[%c89] : memref<99xf32, #tpu.memory_space<smem>>
    %615 = vector.extract_strided_slice %588 {offsets = [5, 0], sizes = [16, 16], strides = [1, 1]} : vector<22x16xf32> to vector<16x16xf32>
    %616 = vector.broadcast %614 : f32 to vector<16x16xf32>
    %617 = arith.mulf %616, %615 : vector<16x16xf32>
    %618 = arith.addf %598, %617 : vector<16x16xf32>
    %c96 = arith.constant 96 : index
    %619 = memref.load %arg2[%c96] : memref<99xf32, #tpu.memory_space<smem>>
    %620 = vector.extract_strided_slice %588 {offsets = [6, 0], sizes = [16, 16], strides = [1, 1]} : vector<22x16xf32> to vector<16x16xf32>
    %621 = vector.broadcast %619 : f32 to vector<16x16xf32>
    %622 = arith.mulf %621, %620 : vector<16x16xf32>
    %623 = arith.addf %603, %622 : vector<16x16xf32>
    %c1_147 = arith.constant 1 : index
    %c0_148 = arith.constant 0 : index
    %c6_149 = arith.constant 6 : index
    %624 = vector.load %arg4[%c1_147, %c0_148, %c6_149] : memref<2x22x22xf32, #tpu.memory_space<vmem>>, vector<1x22x16xf32>
    %625 = vector.shape_cast %624 : vector<1x22x16xf32> to vector<22x16xf32>
    %c55 = arith.constant 55 : index
    %626 = memref.load %arg2[%c55] : memref<99xf32, #tpu.memory_space<smem>>
    %627 = vector.extract_strided_slice %625 {offsets = [0, 0], sizes = [16, 16], strides = [1, 1]} : vector<22x16xf32> to vector<16x16xf32>
    %628 = vector.broadcast %626 : f32 to vector<16x16xf32>
    %629 = arith.mulf %628, %627 : vector<16x16xf32>
    %630 = arith.addf %608, %629 : vector<16x16xf32>
    %c62 = arith.constant 62 : index
    %631 = memref.load %arg2[%c62] : memref<99xf32, #tpu.memory_space<smem>>
    %632 = vector.extract_strided_slice %625 {offsets = [1, 0], sizes = [16, 16], strides = [1, 1]} : vector<22x16xf32> to vector<16x16xf32>
    %633 = vector.broadcast %631 : f32 to vector<16x16xf32>
    %634 = arith.mulf %633, %632 : vector<16x16xf32>
    %635 = arith.addf %613, %634 : vector<16x16xf32>
    %c69 = arith.constant 69 : index
    %636 = memref.load %arg2[%c69] : memref<99xf32, #tpu.memory_space<smem>>
    %637 = vector.extract_strided_slice %625 {offsets = [2, 0], sizes = [16, 16], strides = [1, 1]} : vector<22x16xf32> to vector<16x16xf32>
    %638 = vector.broadcast %636 : f32 to vector<16x16xf32>
    %639 = arith.mulf %638, %637 : vector<16x16xf32>
    %640 = arith.addf %618, %639 : vector<16x16xf32>
    %c76 = arith.constant 76 : index
    %641 = memref.load %arg2[%c76] : memref<99xf32, #tpu.memory_space<smem>>
    %642 = vector.extract_strided_slice %625 {offsets = [3, 0], sizes = [16, 16], strides = [1, 1]} : vector<22x16xf32> to vector<16x16xf32>
    %643 = vector.broadcast %641 : f32 to vector<16x16xf32>
    %644 = arith.mulf %643, %642 : vector<16x16xf32>
    %645 = arith.addf %623, %644 : vector<16x16xf32>
    %c83 = arith.constant 83 : index
    %646 = memref.load %arg2[%c83] : memref<99xf32, #tpu.memory_space<smem>>
    %647 = vector.extract_strided_slice %625 {offsets = [4, 0], sizes = [16, 16], strides = [1, 1]} : vector<22x16xf32> to vector<16x16xf32>
    %648 = vector.broadcast %646 : f32 to vector<16x16xf32>
    %649 = arith.mulf %648, %647 : vector<16x16xf32>
    %650 = arith.addf %630, %649 : vector<16x16xf32>
    %c90 = arith.constant 90 : index
    %651 = memref.load %arg2[%c90] : memref<99xf32, #tpu.memory_space<smem>>
    %652 = vector.extract_strided_slice %625 {offsets = [5, 0], sizes = [16, 16], strides = [1, 1]} : vector<22x16xf32> to vector<16x16xf32>
    %653 = vector.broadcast %651 : f32 to vector<16x16xf32>
    %654 = arith.mulf %653, %652 : vector<16x16xf32>
    %655 = arith.addf %635, %654 : vector<16x16xf32>
    %c97 = arith.constant 97 : index
    %656 = memref.load %arg2[%c97] : memref<99xf32, #tpu.memory_space<smem>>
    %657 = vector.extract_strided_slice %625 {offsets = [6, 0], sizes = [16, 16], strides = [1, 1]} : vector<22x16xf32> to vector<16x16xf32>
    %658 = vector.broadcast %656 : f32 to vector<16x16xf32>
    %659 = arith.mulf %658, %657 : vector<16x16xf32>
    %660 = arith.addf %640, %659 : vector<16x16xf32>
    %661 = arith.addf %655, %660 : vector<16x16xf32>
    %662 = arith.addf %645, %650 : vector<16x16xf32>
    %663 = arith.addf %661, %662 : vector<16x16xf32>
    %cst_150 = arith.constant 5.000000e-01 : f32
    %664 = vector.broadcast %cst_150 : f32 to vector<16x16xf32>
    %665 = arith.mulf %664, %663 : vector<16x16xf32>
    %666 = math.tanh %665 : vector<16x16xf32>
    %cst_151 = arith.constant 5.000000e-01 : f32
    %667 = vector.broadcast %cst_151 : f32 to vector<16x16xf32>
    %668 = arith.mulf %667, %666 : vector<16x16xf32>
    %cst_152 = arith.constant 5.000000e-01 : f32
    %669 = vector.broadcast %cst_152 : f32 to vector<16x16xf32>
    %670 = arith.addf %668, %669 : vector<16x16xf32>
    %671 = vector.extract_strided_slice %670 {offsets = [0, 0], sizes = [1, 16], strides = [1, 1]} : vector<16x16xf32> to vector<1x16xf32>
    %c0_153 = arith.constant 0 : index
    %c0_154 = arith.constant 0 : index
    %672 = vector.load %arg5[%c0_153, %c0_154] : memref<1x256xf32, #tpu.memory_space<vmem>>, vector<1x16xf32>
    tpu.vector_store %arg5[%c0_153, %c0_154], %671 {strides = array<i32>} : memref<1x256xf32, #tpu.memory_space<vmem>>, vector<1x16xf32>,
    %673 = vector.extract_strided_slice %670 {offsets = [1, 0], sizes = [1, 16], strides = [1, 1]} : vector<16x16xf32> to vector<1x16xf32>
    %c0_155 = arith.constant 0 : index
    %c16_156 = arith.constant 16 : index
    %674 = vector.load %arg5[%c0_155, %c16_156] : memref<1x256xf32, #tpu.memory_space<vmem>>, vector<1x16xf32>
    tpu.vector_store %arg5[%c0_155, %c16_156], %673 {strides = array<i32>} : memref<1x256xf32, #tpu.memory_space<vmem>>, vector<1x16xf32>,
    %675 = vector.extract_strided_slice %670 {offsets = [2, 0], sizes = [1, 16], strides = [1, 1]} : vector<16x16xf32> to vector<1x16xf32>
    %c0_157 = arith.constant 0 : index
    %c32_158 = arith.constant 32 : index
    %676 = vector.load %arg5[%c0_157, %c32_158] : memref<1x256xf32, #tpu.memory_space<vmem>>, vector<1x16xf32>
    tpu.vector_store %arg5[%c0_157, %c32_158], %675 {strides = array<i32>} : memref<1x256xf32, #tpu.memory_space<vmem>>, vector<1x16xf32>,
    %677 = vector.extract_strided_slice %670 {offsets = [3, 0], sizes = [1, 16], strides = [1, 1]} : vector<16x16xf32> to vector<1x16xf32>
    %c0_159 = arith.constant 0 : index
    %c48_160 = arith.constant 48 : index
    %678 = vector.load %arg5[%c0_159, %c48_160] : memref<1x256xf32, #tpu.memory_space<vmem>>, vector<1x16xf32>
    tpu.vector_store %arg5[%c0_159, %c48_160], %677 {strides = array<i32>} : memref<1x256xf32, #tpu.memory_space<vmem>>, vector<1x16xf32>,
    %679 = vector.extract_strided_slice %670 {offsets = [4, 0], sizes = [1, 16], strides = [1, 1]} : vector<16x16xf32> to vector<1x16xf32>
    %c0_161 = arith.constant 0 : index
    %c64_162 = arith.constant 64 : index
    %680 = vector.load %arg5[%c0_161, %c64_162] : memref<1x256xf32, #tpu.memory_space<vmem>>, vector<1x16xf32>
    tpu.vector_store %arg5[%c0_161, %c64_162], %679 {strides = array<i32>} : memref<1x256xf32, #tpu.memory_space<vmem>>, vector<1x16xf32>,
    %681 = vector.extract_strided_slice %670 {offsets = [5, 0], sizes = [1, 16], strides = [1, 1]} : vector<16x16xf32> to vector<1x16xf32>
    %c0_163 = arith.constant 0 : index
    %c80_164 = arith.constant 80 : index
    %682 = vector.load %arg5[%c0_163, %c80_164] : memref<1x256xf32, #tpu.memory_space<vmem>>, vector<1x16xf32>
    tpu.vector_store %arg5[%c0_163, %c80_164], %681 {strides = array<i32>} : memref<1x256xf32, #tpu.memory_space<vmem>>, vector<1x16xf32>,
    %683 = vector.extract_strided_slice %670 {offsets = [6, 0], sizes = [1, 16], strides = [1, 1]} : vector<16x16xf32> to vector<1x16xf32>
    %c0_165 = arith.constant 0 : index
    %c96_166 = arith.constant 96 : index
    %684 = vector.load %arg5[%c0_165, %c96_166] : memref<1x256xf32, #tpu.memory_space<vmem>>, vector<1x16xf32>
    tpu.vector_store %arg5[%c0_165, %c96_166], %683 {strides = array<i32>} : memref<1x256xf32, #tpu.memory_space<vmem>>, vector<1x16xf32>,
    %685 = vector.extract_strided_slice %670 {offsets = [7, 0], sizes = [1, 16], strides = [1, 1]} : vector<16x16xf32> to vector<1x16xf32>
    %c0_167 = arith.constant 0 : index
    %c112 = arith.constant 112 : index
    %686 = vector.load %arg5[%c0_167, %c112] : memref<1x256xf32, #tpu.memory_space<vmem>>, vector<1x16xf32>
    tpu.vector_store %arg5[%c0_167, %c112], %685 {strides = array<i32>} : memref<1x256xf32, #tpu.memory_space<vmem>>, vector<1x16xf32>,
    %687 = vector.extract_strided_slice %670 {offsets = [8, 0], sizes = [1, 16], strides = [1, 1]} : vector<16x16xf32> to vector<1x16xf32>
    %c0_168 = arith.constant 0 : index
    %c128 = arith.constant 128 : index
    %688 = vector.load %arg5[%c0_168, %c128] : memref<1x256xf32, #tpu.memory_space<vmem>>, vector<1x16xf32>
    tpu.vector_store %arg5[%c0_168, %c128], %687 {strides = array<i32>} : memref<1x256xf32, #tpu.memory_space<vmem>>, vector<1x16xf32>,
    %689 = vector.extract_strided_slice %670 {offsets = [9, 0], sizes = [1, 16], strides = [1, 1]} : vector<16x16xf32> to vector<1x16xf32>
    %c0_169 = arith.constant 0 : index
    %c144 = arith.constant 144 : index
    %690 = vector.load %arg5[%c0_169, %c144] : memref<1x256xf32, #tpu.memory_space<vmem>>, vector<1x16xf32>
    tpu.vector_store %arg5[%c0_169, %c144], %689 {strides = array<i32>} : memref<1x256xf32, #tpu.memory_space<vmem>>, vector<1x16xf32>,
    %691 = vector.extract_strided_slice %670 {offsets = [10, 0], sizes = [1, 16], strides = [1, 1]} : vector<16x16xf32> to vector<1x16xf32>
    %c0_170 = arith.constant 0 : index
    %c160 = arith.constant 160 : index
    %692 = vector.load %arg5[%c0_170, %c160] : memref<1x256xf32, #tpu.memory_space<vmem>>, vector<1x16xf32>
    tpu.vector_store %arg5[%c0_170, %c160], %691 {strides = array<i32>} : memref<1x256xf32, #tpu.memory_space<vmem>>, vector<1x16xf32>,
    %693 = vector.extract_strided_slice %670 {offsets = [11, 0], sizes = [1, 16], strides = [1, 1]} : vector<16x16xf32> to vector<1x16xf32>
    %c0_171 = arith.constant 0 : index
    %c176 = arith.constant 176 : index
    %694 = vector.load %arg5[%c0_171, %c176] : memref<1x256xf32, #tpu.memory_space<vmem>>, vector<1x16xf32>
    tpu.vector_store %arg5[%c0_171, %c176], %693 {strides = array<i32>} : memref<1x256xf32, #tpu.memory_space<vmem>>, vector<1x16xf32>,
    %695 = vector.extract_strided_slice %670 {offsets = [12, 0], sizes = [1, 16], strides = [1, 1]} : vector<16x16xf32> to vector<1x16xf32>
    %c0_172 = arith.constant 0 : index
    %c192 = arith.constant 192 : index
    %696 = vector.load %arg5[%c0_172, %c192] : memref<1x256xf32, #tpu.memory_space<vmem>>, vector<1x16xf32>
    tpu.vector_store %arg5[%c0_172, %c192], %695 {strides = array<i32>} : memref<1x256xf32, #tpu.memory_space<vmem>>, vector<1x16xf32>,
    %697 = vector.extract_strided_slice %670 {offsets = [13, 0], sizes = [1, 16], strides = [1, 1]} : vector<16x16xf32> to vector<1x16xf32>
    %c0_173 = arith.constant 0 : index
    %c208 = arith.constant 208 : index
    %698 = vector.load %arg5[%c0_173, %c208] : memref<1x256xf32, #tpu.memory_space<vmem>>, vector<1x16xf32>
    tpu.vector_store %arg5[%c0_173, %c208], %697 {strides = array<i32>} : memref<1x256xf32, #tpu.memory_space<vmem>>, vector<1x16xf32>,
    %699 = vector.extract_strided_slice %670 {offsets = [14, 0], sizes = [1, 16], strides = [1, 1]} : vector<16x16xf32> to vector<1x16xf32>
    %c0_174 = arith.constant 0 : index
    %c224 = arith.constant 224 : index
    %700 = vector.load %arg5[%c0_174, %c224] : memref<1x256xf32, #tpu.memory_space<vmem>>, vector<1x16xf32>
    tpu.vector_store %arg5[%c0_174, %c224], %699 {strides = array<i32>} : memref<1x256xf32, #tpu.memory_space<vmem>>, vector<1x16xf32>,
    %701 = vector.extract_strided_slice %670 {offsets = [15, 0], sizes = [1, 16], strides = [1, 1]} : vector<16x16xf32> to vector<1x16xf32>
    %c0_175 = arith.constant 0 : index
    %c240 = arith.constant 240 : index
    %702 = vector.load %arg5[%c0_175, %c240] : memref<1x256xf32, #tpu.memory_space<vmem>>, vector<1x16xf32>
    tpu.vector_store %arg5[%c0_175, %c240], %701 {strides = array<i32>} : memref<1x256xf32, #tpu.memory_space<vmem>>, vector<1x16xf32>,
    %c0_176 = arith.constant 0 : index
    %c0_177 = arith.constant 0 : index
    %703 = vector.load %arg5[%c0_176, %c0_177] : memref<1x256xf32, #tpu.memory_space<vmem>>, vector<1x256xf32>
    %704 = vector.shape_cast %703 : vector<1x256xf32> to vector<1x256xf32>
    %705 = vector.broadcast %704 : vector<1x256xf32> to vector<4x256xf32>
    %c0_178 = arith.constant 0 : index
    %c0_179 = arith.constant 0 : index
    %c0_180 = arith.constant 0 : index
    %706 = vector.load %arg1[%c0_178, %c0_179, %c0_180] : memref<1x4x256xf32, #tpu.memory_space<vmem>>, vector<1x4x256xf32>
    %707 = vector.shape_cast %706 : vector<1x4x256xf32> to vector<4x256xf32>
    %708 = arith.mulf %707, %705 : vector<4x256xf32>
    %c0_181 = arith.constant 0 : index
    %c0_182 = arith.constant 0 : index
    %c0_183 = arith.constant 0 : index
    %709 = vector.load %arg3[%c0_181, %c0_182, %c0_183] : memref<1x4x256xf32, #tpu.memory_space<vmem>>, vector<1x4x256xf32>
    %710 = vector.shape_cast %709 : vector<1x4x256xf32> to vector<4x256xf32>
    %711 = vector.shape_cast %708 : vector<4x256xf32> to vector<1x4x256xf32>
    tpu.vector_store %arg3[%c0_181, %c0_182, %c0_183], %711 {strides = array<i32>} : memref<1x4x256xf32, #tpu.memory_space<vmem>>, vector<1x4x256xf32>,
    return
  }
  func.func @transform_0(%arg0: i32) -> (i32, i32, i32) {
    %c0_i32 = arith.constant 0 : i32
    %c0_i32_0 = arith.constant 0 : i32
    %c0_i32_1 = arith.constant 0 : i32
    return %arg0, %c0_i32, %c0_i32_0 : i32, i32, i32
  }
  func.func @transform_1(%arg0: i32) -> i32 {
    %c0_i32 = arith.constant 0 : i32
    %c0_i32_0 = arith.constant 0 : i32
    return %c0_i32 : i32
  }
  func.func @transform_2(%arg0: i32) -> (i32, i32, i32) {
    %c0_i32 = arith.constant 0 : i32
    %c0_i32_0 = arith.constant 0 : i32
    %c0_i32_1 = arith.constant 0 : i32
    return %arg0, %c0_i32, %c0_i32_0 : i32, i32, i32
  }
}

</mosaic_0001>

<llo_original>
// kernel: tpu_custom_call.1
$region0: #{tpu_custom_call.1}
  #allocation0 [shape = 'u32[]', space=smem, size = 0x4, offset = 0x4, fixed_abs, tag = 'smem constant byte address 0x4 - core index']
  #allocation1 [shape = 'u32[144,128]{1,0:T(1,128)}', space=vmem, size = 0x12000, scoped, tag = 'internal scratch']
  #allocation2 [shape = 'f32[2,22,22]{2,1,0:T(8,128)}', space=vmem, size = 0x6000, scoped, tag = 'scratch operand']
  #allocation3 [shape = 'f32[1,256]{1,0:T(1,128)}', space=vmem, size = 0x400, scoped, tag = 'scratch operand']
  %s0 = inlined_call_operand.hbm [shape: f32[2,4,256], index: 0, kind: input, shape index: {}]
  %s1 = inlined_call_operand.vmem [shape: f32[99], index: 1, kind: input, shape index: {}]
  %s2 = inlined_call_operand.hbm [shape: f32[2,4,256], index: 2, kind: output, shape index: {}]
  %s3 = sld [smem:[#allocation0]]
  $region49: #{tpu_custom_call.1} parent=0
    _
  %s5 = ssub.s32 1, %s3
  %s6 = scalar_select 0, %s5, %s3
  $region1: #{tpu_custom_call.1} parent=0
    #allocation4 [shape = 'u8[8192]{0}', space=vmem, size = 0x2000, scoped, tag = 'input window, operand 0']
    #allocation5 [shape = 's32[2]{0}', space=sflag, size = 0x8, scoped, tag = 'scoped memory for tpu_custom_call.1']
    #allocation6 [shape = 's32[2]{0}', space=sflag, size = 0x8, scoped, tag = 'scoped memory for tpu_custom_call.1']
    #allocation7 [shape = 's32[2]{0}', space=sflag, size = 0x8, scoped, tag = 'scoped memory for tpu_custom_call.1']
    #allocation8 [shape = 'u8[512]{0}', space=smem, size = 0x200, scoped, tag = 'input window, operand 1, single buffered']
    #allocation9 [shape = 'u8[8192]{0}', space=vmem, size = 0x2000, scoped, tag = 'output window, operand 0']
    %7 = vsyncpa [#allocation5], 0
    %s8 = scalar_lea.sflag [#allocation5], 1
    %9 = vsyncpa %s8, 0
    %10 = vsyncpa [#allocation7], 0
    %11 = vsyncpa [#allocation6], 0
    %s12 = scalar_lea.sflag [#allocation6], 1
    %13 = vsyncpa %s12, 0
    loop: start=0, step=1, limit=4
    $region2: #{tpu_custom_call.1} parent=1 // loop_pre_header
      _
    $region3: #{tpu_custom_call.1} parent=1 // loop_header
      %s15 = sphi 0, %s19
      %p16 = scmp.ge.s32.totalorder %s15, 4
      %s25 = sphi 0, %s27
      %s28 = sphi 0, %s25
      %s29 = sphi 0, %s28
      %s45 = sphi 0, %s29
      %s49 = sphi 0, %s49
      %s51 = sphi 0, %s49
      %s52 = sphi 0, %s51
      %s66 = sphi 0, %s52
      %s72 = sphi 0, %s74
      %s75 = sphi 0, %s72
      %s76 = sphi 0, %s75
      %s92 = sphi 0, %s76
    $region4: #{tpu_custom_call.1} parent=1 // loop_header_branch
      %18 = sbr.rel (%p16) target = $region8
    $region5: #{tpu_custom_call.1} parent=1 // loop_body
      %s20 = ssub.s32 %s15, 1
      %s21 = ssub.s32 %s15, 2
      %s22 = sadd.s32 %s15, 1
      %s23 = ssub.s32 %s15, %s22
      %p24 = scmp.eq.s32.totalorder %s23, 0
      %s26 = sadd.s32 %s25, 1
      %s27 = scalar_select %p24, %s25, %s26
      %p30 = pneg %p24
      %p31 = scmp.eq.s32.totalorder %s15, 1
      %p32 = por %p30, %p31
      %p33 = scmp.ne.s32.totalorder %s25, %s28
      %p34 = scmp.eq.s32.totalorder %s15, 0
      %p35 = por %p33, %p34
      %p36 = scmp.ne.s32.totalorder %s25, %s28
      %p37 = scmp.eq.s32.totalorder %s20, 1
      %p38 = por %p36, %p37
      %p39 = scmp.ne.s32.totalorder %s28, %s29
      %p40 = scmp.eq.s32.totalorder %s20, 0
      %p41 = por %p39, %p40
      %p42 = scmp.ne.s32.totalorder %s28, %s29
      %p43 = scmp.eq.s32.totalorder %s21, 1
      %p44 = por %p42, %p43
      %p46 = scmp.ne.s32.totalorder %s29, %s45
      %p47 = scmp.eq.s32.totalorder %s21, 0
      %p48 = por %p46, %p47
      %s50 = sadd.s32 %s49, 1
      %p53 = scmp.eq.s32.totalorder %s15, 1
      %p54 = scmp.ne.s32.totalorder %s49, %s51
      %p55 = scmp.eq.s32.totalorder %s15, 0
      %p56 = por %p54, %p55
      %p57 = scmp.ne.s32.totalorder %s49, %s51
      %p58 = scmp.eq.s32.totalorder %s20, 1
      %p59 = por %p57, %p58
      %p60 = scmp.ne.s32.totalorder %s51, %s52
      %p61 = scmp.eq.s32.totalorder %s20, 0
      %p62 = por %p60, %p61
      %p63 = scmp.ne.s32.totalorder %s51, %s52
      %p64 = scmp.eq.s32.totalorder %s21, 1
      %p65 = por %p63, %p64
      %p67 = scmp.ne.s32.totalorder %s52, %s66
      %p68 = scmp.eq.s32.totalorder %s21, 0
      %p69 = por %p67, %p68
      %s70 = ssub.s32 %s15, %s22
      %p71 = scmp.eq.s32.totalorder %s70, 0
      %s73 = sadd.s32 %s72, 1
      %s74 = scalar_select %p71, %s72, %s73
      %p77 = pneg %p71
      %p78 = scmp.eq.s32.totalorder %s15, 1
      %p79 = por %p77, %p78
      %p80 = scmp.ne.s32.totalorder %s72, %s75
      %p81 = scmp.eq.s32.totalorder %s15, 0
      %p82 = por %p80, %p81
      %p83 = scmp.ne.s32.totalorder %s72, %s75
      %p84 = scmp.eq.s32.totalorder %s20, 1
      %p85 = por %p83, %p84
      %p86 = scmp.ne.s32.totalorder %s75, %s76
      %p87 = scmp.eq.s32.totalorder %s20, 0
      %p88 = por %p86, %p87
      %p89 = scmp.ne.s32.totalorder %s75, %s76
      %p90 = scmp.eq.s32.totalorder %s21, 1
      %p91 = por %p89, %p90
      %p93 = scmp.ne.s32.totalorder %s76, %s92
      %p94 = scmp.eq.s32.totalorder %s21, 0
      %p95 = por %p93, %p94
      %p96 = scmp.le.s32.totalorder 1, %s15
      %p97 = scmp.lt.s32.totalorder %s15, 3
      %p98 = pnand %p96, %p97
      %p99 = pneg %p98
      // Predicated region
      $region9: #{tpu_custom_call.1} parent=5 // pred_check
        _
      $region10: #{tpu_custom_call.1} parent=5 // pred_check_branch
        %101 = sbr.rel (%p98) target = $region12
      $region11: #{tpu_custom_call.1} parent=5 // pred_region
        %s102 = ssub.s32 %s15, 1
        // Predicated region
        $region13: #{tpu_custom_call.1} parent=11 // pred_check
          %p103 = pneg %p62
        $region14: #{tpu_custom_call.1} parent=11 // pred_check_branch
          %105 = sbr.rel (%p103) target = $region16
        $region15: #{tpu_custom_call.1} parent=11 // pred_region
          %s107 = ssub.s32 16, 16
          %108 = vsyncadd [#allocation7], %s107
          %s110 = sshll.u32 %s1, 4
          %s111 = int_to_ptr.vmem [resolvable:$true] %s110
          %113 = dma.vmem_to_smem %s111, 16, [#allocation8], [#allocation7]
        $region16: #{tpu_custom_call.1} parent=11 // pred_fallthru
          _
      $region12: #{tpu_custom_call.1} parent=5 // pred_fallthru
        _
      %p114 = scmp.lt.s32.totalorder %s15, 2
      // Predicated region
      $region17: #{tpu_custom_call.1} parent=5 // pred_check
        %p115 = pneg %p114
      $region18: #{tpu_custom_call.1} parent=5 // pred_check_branch
        %117 = sbr.rel (%p115) target = $region20
      $region19: #{tpu_custom_call.1} parent=5 // pred_region
        // Predicated region
        $region21: #{tpu_custom_call.1} parent=19 // pred_check
          %p118 = pneg %p35
        $region22: #{tpu_custom_call.1} parent=19 // pred_check_branch
          %120 = sbr.rel (%p118) target = $region24
        $region23: #{tpu_custom_call.1} parent=19 // pred_region
          %s121 = sand.u32 %s25, 1
          %s122 = scalar_lea.sflag [#allocation5], %s121
          %s123 = sand.u32 %s25, 1
          %s124 = smul.addr %s123, 8
          %s125 = scalar_lea.vmem [#allocation4], %s124
          %s127 = ssub.s32 128, 128
          %128 = vsyncadd %s122, %s127
          %s129 = smul.addr %s15, 2
          %s130 = smul.addr %s129, 64
          %s131 = scalar_lea.hbm %s0, %s130
          %s133 = sshll.u32 %s125, 4
          %s134 = int_to_ptr.vmem [resolvable:$true] %s133
          %136 = dma.hbm_to_vmem [thread:$0]  %s131, 128, %s134, %s122
        $region24: #{tpu_custom_call.1} parent=19 // pred_fallthru
          _
      $region20: #{tpu_custom_call.1} parent=5 // pred_fallthru
        _
      %p137 = scmp.le.s32.totalorder 1, %s15
      %p138 = scmp.lt.s32.totalorder %s15, 3
      %p139 = pnand %p137, %p138
      %p140 = pneg %p139
      // Predicated region
      $region25: #{tpu_custom_call.1} parent=5 // pred_check
        _
      $region26: #{tpu_custom_call.1} parent=5 // pred_check_branch
        %142 = sbr.rel (%p139) target = $region28
      $region27: #{tpu_custom_call.1} parent=5 // pred_region
        %s143 = ssub.s32 %s15, 1
        %s144 = sand.u32 %s28, 1
        %s145 = scalar_lea.sflag [#allocation5], %s144
        %s146 = sand.u32 %s28, 1
        %s147 = smul.addr %s146, 8
        %s148 = scalar_lea.vmem [#allocation4], %s147
        // Predicated region
        $region29: #{tpu_custom_call.1} parent=27 // pred_check
          %p149 = pneg %p41
        $region30: #{tpu_custom_call.1} parent=27 // pred_check_branch
          %151 = sbr.rel (%p149) target = $region32
        $region31: #{tpu_custom_call.1} parent=27 // pred_region
          %152 = dma.done %s145, 128
        $region32: #{tpu_custom_call.1} parent=27 // pred_fallthru
          _
        // Predicated region
        $region33: #{tpu_custom_call.1} parent=27 // pred_check
          %p153 = pneg %p62
        $region34: #{tpu_custom_call.1} parent=27 // pred_check_branch
          %155 = sbr.rel (%p153) target = $region36
        $region35: #{tpu_custom_call.1} parent=27 // pred_region
          %156 = dma.done [#allocation7], 16
        $region36: #{tpu_custom_call.1} parent=27 // pred_fallthru
          _
        %157 = sfence
        %s158 = sand.u32 %s28, 1
        %s159 = scalar_lea.sflag [#allocation5], %s158
        %s160 = sand.u32 %s28, 1
        %s161 = smul.addr %s160, 8
        %s162 = scalar_lea.vmem [#allocation4], %s161
        %p163 = pneg %p41
        %p164 = pneg %p38
        %p165 = pneg %p62
        %p166 = pneg %p59
        %p167 = pneg %p88
        %p168 = pneg %p85
        %s169 = sand.u32 %s75, 1
        %s170 = scalar_lea.sflag [#allocation6], %s169
        %s171 = sand.u32 %s75, 1
        %s172 = smul.addr %s171, 8
        %s173 = scalar_lea.vmem [#allocation9], %s172
        %v174 = vld [vmem:[%s148] sm:$0xff]
        %v176 = vcombine.high %v174, %v174
        %vm178 = vcmask 1043456
        %v179 = vsel %vm178, %v174, -inf
        %v180 = vrot.slane %v179, 4
        %v181 = vmax.f32 %v179, %v180
        %v182 = vrot.slane %v181, 2
        %v183 = vmax.f32 %v181, %v182
        %v184 = vrot.slane %v183, 1
        %v185 = vmax.f32 %v183, %v184
        %v186 = vsel %vm178, %v176, -inf
        %v187 = vrot.slane %v186, 4
        %v188 = vmax.f32 %v186, %v187
        %v189 = vrot.slane %v188, 2
        %v190 = vmax.f32 %v188, %v189
        %v191 = vrot.slane %v190, 1
        %v192 = vmax.f32 %v190, %v191
        %v193 = vsel %vm178, %v174, 0.0
        %v194 = vrot.slane %v193, 4
        %v195 = vadd.f32 %v193, %v194
        %v196 = vrot.slane %v195, 2
        %v197 = vadd.f32 %v195, %v196
        %v198 = vrot.slane %v197, 1
        %v199 = vadd.f32 %v197, %v198
        %v200 = vsel %vm178, %v176, 0.0
        %v201 = vrot.slane %v200, 4
        %v202 = vadd.f32 %v200, %v201
        %v203 = vrot.slane %v202, 2
        %v204 = vadd.f32 %v202, %v203
        %v205 = vrot.slane %v204, 1
        %v206 = vadd.f32 %v204, %v205
        %v207 = vmul.f32 %v199, 0.25
        %v208 = vmul.f32 %v206, 0.25
        %vm209 = vcmask 179200
        %210 = vst.msk [vmem:[#allocation2] sm:$0xff] %vm209, 0.0
        %211 = vst.msk [vmem:[#allocation2 + $0x8] sm:$0xff] %vm209, 0.0
        %vm212 = vcmask 177152
        %213 = vst.msk [vmem:[#allocation2 + $0x10] sm:$0x3f] %vm212, 0.0
        %214 = vst.msk [vmem:[#allocation2 + $0x18] sm:$0xff] %vm209, 0.0
        %215 = vst.msk [vmem:[#allocation2 + $0x20] sm:$0xff] %vm209, 0.0
        %216 = vst.msk [vmem:[#allocation2 + $0x28] sm:$0x3f] %vm212, 0.0
        %218 = vrot.lane.b32.xlu0 %v185, 3
        %v219 = vpop.permute.xlu0 %218
        %vm221 = vcmask 147480
        %222 = vst.msk [vmem:[#allocation2 + $0x3] sm:$0x1] %vm221, %v219
        %224 = vrot.lane.b32.xlu0 %v207, 3
        %v225 = vpop.permute.xlu0 %224
        %s227 = scalar_lea.vmem [#allocation2], 24
        %228 = vst.msk [vmem:[%s227 + $0x3] sm:$0x1] %vm221, %v225
        %229 = vrot.lane.b32.xlu0 %v185, 115
        %v230 = vpop.permute.xlu0 %229
        %232 = vst.msk [vmem:[#allocation2 + $0x4] sm:$0x1] %vm221, %v230
        %233 = vrot.lane.b32.xlu0 %v207, 115
        %v234 = vpop.permute.xlu0 %233
        %236 = vst.msk [vmem:[%s227 + $0x4] sm:$0x1] %vm221, %v234
        %237 = vrot.lane.b32.xlu0 %v185, 99
        %v238 = vpop.permute.xlu0 %237
        %240 = vst.msk [vmem:[#allocation2 + $0x5] sm:$0x1] %vm221, %v238
        %241 = vrot.lane.b32.xlu0 %v207, 99
        %v242 = vpop.permute.xlu0 %241
        %244 = vst.msk [vmem:[%s227 + $0x5] sm:$0x1] %vm221, %v242
        %245 = vrot.lane.b32.xlu0 %v185, 83
        %v246 = vpop.permute.xlu0 %245
        %248 = vst.msk [vmem:[#allocation2 + $0x6] sm:$0x1] %vm221, %v246
        %249 = vrot.lane.b32.xlu0 %v207, 83
        %v250 = vpop.permute.xlu0 %249
        %252 = vst.msk [vmem:[%s227 + $0x6] sm:$0x1] %vm221, %v250
        %253 = vrot.lane.b32.xlu0 %v185, 67
        %v254 = vpop.permute.xlu0 %253
        %256 = vst.msk [vmem:[#allocation2 + $0x7] sm:$0x1] %vm221, %v254
        %257 = vrot.lane.b32.xlu0 %v207, 67
        %v258 = vpop.permute.xlu0 %257
        %260 = vst.msk [vmem:[%s227 + $0x7] sm:$0x1] %vm221, %v258
        %261 = vrot.lane.b32.xlu0 %v185, 51
        %v262 = vpop.permute.xlu0 %261
        %264 = vst.msk [vmem:[#allocation2 + $0x8] sm:$0x1] %vm221, %v262
        %265 = vrot.lane.b32.xlu0 %v207, 51
        %v266 = vpop.permute.xlu0 %265
        %268 = vst.msk [vmem:[%s227 + $0x8] sm:$0x1] %vm221, %v266
        %269 = vrot.lane.b32.xlu0 %v185, 35
        %v270 = vpop.permute.xlu0 %269
        %272 = vst.msk [vmem:[#allocation2 + $0x9] sm:$0x1] %vm221, %v270
        %273 = vrot.lane.b32.xlu0 %v207, 35
        %v274 = vpop.permute.xlu0 %273
        %276 = vst.msk [vmem:[%s227 + $0x9] sm:$0x1] %vm221, %v274
        %277 = vrot.lane.b32.xlu0 %v185, 19
        %v278 = vpop.permute.xlu0 %277
        %280 = vst.msk [vmem:[#allocation2 + $0xa] sm:$0x1] %vm221, %v278
        %281 = vrot.lane.b32.xlu0 %v207, 19
        %v282 = vpop.permute.xlu0 %281
        %284 = vst.msk [vmem:[%s227 + $0xa] sm:$0x1] %vm221, %v282
        %286 = vrot.lane.b32.xlu0 %v192, 3
        %v287 = vpop.permute.xlu0 %286
        %289 = vst.msk [vmem:[#allocation2 + $0xb] sm:$0x1] %vm221, %v287
        %291 = vrot.lane.b32.xlu0 %v208, 3
        %v292 = vpop.permute.xlu0 %291
        %294 = vst.msk [vmem:[%s227 + $0xb] sm:$0x1] %vm221, %v292
        %295 = vrot.lane.b32.xlu0 %v192, 115
        %v296 = vpop.permute.xlu0 %295
        %298 = vst.msk [vmem:[#allocation2 + $0xc] sm:$0x1] %vm221, %v296
        %299 = vrot.lane.b32.xlu0 %v208, 115
        %v300 = vpop.permute.xlu0 %299
        %302 = vst.msk [vmem:[%s227 + $0xc] sm:$0x1] %vm221, %v300
        %303 = vrot.lane.b32.xlu0 %v192, 99
        %v304 = vpop.permute.xlu0 %303
        %306 = vst.msk [vmem:[#allocation2 + $0xd] sm:$0x1] %vm221, %v304
        %307 = vrot.lane.b32.xlu0 %v208, 99
        %v308 = vpop.permute.xlu0 %307
        %310 = vst.msk [vmem:[%s227 + $0xd] sm:$0x1] %vm221, %v308
        %311 = vrot.lane.b32.xlu0 %v192, 83
        %v312 = vpop.permute.xlu0 %311
        %314 = vst.msk [vmem:[#allocation2 + $0xe] sm:$0x1] %vm221, %v312
        %315 = vrot.lane.b32.xlu0 %v208, 83
        %v316 = vpop.permute.xlu0 %315
        %318 = vst.msk [vmem:[%s227 + $0xe] sm:$0x1] %vm221, %v316
        %319 = vrot.lane.b32.xlu0 %v192, 67
        %v320 = vpop.permute.xlu0 %319
        %322 = vst.msk [vmem:[#allocation2 + $0xf] sm:$0x1] %vm221, %v320
        %323 = vrot.lane.b32.xlu0 %v208, 67
        %v324 = vpop.permute.xlu0 %323
        %326 = vst.msk [vmem:[%s227 + $0xf] sm:$0x1] %vm221, %v324
        %327 = vrot.lane.b32.xlu0 %v192, 51
        %v328 = vpop.permute.xlu0 %327
        %330 = vst.msk [vmem:[#allocation2 + $0x10] sm:$0x1] %vm221, %v328
        %331 = vrot.lane.b32.xlu0 %v208, 51
        %v332 = vpop.permute.xlu0 %331
        %334 = vst.msk [vmem:[%s227 + $0x10] sm:$0x1] %vm221, %v332
        %335 = vrot.lane.b32.xlu0 %v192, 35
        %v336 = vpop.permute.xlu0 %335
        %338 = vst.msk [vmem:[#allocation2 + $0x11] sm:$0x1] %vm221, %v336
        %339 = vrot.lane.b32.xlu0 %v208, 35
        %v340 = vpop.permute.xlu0 %339
        %342 = vst.msk [vmem:[%s227 + $0x11] sm:$0x1] %vm221, %v340
        %343 = vrot.lane.b32.xlu0 %v192, 19
        %v344 = vpop.permute.xlu0 %343
        %346 = vst.msk [vmem:[#allocation2 + $0x12] sm:$0x1] %vm221, %v344
        %347 = vrot.lane.b32.xlu0 %v208, 19
        %v348 = vpop.permute.xlu0 %347
        %350 = vst.msk [vmem:[%s227 + $0x12] sm:$0x1] %vm221, %v348
        %s351 = sld [smem:[#allocation8 + $0x62]]
        %v352 = vstv %s351
        %v353 = vld [vmem:[#allocation2] sm:$0xff]
        %v354 = vld [vmem:[#allocation2 + $0x8] sm:$0xff]
        %v355 = vld [vmem:[#allocation2 + $0x10] sm:$0x3f]
        %s356 = sld [smem:[#allocation8]]
        %v357 = vstv %s356
        %v358 = vmul.f32 %v357, %v353
        %v359 = vmul.f32 %v357, %v354
        %v360 = vadd.f32 %v352, %v358
        %v361 = vadd.f32 %v352, %v359
        %s362 = sld [smem:[#allocation8 + $0x7]]
        %v363 = vstv %s362
        %v364 = vmul.f32 %v363, %v353
        %v365 = vmul.f32 %v363, %v354
        %v366 = vmul.f32 %v363, %v355
        %v367 = vadd.f32 %v364, 0.0
        %v368 = vadd.f32 %v365, 0.0
        %v369 = vadd.f32 %v366, 0.0
        %s370 = sld [smem:[#allocation8 + $0xe]]
        %v371 = vstv %s370
        %v372 = vmul.f32 %v371, %v353
        %v373 = vmul.f32 %v371, %v354
        %v374 = vmul.f32 %v371, %v355
        %v375 = vadd.f32 %v372, 0.0
        %v376 = vadd.f32 %v373, 0.0
        %v377 = vadd.f32 %v374, 0.0
        %s378 = sld [smem:[#allocation8 + $0x15]]
        %v379 = vstv %s378
        %v380 = vmul.f32 %v379, %v353
        %v381 = vmul.f32 %v379, %v354
        %v382 = vmul.f32 %v379, %v355
        %v383 = vadd.f32 %v380, 0.0
        %v384 = vadd.f32 %v381, 0.0
        %v385 = vadd.f32 %v382, 0.0
        %s386 = sld [smem:[#allocation8 + $0x1c]]
        %v387 = vstv %s386
        %v388 = vmul.f32 %v387, %v353
        %v389 = vmul.f32 %v387, %v354
        %v390 = vmul.f32 %v387, %v355
        %v394 = vrot.slane %v388, 4
        %v395 = vrot.slane %v389, 4
        %v396 = vsel %vm178, %v394, %v395
        %v397 = vrot.slane %v390, 4
        %v398 = vsel %vm178, %v395, %v397
        %v401 = vadd.f32 %v360, %v396
        %v402 = vadd.f32 %v361, %v398
        %s403 = sld [smem:[#allocation8 + $0x23]]
        %v404 = vstv %s403
        %v405 = vmul.f32 %v404, %v353
        %v406 = vmul.f32 %v404, %v354
        %v407 = vmul.f32 %v404, %v355
        %v411 = vrot.slane %v405, 4
        %v412 = vrot.slane %v406, 4
        %v413 = vsel %vm178, %v411, %v412
        %v414 = vrot.slane %v407, 4
        %v415 = vsel %vm178, %v412, %v414
        %v419 = vadd.f32 %v367, %v413
        %v420 = vadd.f32 %v368, %v415
        %v421 = vadd.f32 %v369, %v414
        %s422 = sld [smem:[#allocation8 + $0x2a]]
        %v423 = vstv %s422
        %v424 = vmul.f32 %v423, %v353
        %v425 = vmul.f32 %v423, %v354
        %v426 = vmul.f32 %v423, %v355
        %v430 = vrot.slane %v424, 4
        %v431 = vrot.slane %v425, 4
        %v432 = vsel %vm178, %v430, %v431
        %v433 = vrot.slane %v426, 4
        %v434 = vsel %vm178, %v431, %v433
        %v438 = vadd.f32 %v375, %v432
        %v439 = vadd.f32 %v376, %v434
        %v440 = vadd.f32 %v377, %v433
        %s441 = sld [smem:[#allocation8 + $0x1]]
        %v442 = vstv %s441
        %v443 = vmul.f32 %v442, %v353
        %v444 = vmul.f32 %v442, %v354
        %vm447 = vcmask 1042432
        %v448 = vrot.slane %v443, 5
        %v449 = vrot.slane %v444, 5
        %v450 = vsel %vm447, %v448, %v449
        %451 = vrot.lane.b32.xlu0 %v448, 127
        %v452 = vpop.permute.xlu0 %451
        %453 = vrot.lane.b32.xlu0 %v450, 127
        %v454 = vpop.permute.xlu0 %453
        %455 = vrot.lane.b32.xlu0 %v449, 127
        %v456 = vpop.permute.xlu0 %455
        %v460 = vadd.f32 %v383, %v452
        %v461 = vadd.f32 %v384, %v454
        %v462 = vadd.f32 %v385, %v456
        %s463 = sld [smem:[#allocation8 + $0x8]]
        %v464 = vstv %s463
        %v465 = vmul.f32 %v464, %v353
        %v466 = vmul.f32 %v464, %v354
        %v467 = vmul.f32 %v464, %v355
        %vm471 = vcmask 1046528
        %v472 = vrot.slane %v465, 1
        %v473 = vrot.slane %v466, 1
        %v474 = vsel %vm471, %v472, %v473
        %v475 = vrot.slane %v467, 1
        %v476 = vsel %vm471, %v473, %v475
        %477 = vrot.lane.b32.xlu0 %v474, 127
        %v478 = vpop.permute.xlu0 %477
        %479 = vrot.lane.b32.xlu0 %v476, 127
        %v480 = vpop.permute.xlu0 %479
        %v483 = vadd.f32 %v401, %v478
        %v484 = vadd.f32 %v402, %v480
        %s485 = sld [smem:[#allocation8 + $0xf]]
        %v486 = vstv %s485
        %v487 = vmul.f32 %v486, %v353
        %v488 = vmul.f32 %v486, %v354
        %v489 = vmul.f32 %v486, %v355
        %v493 = vrot.slane %v487, 1
        %v494 = vrot.slane %v488, 1
        %v495 = vsel %vm471, %v493, %v494
        %v496 = vrot.slane %v489, 1
        %v497 = vsel %vm471, %v494, %v496
        %498 = vrot.lane.b32.xlu0 %v495, 127
        %v499 = vpop.permute.xlu0 %498
        %500 = vrot.lane.b32.xlu0 %v497, 127
        %v501 = vpop.permute.xlu0 %500
        %502 = vrot.lane.b32.xlu0 %v496, 127
        %v503 = vpop.permute.xlu0 %502
        %v507 = vadd.f32 %v419, %v499
        %v508 = vadd.f32 %v420, %v501
        %v509 = vadd.f32 %v421, %v503
        %s510 = sld [smem:[#allocation8 + $0x16]]
        %v511 = vstv %s510
        %v512 = vmul.f32 %v511, %v353
        %v513 = vmul.f32 %v511, %v354
        %v514 = vmul.f32 %v511, %v355
        %v518 = vrot.slane %v512, 1
        %v519 = vrot.slane %v513, 1
        %v520 = vsel %vm471, %v518, %v519
        %v521 = vrot.slane %v514, 1
        %v522 = vsel %vm471, %v519, %v521
        %523 = vrot.lane.b32.xlu0 %v520, 127
        %v524 = vpop.permute.xlu0 %523
        %525 = vrot.lane.b32.xlu0 %v522, 127
        %v526 = vpop.permute.xlu0 %525
        %527 = vrot.lane.b32.xlu0 %v521, 127
        %v528 = vpop.permute.xlu0 %527
        %v532 = vadd.f32 %v438, %v524
        %v533 = vadd.f32 %v439, %v526
        %v534 = vadd.f32 %v440, %v528
        %s535 = sld [smem:[#allocation8 + $0x1d]]
        %v536 = vstv %s535
        %v537 = vmul.f32 %v536, %v353
        %v538 = vmul.f32 %v536, %v354
        %v539 = vmul.f32 %v536, %v355
        %v543 = vrot.slane %v537, 1
        %v544 = vrot.slane %v538, 1
        %v545 = vsel %vm471, %v543, %v544
        %v546 = vrot.slane %v539, 1
        %v547 = vsel %vm471, %v544, %v546
        %548 = vrot.lane.b32.xlu0 %v545, 127
        %v549 = vpop.permute.xlu0 %548
        %550 = vrot.lane.b32.xlu0 %v547, 127
        %v551 = vpop.permute.xlu0 %550
        %552 = vrot.lane.b32.xlu0 %v546, 127
        %v553 = vpop.permute.xlu0 %552
        %v557 = vadd.f32 %v460, %v549
        %v558 = vadd.f32 %v461, %v551
        %v559 = vadd.f32 %v462, %v553
        %s560 = sld [smem:[#allocation8 + $0x24]]
        %v561 = vstv %s560
        %v562 = vmul.f32 %v561, %v353
        %v563 = vmul.f32 %v561, %v354
        %v564 = vmul.f32 %v561, %v355
        %v568 = vrot.slane %v562, 5
        %v569 = vrot.slane %v563, 5
        %v570 = vsel %vm447, %v568, %v569
        %v571 = vrot.slane %v564, 5
        %v572 = vsel %vm447, %v569, %v571
        %573 = vrot.lane.b32.xlu0 %v570, 127
        %v574 = vpop.permute.xlu0 %573
        %575 = vrot.lane.b32.xlu0 %v572, 127
        %v576 = vpop.permute.xlu0 %575
        %v579 = vadd.f32 %v483, %v574
        %v580 = vadd.f32 %v484, %v576
        %s581 = sld [smem:[#allocation8 + $0x2b]]
        %v582 = vstv %s581
        %v583 = vmul.f32 %v582, %v353
        %v584 = vmul.f32 %v582, %v354
        %v585 = vmul.f32 %v582, %v355
        %v589 = vrot.slane %v583, 5
        %v590 = vrot.slane %v584, 5
        %v591 = vsel %vm447, %v589, %v590
        %v592 = vrot.slane %v585, 5
        %v593 = vsel %vm447, %v590, %v592
        %594 = vrot.lane.b32.xlu0 %v591, 127
        %v595 = vpop.permute.xlu0 %594
        %596 = vrot.lane.b32.xlu0 %v593, 127
        %v597 = vpop.permute.xlu0 %596
        %598 = vrot.lane.b32.xlu0 %v592, 127
        %v599 = vpop.permute.xlu0 %598
        %v603 = vadd.f32 %v507, %v595
        %v604 = vadd.f32 %v508, %v597
        %v605 = vadd.f32 %v509, %v599
        %s606 = sld [smem:[#allocation8 + $0x2]]
        %v607 = vstv %s606
        %v608 = vmul.f32 %v607, %v353
        %v609 = vmul.f32 %v607, %v354
        %vm612 = vcmask 1041408
        %v613 = vrot.slane %v608, 6
        %v614 = vrot.slane %v609, 6
        %v615 = vsel %vm612, %v613, %v614
        %616 = vrot.lane.b32.xlu0 %v613, 126
        %v617 = vpop.permute.xlu0 %616
        %618 = vrot.lane.b32.xlu0 %v615, 126
        %v619 = vpop.permute.xlu0 %618
        %620 = vrot.lane.b32.xlu0 %v614, 126
        %v621 = vpop.permute.xlu0 %620
        %v625 = vadd.f32 %v532, %v617
        %v626 = vadd.f32 %v533, %v619
        %v627 = vadd.f32 %v534, %v621
        %s628 = sld [smem:[#allocation8 + $0x9]]
        %v629 = vstv %s628
        %v630 = vmul.f32 %v629, %v353
        %v631 = vmul.f32 %v629, %v354
        %v632 = vmul.f32 %v629, %v355
        %v636 = vrot.slane %v630, 6
        %v637 = vrot.slane %v631, 6
        %v638 = vsel %vm612, %v636, %v637
        %v639 = vrot.slane %v632, 6
        %v640 = vsel %vm612, %v637, %v639
        %641 = vrot.lane.b32.xlu0 %v636, 126
        %v642 = vpop.permute.xlu0 %641
        %643 = vrot.lane.b32.xlu0 %v638, 126
        %v644 = vpop.permute.xlu0 %643
        %645 = vrot.lane.b32.xlu0 %v640, 126
        %v646 = vpop.permute.xlu0 %645
        %v650 = vadd.f32 %v557, %v642
        %v651 = vadd.f32 %v558, %v644
        %v652 = vadd.f32 %v559, %v646
        %s653 = sld [smem:[#allocation8 + $0x10]]
        %v654 = vstv %s653
        %v655 = vmul.f32 %v654, %v353
        %v656 = vmul.f32 %v654, %v354
        %v657 = vmul.f32 %v654, %v355
        %vm661 = vcmask 1045504
        %v662 = vrot.slane %v655, 2
        %v663 = vrot.slane %v656, 2
        %v664 = vsel %vm661, %v662, %v663
        %v665 = vrot.slane %v657, 2
        %v666 = vsel %vm661, %v663, %v665
        %667 = vrot.lane.b32.xlu0 %v664, 126
        %v668 = vpop.permute.xlu0 %667
        %669 = vrot.lane.b32.xlu0 %v666, 126
        %v670 = vpop.permute.xlu0 %669
        %v673 = vadd.f32 %v579, %v668
        %v674 = vadd.f32 %v580, %v670
        %s675 = sld [smem:[#allocation8 + $0x17]]
        %v676 = vstv %s675
        %v677 = vmul.f32 %v676, %v353
        %v678 = vmul.f32 %v676, %v354
        %v679 = vmul.f32 %v676, %v355
        %v683 = vrot.slane %v677, 2
        %v684 = vrot.slane %v678, 2
        %v685 = vsel %vm661, %v683, %v684
        %v686 = vrot.slane %v679, 2
        %v687 = vsel %vm661, %v684, %v686
        %688 = vrot.lane.b32.xlu0 %v685, 126
        %v689 = vpop.permute.xlu0 %688
        %690 = vrot.lane.b32.xlu0 %v687, 126
        %v691 = vpop.permute.xlu0 %690
        %692 = vrot.lane.b32.xlu0 %v686, 126
        %v693 = vpop.permute.xlu0 %692
        %v697 = vadd.f32 %v603, %v689
        %v698 = vadd.f32 %v604, %v691
        %v699 = vadd.f32 %v605, %v693
        %s700 = sld [smem:[#allocation8 + $0x1e]]
        %v701 = vstv %s700
        %v702 = vmul.f32 %v701, %v353
        %v703 = vmul.f32 %v701, %v354
        %v704 = vmul.f32 %v701, %v355
        %v708 = vrot.slane %v702, 2
        %v709 = vrot.slane %v703, 2
        %v710 = vsel %vm661, %v708, %v709
        %v711 = vrot.slane %v704, 2
        %v712 = vsel %vm661, %v709, %v711
        %713 = vrot.lane.b32.xlu0 %v710, 126
        %v714 = vpop.permute.xlu0 %713
        %715 = vrot.lane.b32.xlu0 %v712, 126
        %v716 = vpop.permute.xlu0 %715
        %717 = vrot.lane.b32.xlu0 %v711, 126
        %v718 = vpop.permute.xlu0 %717
        %v722 = vadd.f32 %v625, %v714
        %v723 = vadd.f32 %v626, %v716
        %v724 = vadd.f32 %v627, %v718
        %s725 = sld [smem:[#allocation8 + $0x25]]
        %v726 = vstv %s725
        %v727 = vmul.f32 %v726, %v353
        %v728 = vmul.f32 %v726, %v354
        %v729 = vmul.f32 %v726, %v355
        %v733 = vrot.slane %v727, 2
        %v734 = vrot.slane %v728, 2
        %v735 = vsel %vm661, %v733, %v734
        %v736 = vrot.slane %v729, 2
        %v737 = vsel %vm661, %v734, %v736
        %738 = vrot.lane.b32.xlu0 %v735, 126
        %v739 = vpop.permute.xlu0 %738
        %740 = vrot.lane.b32.xlu0 %v737, 126
        %v741 = vpop.permute.xlu0 %740
        %742 = vrot.lane.b32.xlu0 %v736, 126
        %v743 = vpop.permute.xlu0 %742
        %v747 = vadd.f32 %v650, %v739
        %v748 = vadd.f32 %v651, %v741
        %v749 = vadd.f32 %v652, %v743
        %s750 = sld [smem:[#allocation8 + $0x2c]]
        %v751 = vstv %s750
        %v752 = vmul.f32 %v751, %v353
        %v753 = vmul.f32 %v751, %v354
        %v754 = vmul.f32 %v751, %v355
        %v758 = vrot.slane %v752, 6
        %v759 = vrot.slane %v753, 6
        %v760 = vsel %vm612, %v758, %v759
        %v761 = vrot.slane %v754, 6
        %v762 = vsel %vm612, %v759, %v761
        %763 = vrot.lane.b32.xlu0 %v760, 126
        %v764 = vpop.permute.xlu0 %763
        %765 = vrot.lane.b32.xlu0 %v762, 126
        %v766 = vpop.permute.xlu0 %765
        %v769 = vadd.f32 %v673, %v764
        %v770 = vadd.f32 %v674, %v766
        %s771 = sld [smem:[#allocation8 + $0x3]]
        %v772 = vstv %s771
        %v773 = vmul.f32 %v772, %v353
        %v774 = vmul.f32 %v772, %v354
        %vm777 = vcmask 1040384
        %v778 = vrot.slane %v773, 7
        %v779 = vrot.slane %v774, 7
        %v780 = vsel %vm777, %v778, %v779
        %781 = vrot.lane.b32.xlu0 %v778, 125
        %v782 = vpop.permute.xlu0 %781
        %783 = vrot.lane.b32.xlu0 %v780, 125
        %v784 = vpop.permute.xlu0 %783
        %785 = vrot.lane.b32.xlu0 %v779, 125
        %v786 = vpop.permute.xlu0 %785
        %v790 = vadd.f32 %v697, %v782
        %v791 = vadd.f32 %v698, %v784
        %v792 = vadd.f32 %v699, %v786
        %s793 = sld [smem:[#allocation8 + $0xa]]
        %v794 = vstv %s793
        %v795 = vmul.f32 %v794, %v353
        %v796 = vmul.f32 %v794, %v354
        %v797 = vmul.f32 %v794, %v355
        %v801 = vrot.slane %v795, 7
        %v802 = vrot.slane %v796, 7
        %v803 = vsel %vm777, %v801, %v802
        %v804 = vrot.slane %v797, 7
        %v805 = vsel %vm777, %v802, %v804
        %806 = vrot.lane.b32.xlu0 %v801, 125
        %v807 = vpop.permute.xlu0 %806
        %808 = vrot.lane.b32.xlu0 %v803, 125
        %v809 = vpop.permute.xlu0 %808
        %810 = vrot.lane.b32.xlu0 %v805, 125
        %v811 = vpop.permute.xlu0 %810
        %v815 = vadd.f32 %v722, %v807
        %v816 = vadd.f32 %v723, %v809
        %v817 = vadd.f32 %v724, %v811
        %s818 = sld [smem:[#allocation8 + $0x11]]
        %v819 = vstv %s818
        %v820 = vmul.f32 %v819, %v353
        %v821 = vmul.f32 %v819, %v354
        %v822 = vmul.f32 %v819, %v355
        %v826 = vrot.slane %v820, 7
        %v827 = vrot.slane %v821, 7
        %v828 = vsel %vm777, %v826, %v827
        %v829 = vrot.slane %v822, 7
        %v830 = vsel %vm777, %v827, %v829
        %831 = vrot.lane.b32.xlu0 %v826, 125
        %v832 = vpop.permute.xlu0 %831
        %833 = vrot.lane.b32.xlu0 %v828, 125
        %v834 = vpop.permute.xlu0 %833
        %835 = vrot.lane.b32.xlu0 %v830, 125
        %v836 = vpop.permute.xlu0 %835
        %v840 = vadd.f32 %v747, %v832
        %v841 = vadd.f32 %v748, %v834
        %v842 = vadd.f32 %v749, %v836
        %s843 = sld [smem:[#allocation8 + $0x18]]
        %v844 = vstv %s843
        %v845 = vmul.f32 %v844, %v353
        %v846 = vmul.f32 %v844, %v354
        %v847 = vmul.f32 %v844, %v355
        %vm851 = vcmask 1044480
        %v852 = vrot.slane %v845, 3
        %v853 = vrot.slane %v846, 3
        %v854 = vsel %vm851, %v852, %v853
        %v855 = vrot.slane %v847, 3
        %v856 = vsel %vm851, %v853, %v855
        %857 = vrot.lane.b32.xlu0 %v854, 125
        %v858 = vpop.permute.xlu0 %857
        %859 = vrot.lane.b32.xlu0 %v856, 125
        %v860 = vpop.permute.xlu0 %859
        %v863 = vadd.f32 %v769, %v858
        %v864 = vadd.f32 %v770, %v860
        %s865 = sld [smem:[#allocation8 + $0x1f]]
        %v866 = vstv %s865
        %v867 = vmul.f32 %v866, %v353
        %v868 = vmul.f32 %v866, %v354
        %v869 = vmul.f32 %v866, %v355
        %v873 = vrot.slane %v867, 3
        %v874 = vrot.slane %v868, 3
        %v875 = vsel %vm851, %v873, %v874
        %v876 = vrot.slane %v869, 3
        %v877 = vsel %vm851, %v874, %v876
        %878 = vrot.lane.b32.xlu0 %v875, 125
        %v879 = vpop.permute.xlu0 %878
        %880 = vrot.lane.b32.xlu0 %v877, 125
        %v881 = vpop.permute.xlu0 %880
        %882 = vrot.lane.b32.xlu0 %v876, 125
        %v883 = vpop.permute.xlu0 %882
        %v887 = vadd.f32 %v790, %v879
        %v888 = vadd.f32 %v791, %v881
        %v889 = vadd.f32 %v792, %v883
        %s890 = sld [smem:[#allocation8 + $0x26]]
        %v891 = vstv %s890
        %v892 = vmul.f32 %v891, %v353
        %v893 = vmul.f32 %v891, %v354
        %v894 = vmul.f32 %v891, %v355
        %v898 = vrot.slane %v892, 3
        %v899 = vrot.slane %v893, 3
        %v900 = vsel %vm851, %v898, %v899
        %v901 = vrot.slane %v894, 3
        %v902 = vsel %vm851, %v899, %v901
        %903 = vrot.lane.b32.xlu0 %v900, 125
        %v904 = vpop.permute.xlu0 %903
        %905 = vrot.lane.b32.xlu0 %v902, 125
        %v906 = vpop.permute.xlu0 %905
        %907 = vrot.lane.b32.xlu0 %v901, 125
        %v908 = vpop.permute.xlu0 %907
        %v912 = vadd.f32 %v815, %v904
        %v913 = vadd.f32 %v816, %v906
        %v914 = vadd.f32 %v817, %v908
        %s915 = sld [smem:[#allocation8 + $0x2d]]
        %v916 = vstv %s915
        %v917 = vmul.f32 %v916, %v353
        %v918 = vmul.f32 %v916, %v354
        %v919 = vmul.f32 %v916, %v355
        %v923 = vrot.slane %v917, 3
        %v924 = vrot.slane %v918, 3
        %v925 = vsel %vm851, %v923, %v924
        %v926 = vrot.slane %v919, 3
        %v927 = vsel %vm851, %v924, %v926
        %928 = vrot.lane.b32.xlu0 %v925, 125
        %v929 = vpop.permute.xlu0 %928
        %930 = vrot.lane.b32.xlu0 %v927, 125
        %v931 = vpop.permute.xlu0 %930
        %932 = vrot.lane.b32.xlu0 %v926, 125
        %v933 = vpop.permute.xlu0 %932
        %v937 = vadd.f32 %v840, %v929
        %v938 = vadd.f32 %v841, %v931
        %v939 = vadd.f32 %v842, %v933
        %s940 = sld [smem:[#allocation8 + $0x4]]
        %v941 = vstv %s940
        %v942 = vmul.f32 %v941, %v353
        %v943 = vmul.f32 %v941, %v354
        %946 = vrot.lane.b32.xlu0 %v942, 124
        %v947 = vpop.permute.xlu0 %946
        %948 = vrot.lane.b32.xlu0 %v943, 124
        %v949 = vpop.permute.xlu0 %948
        %v952 = vadd.f32 %v863, %v947
        %v953 = vadd.f32 %v864, %v949
        %s954 = sld [smem:[#allocation8 + $0xb]]
        %v955 = vstv %s954
        %v956 = vmul.f32 %v955, %v353
        %v957 = vmul.f32 %v955, %v354
        %v958 = vmul.f32 %v955, %v355
        %962 = vrot.lane.b32.xlu0 %v956, 124
        %v963 = vpop.permute.xlu0 %962
        %964 = vrot.lane.b32.xlu0 %v957, 124
        %v965 = vpop.permute.xlu0 %964
        %966 = vrot.lane.b32.xlu0 %v958, 124
        %v967 = vpop.permute.xlu0 %966
        %v971 = vadd.f32 %v887, %v963
        %v972 = vadd.f32 %v888, %v965
        %v973 = vadd.f32 %v889, %v967
        %s974 = sld [smem:[#allocation8 + $0x12]]
        %v975 = vstv %s974
        %v976 = vmul.f32 %v975, %v353
        %v977 = vmul.f32 %v975, %v354
        %v978 = vmul.f32 %v975, %v355
        %982 = vrot.lane.b32.xlu0 %v976, 124
        %v983 = vpop.permute.xlu0 %982
        %984 = vrot.lane.b32.xlu0 %v977, 124
        %v985 = vpop.permute.xlu0 %984
        %986 = vrot.lane.b32.xlu0 %v978, 124
        %v987 = vpop.permute.xlu0 %986
        %v991 = vadd.f32 %v912, %v983
        %v992 = vadd.f32 %v913, %v985
        %v993 = vadd.f32 %v914, %v987
        %s994 = sld [smem:[#allocation8 + $0x19]]
        %v995 = vstv %s994
        %v996 = vmul.f32 %v995, %v353
        %v997 = vmul.f32 %v995, %v354
        %v998 = vmul.f32 %v995, %v355
        %1002 = vrot.lane.b32.xlu0 %v996, 124
        %v1003 = vpop.permute.xlu0 %1002
        %1004 = vrot.lane.b32.xlu0 %v997, 124
        %v1005 = vpop.permute.xlu0 %1004
        %1006 = vrot.lane.b32.xlu0 %v998, 124
        %v1007 = vpop.permute.xlu0 %1006
        %v1011 = vadd.f32 %v937, %v1003
        %v1012 = vadd.f32 %v938, %v1005
        %v1013 = vadd.f32 %v939, %v1007
        %s1014 = sld [smem:[#allocation8 + $0x20]]
        %v1015 = vstv %s1014
        %v1016 = vmul.f32 %v1015, %v353
        %v1017 = vmul.f32 %v1015, %v354
        %v1018 = vmul.f32 %v1015, %v355
        %v1022 = vrot.slane %v1016, 4
        %v1023 = vrot.slane %v1017, 4
        %v1024 = vsel %vm178, %v1022, %v1023
        %v1025 = vrot.slane %v1018, 4
        %v1026 = vsel %vm178, %v1023, %v1025
        %1027 = vrot.lane.b32.xlu0 %v1024, 124
        %v1028 = vpop.permute.xlu0 %1027
        %1029 = vrot.lane.b32.xlu0 %v1026, 124
        %v1030 = vpop.permute.xlu0 %1029
        %v1033 = vadd.f32 %v952, %v1028
        %v1034 = vadd.f32 %v953, %v1030
        %s1035 = sld [smem:[#allocation8 + $0x27]]
        %v1036 = vstv %s1035
        %v1037 = vmul.f32 %v1036, %v353
        %v1038 = vmul.f32 %v1036, %v354
        %v1039 = vmul.f32 %v1036, %v355
        %v1043 = vrot.slane %v1037, 4
        %v1044 = vrot.slane %v1038, 4
        %v1045 = vsel %vm178, %v1043, %v1044
        %v1046 = vrot.slane %v1039, 4
        %v1047 = vsel %vm178, %v1044, %v1046
        %1048 = vrot.lane.b32.xlu0 %v1045, 124
        %v1049 = vpop.permute.xlu0 %1048
        %1050 = vrot.lane.b32.xlu0 %v1047, 124
        %v1051 = vpop.permute.xlu0 %1050
        %1052 = vrot.lane.b32.xlu0 %v1046, 124
        %v1053 = vpop.permute.xlu0 %1052
        %v1057 = vadd.f32 %v971, %v1049
        %v1058 = vadd.f32 %v972, %v1051
        %v1059 = vadd.f32 %v973, %v1053
        %s1060 = sld [smem:[#allocation8 + $0x2e]]
        %v1061 = vstv %s1060
        %v1062 = vmul.f32 %v1061, %v353
        %v1063 = vmul.f32 %v1061, %v354
        %v1064 = vmul.f32 %v1061, %v355
        %v1068 = vrot.slane %v1062, 4
        %v1069 = vrot.slane %v1063, 4
        %v1070 = vsel %vm178, %v1068, %v1069
        %v1071 = vrot.slane %v1064, 4
        %v1072 = vsel %vm178, %v1069, %v1071
        %1073 = vrot.lane.b32.xlu0 %v1070, 124
        %v1074 = vpop.permute.xlu0 %1073
        %1075 = vrot.lane.b32.xlu0 %v1072, 124
        %v1076 = vpop.permute.xlu0 %1075
        %1077 = vrot.lane.b32.xlu0 %v1071, 124
        %v1078 = vpop.permute.xlu0 %1077
        %v1082 = vadd.f32 %v991, %v1074
        %v1083 = vadd.f32 %v992, %v1076
        %v1084 = vadd.f32 %v993, %v1078
        %s1085 = sld [smem:[#allocation8 + $0x5]]
        %v1086 = vstv %s1085
        %v1087 = vmul.f32 %v1086, %v353
        %v1088 = vmul.f32 %v1086, %v354
        %v1091 = vrot.slane %v1087, 5
        %v1092 = vrot.slane %v1088, 5
        %v1093 = vsel %vm447, %v1091, %v1092
        %1094 = vrot.lane.b32.xlu0 %v1091, 123
        %v1095 = vpop.permute.xlu0 %1094
        %1096 = vrot.lane.b32.xlu0 %v1093, 123
        %v1097 = vpop.permute.xlu0 %1096
        %1098 = vrot.lane.b32.xlu0 %v1092, 123
        %v1099 = vpop.permute.xlu0 %1098
        %v1103 = vadd.f32 %v1011, %v1095
        %v1104 = vadd.f32 %v1012, %v1097
        %v1105 = vadd.f32 %v1013, %v1099
        %s1106 = sld [smem:[#allocation8 + $0xc]]
        %v1107 = vstv %s1106
        %v1108 = vmul.f32 %v1107, %v353
        %v1109 = vmul.f32 %v1107, %v354
        %v1110 = vmul.f32 %v1107, %v355
        %v1114 = vrot.slane %v1108, 1
        %v1115 = vrot.slane %v1109, 1
        %v1116 = vsel %vm471, %v1114, %v1115
        %v1117 = vrot.slane %v1110, 1
        %v1118 = vsel %vm471, %v1115, %v1117
        %1119 = vrot.lane.b32.xlu0 %v1116, 123
        %v1120 = vpop.permute.xlu0 %1119
        %1121 = vrot.lane.b32.xlu0 %v1118, 123
        %v1122 = vpop.permute.xlu0 %1121
        %v1125 = vadd.f32 %v1033, %v1120
        %v1126 = vadd.f32 %v1034, %v1122
        %s1127 = sld [smem:[#allocation8 + $0x13]]
        %v1128 = vstv %s1127
        %v1129 = vmul.f32 %v1128, %v353
        %v1130 = vmul.f32 %v1128, %v354
        %v1131 = vmul.f32 %v1128, %v355
        %v1135 = vrot.slane %v1129, 1
        %v1136 = vrot.slane %v1130, 1
        %v1137 = vsel %vm471, %v1135, %v1136
        %v1138 = vrot.slane %v1131, 1
        %v1139 = vsel %vm471, %v1136, %v1138
        %1140 = vrot.lane.b32.xlu0 %v1137, 123
        %v1141 = vpop.permute.xlu0 %1140
        %1142 = vrot.lane.b32.xlu0 %v1139, 123
        %v1143 = vpop.permute.xlu0 %1142
        %1144 = vrot.lane.b32.xlu0 %v1138, 123
        %v1145 = vpop.permute.xlu0 %1144
        %v1149 = vadd.f32 %v1057, %v1141
        %v1150 = vadd.f32 %v1058, %v1143
        %v1151 = vadd.f32 %v1059, %v1145
        %s1152 = sld [smem:[#allocation8 + $0x1a]]
        %v1153 = vstv %s1152
        %v1154 = vmul.f32 %v1153, %v353
        %v1155 = vmul.f32 %v1153, %v354
        %v1156 = vmul.f32 %v1153, %v355
        %v1160 = vrot.slane %v1154, 1
        %v1161 = vrot.slane %v1155, 1
        %v1162 = vsel %vm471, %v1160, %v1161
        %v1163 = vrot.slane %v1156, 1
        %v1164 = vsel %vm471, %v1161, %v1163
        %1165 = vrot.lane.b32.xlu0 %v1162, 123
        %v1166 = vpop.permute.xlu0 %1165
        %1167 = vrot.lane.b32.xlu0 %v1164, 123
        %v1168 = vpop.permute.xlu0 %1167
        %1169 = vrot.lane.b32.xlu0 %v1163, 123
        %v1170 = vpop.permute.xlu0 %1169
        %v1174 = vadd.f32 %v1082, %v1166
        %v1175 = vadd.f32 %v1083, %v1168
        %v1176 = vadd.f32 %v1084, %v1170
        %s1177 = sld [smem:[#allocation8 + $0x21]]
        %v1178 = vstv %s1177
        %v1179 = vmul.f32 %v1178, %v353
        %v1180 = vmul.f32 %v1178, %v354
        %v1181 = vmul.f32 %v1178, %v355
        %v1185 = vrot.slane %v1179, 1
        %v1186 = vrot.slane %v1180, 1
        %v1187 = vsel %vm471, %v1185, %v1186
        %v1188 = vrot.slane %v1181, 1
        %v1189 = vsel %vm471, %v1186, %v1188
        %1190 = vrot.lane.b32.xlu0 %v1187, 123
        %v1191 = vpop.permute.xlu0 %1190
        %1192 = vrot.lane.b32.xlu0 %v1189, 123
        %v1193 = vpop.permute.xlu0 %1192
        %1194 = vrot.lane.b32.xlu0 %v1188, 123
        %v1195 = vpop.permute.xlu0 %1194
        %v1199 = vadd.f32 %v1103, %v1191
        %v1200 = vadd.f32 %v1104, %v1193
        %v1201 = vadd.f32 %v1105, %v1195
        %s1202 = sld [smem:[#allocation8 + $0x28]]
        %v1203 = vstv %s1202
        %v1204 = vmul.f32 %v1203, %v353
        %v1205 = vmul.f32 %v1203, %v354
        %v1206 = vmul.f32 %v1203, %v355
        %v1210 = vrot.slane %v1204, 5
        %v1211 = vrot.slane %v1205, 5
        %v1212 = vsel %vm447, %v1210, %v1211
        %v1213 = vrot.slane %v1206, 5
        %v1214 = vsel %vm447, %v1211, %v1213
        %1215 = vrot.lane.b32.xlu0 %v1212, 123
        %v1216 = vpop.permute.xlu0 %1215
        %1217 = vrot.lane.b32.xlu0 %v1214, 123
        %v1218 = vpop.permute.xlu0 %1217
        %v1221 = vadd.f32 %v1125, %v1216
        %v1222 = vadd.f32 %v1126, %v1218
        %s1223 = sld [smem:[#allocation8 + $0x2f]]
        %v1224 = vstv %s1223
        %v1225 = vmul.f32 %v1224, %v353
        %v1226 = vmul.f32 %v1224, %v354
        %v1227 = vmul.f32 %v1224, %v355
        %v1231 = vrot.slane %v1225, 5
        %v1232 = vrot.slane %v1226, 5
        %v1233 = vsel %vm447, %v1231, %v1232
        %v1234 = vrot.slane %v1227, 5
        %v1235 = vsel %vm447, %v1232, %v1234
        %1236 = vrot.lane.b32.xlu0 %v1233, 123
        %v1237 = vpop.permute.xlu0 %1236
        %1238 = vrot.lane.b32.xlu0 %v1235, 123
        %v1239 = vpop.permute.xlu0 %1238
        %1240 = vrot.lane.b32.xlu0 %v1234, 123
        %v1241 = vpop.permute.xlu0 %1240
        %v1245 = vadd.f32 %v1149, %v1237
        %v1246 = vadd.f32 %v1150, %v1239
        %v1247 = vadd.f32 %v1151, %v1241
        %s1248 = sld [smem:[#allocation8 + $0x6]]
        %v1249 = vstv %s1248
        %v1250 = vmul.f32 %v1249, %v353
        %v1251 = vmul.f32 %v1249, %v354
        %v1254 = vrot.slane %v1250, 6
        %v1255 = vrot.slane %v1251, 6
        %v1256 = vsel %vm612, %v1254, %v1255
        %1257 = vrot.lane.b32.xlu0 %v1254, 122
        %v1258 = vpop.permute.xlu0 %1257
        %1259 = vrot.lane.b32.xlu0 %v1256, 122
        %v1260 = vpop.permute.xlu0 %1259
        %1261 = vrot.lane.b32.xlu0 %v1255, 122
        %v1262 = vpop.permute.xlu0 %1261
        %v1266 = vadd.f32 %v1174, %v1258
        %v1267 = vadd.f32 %v1175, %v1260
        %v1268 = vadd.f32 %v1176, %v1262
        %s1269 = sld [smem:[#allocation8 + $0xd]]
        %v1270 = vstv %s1269
        %v1271 = vmul.f32 %v1270, %v353
        %v1272 = vmul.f32 %v1270, %v354
        %v1273 = vmul.f32 %v1270, %v355
        %v1277 = vrot.slane %v1271, 6
        %v1278 = vrot.slane %v1272, 6
        %v1279 = vsel %vm612, %v1277, %v1278
        %v1280 = vrot.slane %v1273, 6
        %v1281 = vsel %vm612, %v1278, %v1280
        %1282 = vrot.lane.b32.xlu0 %v1277, 122
        %v1283 = vpop.permute.xlu0 %1282
        %1284 = vrot.lane.b32.xlu0 %v1279, 122
        %v1285 = vpop.permute.xlu0 %1284
        %1286 = vrot.lane.b32.xlu0 %v1281, 122
        %v1287 = vpop.permute.xlu0 %1286
        %v1291 = vadd.f32 %v1199, %v1283
        %v1292 = vadd.f32 %v1200, %v1285
        %v1293 = vadd.f32 %v1201, %v1287
        %s1294 = sld [smem:[#allocation8 + $0x14]]
        %v1295 = vstv %s1294
        %v1296 = vmul.f32 %v1295, %v353
        %v1297 = vmul.f32 %v1295, %v354
        %v1298 = vmul.f32 %v1295, %v355
        %v1302 = vrot.slane %v1296, 2
        %v1303 = vrot.slane %v1297, 2
        %v1304 = vsel %vm661, %v1302, %v1303
        %v1305 = vrot.slane %v1298, 2
        %v1306 = vsel %vm661, %v1303, %v1305
        %1307 = vrot.lane.b32.xlu0 %v1304, 122
        %v1308 = vpop.permute.xlu0 %1307
        %1309 = vrot.lane.b32.xlu0 %v1306, 122
        %v1310 = vpop.permute.xlu0 %1309
        %v1313 = vadd.f32 %v1221, %v1308
        %v1314 = vadd.f32 %v1222, %v1310
        %s1315 = sld [smem:[#allocation8 + $0x1b]]
        %v1316 = vstv %s1315
        %v1317 = vmul.f32 %v1316, %v353
        %v1318 = vmul.f32 %v1316, %v354
        %v1319 = vmul.f32 %v1316, %v355
        %v1323 = vrot.slane %v1317, 2
        %v1324 = vrot.slane %v1318, 2
        %v1325 = vsel %vm661, %v1323, %v1324
        %v1326 = vrot.slane %v1319, 2
        %v1327 = vsel %vm661, %v1324, %v1326
        %1328 = vrot.lane.b32.xlu0 %v1325, 122
        %v1329 = vpop.permute.xlu0 %1328
        %1330 = vrot.lane.b32.xlu0 %v1327, 122
        %v1331 = vpop.permute.xlu0 %1330
        %1332 = vrot.lane.b32.xlu0 %v1326, 122
        %v1333 = vpop.permute.xlu0 %1332
        %v1337 = vadd.f32 %v1245, %v1329
        %v1338 = vadd.f32 %v1246, %v1331
        %v1339 = vadd.f32 %v1247, %v1333
        %s1340 = sld [smem:[#allocation8 + $0x22]]
        %v1341 = vstv %s1340
        %v1342 = vmul.f32 %v1341, %v353
        %v1343 = vmul.f32 %v1341, %v354
        %v1344 = vmul.f32 %v1341, %v355
        %v1348 = vrot.slane %v1342, 2
        %v1349 = vrot.slane %v1343, 2
        %v1350 = vsel %vm661, %v1348, %v1349
        %v1351 = vrot.slane %v1344, 2
        %v1352 = vsel %vm661, %v1349, %v1351
        %1353 = vrot.lane.b32.xlu0 %v1350, 122
        %v1354 = vpop.permute.xlu0 %1353
        %1355 = vrot.lane.b32.xlu0 %v1352, 122
        %v1356 = vpop.permute.xlu0 %1355
        %1357 = vrot.lane.b32.xlu0 %v1351, 122
        %v1358 = vpop.permute.xlu0 %1357
        %v1362 = vadd.f32 %v1266, %v1354
        %v1363 = vadd.f32 %v1267, %v1356
        %v1364 = vadd.f32 %v1268, %v1358
        %s1365 = sld [smem:[#allocation8 + $0x29]]
        %v1366 = vstv %s1365
        %v1367 = vmul.f32 %v1366, %v353
        %v1368 = vmul.f32 %v1366, %v354
        %v1369 = vmul.f32 %v1366, %v355
        %v1373 = vrot.slane %v1367, 2
        %v1374 = vrot.slane %v1368, 2
        %v1375 = vsel %vm661, %v1373, %v1374
        %v1376 = vrot.slane %v1369, 2
        %v1377 = vsel %vm661, %v1374, %v1376
        %1378 = vrot.lane.b32.xlu0 %v1375, 122
        %v1379 = vpop.permute.xlu0 %1378
        %1380 = vrot.lane.b32.xlu0 %v1377, 122
        %v1381 = vpop.permute.xlu0 %1380
        %1382 = vrot.lane.b32.xlu0 %v1376, 122
        %v1383 = vpop.permute.xlu0 %1382
        %v1387 = vadd.f32 %v1291, %v1379
        %v1388 = vadd.f32 %v1292, %v1381
        %v1389 = vadd.f32 %v1293, %v1383
        %s1390 = sld [smem:[#allocation8 + $0x30]]
        %v1391 = vstv %s1390
        %v1392 = vmul.f32 %v1391, %v353
        %v1393 = vmul.f32 %v1391, %v354
        %v1394 = vmul.f32 %v1391, %v355
        %v1398 = vrot.slane %v1392, 6
        %v1399 = vrot.slane %v1393, 6
        %v1400 = vsel %vm612, %v1398, %v1399
        %v1401 = vrot.slane %v1394, 6
        %v1402 = vsel %vm612, %v1399, %v1401
        %1403 = vrot.lane.b32.xlu0 %v1400, 122
        %v1404 = vpop.permute.xlu0 %1403
        %1405 = vrot.lane.b32.xlu0 %v1402, 122
        %v1406 = vpop.permute.xlu0 %1405
        %v1409 = vadd.f32 %v1313, %v1404
        %v1410 = vadd.f32 %v1314, %v1406
        %v1411 = vld [vmem:[%s227] sm:$0xff]
        %v1412 = vld [vmem:[%s227 + $0x8] sm:$0xff]
        %v1413 = vld [vmem:[%s227 + $0x10] sm:$0x3f]
        %s1414 = sld [smem:[#allocation8 + $0x31]]
        %v1415 = vstv %s1414
        %v1416 = vmul.f32 %v1415, %v1411
        %v1417 = vmul.f32 %v1415, %v1412
        %v1420 = vrot.slane %v1416, 7
        %v1421 = vrot.slane %v1417, 7
        %v1422 = vsel %vm777, %v1420, %v1421
        %v1426 = vadd.f32 %v1337, %v1420
        %v1427 = vadd.f32 %v1338, %v1422
        %v1428 = vadd.f32 %v1339, %v1421
        %s1429 = sld [smem:[#allocation8 + $0x38]]
        %v1430 = vstv %s1429
        %v1431 = vmul.f32 %v1430, %v1411
        %v1432 = vmul.f32 %v1430, %v1412
        %v1433 = vmul.f32 %v1430, %v1413
        %v1437 = vrot.slane %v1431, 7
        %v1438 = vrot.slane %v1432, 7
        %v1439 = vsel %vm777, %v1437, %v1438
        %v1440 = vrot.slane %v1433, 7
        %v1441 = vsel %vm777, %v1438, %v1440
        %v1445 = vadd.f32 %v1362, %v1437
        %v1446 = vadd.f32 %v1363, %v1439
        %v1447 = vadd.f32 %v1364, %v1441
        %s1448 = sld [smem:[#allocation8 + $0x3f]]
        %v1449 = vstv %s1448
        %v1450 = vmul.f32 %v1449, %v1411
        %v1451 = vmul.f32 %v1449, %v1412
        %v1452 = vmul.f32 %v1449, %v1413
        %v1456 = vrot.slane %v1450, 7
        %v1457 = vrot.slane %v1451, 7
        %v1458 = vsel %vm777, %v1456, %v1457
        %v1459 = vrot.slane %v1452, 7
        %v1460 = vsel %vm777, %v1457, %v1459
        %v1464 = vadd.f32 %v1387, %v1456
        %v1465 = vadd.f32 %v1388, %v1458
        %v1466 = vadd.f32 %v1389, %v1460
        %s1467 = sld [smem:[#allocation8 + $0x46]]
        %v1468 = vstv %s1467
        %v1469 = vmul.f32 %v1468, %v1411
        %v1470 = vmul.f32 %v1468, %v1412
        %v1471 = vmul.f32 %v1468, %v1413
        %v1475 = vrot.slane %v1469, 3
        %v1476 = vrot.slane %v1470, 3
        %v1477 = vsel %vm851, %v1475, %v1476
        %v1478 = vrot.slane %v1471, 3
        %v1479 = vsel %vm851, %v1476, %v1478
        %v1482 = vadd.f32 %v1409, %v1477
        %v1483 = vadd.f32 %v1410, %v1479
        %s1484 = sld [smem:[#allocation8 + $0x4d]]
        %v1485 = vstv %s1484
        %v1486 = vmul.f32 %v1485, %v1411
        %v1487 = vmul.f32 %v1485, %v1412
        %v1488 = vmul.f32 %v1485, %v1413
        %v1492 = vrot.slane %v1486, 3
        %v1493 = vrot.slane %v1487, 3
        %v1494 = vsel %vm851, %v1492, %v1493
        %v1495 = vrot.slane %v1488, 3
        %v1496 = vsel %vm851, %v1493, %v1495
        %v1500 = vadd.f32 %v1426, %v1494
        %v1501 = vadd.f32 %v1427, %v1496
        %v1502 = vadd.f32 %v1428, %v1495
        %s1503 = sld [smem:[#allocation8 + $0x54]]
        %v1504 = vstv %s1503
        %v1505 = vmul.f32 %v1504, %v1411
        %v1506 = vmul.f32 %v1504, %v1412
        %v1507 = vmul.f32 %v1504, %v1413
        %v1511 = vrot.slane %v1505, 3
        %v1512 = vrot.slane %v1506, 3
        %v1513 = vsel %vm851, %v1511, %v1512
        %v1514 = vrot.slane %v1507, 3
        %v1515 = vsel %vm851, %v1512, %v1514
        %v1519 = vadd.f32 %v1445, %v1513
        %v1520 = vadd.f32 %v1446, %v1515
        %v1521 = vadd.f32 %v1447, %v1514
        %s1522 = sld [smem:[#allocation8 + $0x5b]]
        %v1523 = vstv %s1522
        %v1524 = vmul.f32 %v1523, %v1411
        %v1525 = vmul.f32 %v1523, %v1412
        %v1526 = vmul.f32 %v1523, %v1413
        %v1530 = vrot.slane %v1524, 3
        %v1531 = vrot.slane %v1525, 3
        %v1532 = vsel %vm851, %v1530, %v1531
        %v1533 = vrot.slane %v1526, 3
        %v1534 = vsel %vm851, %v1531, %v1533
        %v1538 = vadd.f32 %v1464, %v1532
        %v1539 = vadd.f32 %v1465, %v1534
        %v1540 = vadd.f32 %v1466, %v1533
        %s1541 = sld [smem:[#allocation8 + $0x32]]
        %v1542 = vstv %s1541
        %v1543 = vmul.f32 %v1542, %v1411
        %v1544 = vmul.f32 %v1542, %v1412
        %1547 = vrot.lane.b32.xlu0 %v1543, 127
        %v1548 = vpop.permute.xlu0 %1547
        %1549 = vrot.lane.b32.xlu0 %v1544, 127
        %v1550 = vpop.permute.xlu0 %1549
        %v1553 = vadd.f32 %v1482, %v1548
        %v1554 = vadd.f32 %v1483, %v1550
        %s1555 = sld [smem:[#allocation8 + $0x39]]
        %v1556 = vstv %s1555
        %v1557 = vmul.f32 %v1556, %v1411
        %v1558 = vmul.f32 %v1556, %v1412
        %v1559 = vmul.f32 %v1556, %v1413
        %1563 = vrot.lane.b32.xlu0 %v1557, 127
        %v1564 = vpop.permute.xlu0 %1563
        %1565 = vrot.lane.b32.xlu0 %v1558, 127
        %v1566 = vpop.permute.xlu0 %1565
        %1567 = vrot.lane.b32.xlu0 %v1559, 127
        %v1568 = vpop.permute.xlu0 %1567
        %v1572 = vadd.f32 %v1500, %v1564
        %v1573 = vadd.f32 %v1501, %v1566
        %v1574 = vadd.f32 %v1502, %v1568
        %s1575 = sld [smem:[#allocation8 + $0x40]]
        %v1576 = vstv %s1575
        %v1577 = vmul.f32 %v1576, %v1411
        %v1578 = vmul.f32 %v1576, %v1412
        %v1579 = vmul.f32 %v1576, %v1413
        %1583 = vrot.lane.b32.xlu0 %v1577, 127
        %v1584 = vpop.permute.xlu0 %1583
        %1585 = vrot.lane.b32.xlu0 %v1578, 127
        %v1586 = vpop.permute.xlu0 %1585
        %1587 = vrot.lane.b32.xlu0 %v1579, 127
        %v1588 = vpop.permute.xlu0 %1587
        %v1592 = vadd.f32 %v1519, %v1584
        %v1593 = vadd.f32 %v1520, %v1586
        %v1594 = vadd.f32 %v1521, %v1588
        %s1595 = sld [smem:[#allocation8 + $0x47]]
        %v1596 = vstv %s1595
        %v1597 = vmul.f32 %v1596, %v1411
        %v1598 = vmul.f32 %v1596, %v1412
        %v1599 = vmul.f32 %v1596, %v1413
        %1603 = vrot.lane.b32.xlu0 %v1597, 127
        %v1604 = vpop.permute.xlu0 %1603
        %1605 = vrot.lane.b32.xlu0 %v1598, 127
        %v1606 = vpop.permute.xlu0 %1605
        %1607 = vrot.lane.b32.xlu0 %v1599, 127
        %v1608 = vpop.permute.xlu0 %1607
        %v1612 = vadd.f32 %v1538, %v1604
        %v1613 = vadd.f32 %v1539, %v1606
        %v1614 = vadd.f32 %v1540, %v1608
        %s1615 = sld [smem:[#allocation8 + $0x4e]]
        %v1616 = vstv %s1615
        %v1617 = vmul.f32 %v1616, %v1411
        %v1618 = vmul.f32 %v1616, %v1412
        %v1619 = vmul.f32 %v1616, %v1413
        %v1623 = vrot.slane %v1617, 4
        %v1624 = vrot.slane %v1618, 4
        %v1625 = vsel %vm178, %v1623, %v1624
        %v1626 = vrot.slane %v1619, 4
        %v1627 = vsel %vm178, %v1624, %v1626
        %1628 = vrot.lane.b32.xlu0 %v1625, 127
        %v1629 = vpop.permute.xlu0 %1628
        %1630 = vrot.lane.b32.xlu0 %v1627, 127
        %v1631 = vpop.permute.xlu0 %1630
        %v1634 = vadd.f32 %v1553, %v1629
        %v1635 = vadd.f32 %v1554, %v1631
        %s1636 = sld [smem:[#allocation8 + $0x55]]
        %v1637 = vstv %s1636
        %v1638 = vmul.f32 %v1637, %v1411
        %v1639 = vmul.f32 %v1637, %v1412
        %v1640 = vmul.f32 %v1637, %v1413
        %v1644 = vrot.slane %v1638, 4
        %v1645 = vrot.slane %v1639, 4
        %v1646 = vsel %vm178, %v1644, %v1645
        %v1647 = vrot.slane %v1640, 4
        %v1648 = vsel %vm178, %v1645, %v1647
        %1649 = vrot.lane.b32.xlu0 %v1646, 127
        %v1650 = vpop.permute.xlu0 %1649
        %1651 = vrot.lane.b32.xlu0 %v1648, 127
        %v1652 = vpop.permute.xlu0 %1651
        %1653 = vrot.lane.b32.xlu0 %v1647, 127
        %v1654 = vpop.permute.xlu0 %1653
        %v1658 = vadd.f32 %v1572, %v1650
        %v1659 = vadd.f32 %v1573, %v1652
        %v1660 = vadd.f32 %v1574, %v1654
        %s1661 = sld [smem:[#allocation8 + $0x5c]]
        %v1662 = vstv %s1661
        %v1663 = vmul.f32 %v1662, %v1411
        %v1664 = vmul.f32 %v1662, %v1412
        %v1665 = vmul.f32 %v1662, %v1413
        %v1669 = vrot.slane %v1663, 4
        %v1670 = vrot.slane %v1664, 4
        %v1671 = vsel %vm178, %v1669, %v1670
        %v1672 = vrot.slane %v1665, 4
        %v1673 = vsel %vm178, %v1670, %v1672
        %1674 = vrot.lane.b32.xlu0 %v1671, 127
        %v1675 = vpop.permute.xlu0 %1674
        %1676 = vrot.lane.b32.xlu0 %v1673, 127
        %v1677 = vpop.permute.xlu0 %1676
        %1678 = vrot.lane.b32.xlu0 %v1672, 127
        %v1679 = vpop.permute.xlu0 %1678
        %v1683 = vadd.f32 %v1592, %v1675
        %v1684 = vadd.f32 %v1593, %v1677
        %v1685 = vadd.f32 %v1594, %v1679
        %s1686 = sld [smem:[#allocation8 + $0x33]]
        %v1687 = vstv %s1686
        %v1688 = vmul.f32 %v1687, %v1411
        %v1689 = vmul.f32 %v1687, %v1412
        %v1692 = vrot.slane %v1688, 5
        %v1693 = vrot.slane %v1689, 5
        %v1694 = vsel %vm447, %v1692, %v1693
        %1695 = vrot.lane.b32.xlu0 %v1692, 126
        %v1696 = vpop.permute.xlu0 %1695
        %1697 = vrot.lane.b32.xlu0 %v1694, 126
        %v1698 = vpop.permute.xlu0 %1697
        %1699 = vrot.lane.b32.xlu0 %v1693, 126
        %v1700 = vpop.permute.xlu0 %1699
        %v1704 = vadd.f32 %v1612, %v1696
        %v1705 = vadd.f32 %v1613, %v1698
        %v1706 = vadd.f32 %v1614, %v1700
        %s1707 = sld [smem:[#allocation8 + $0x3a]]
        %v1708 = vstv %s1707
        %v1709 = vmul.f32 %v1708, %v1411
        %v1710 = vmul.f32 %v1708, %v1412
        %v1711 = vmul.f32 %v1708, %v1413
        %v1715 = vrot.slane %v1709, 1
        %v1716 = vrot.slane %v1710, 1
        %v1717 = vsel %vm471, %v1715, %v1716
        %v1718 = vrot.slane %v1711, 1
        %v1719 = vsel %vm471, %v1716, %v1718
        %1720 = vrot.lane.b32.xlu0 %v1717, 126
        %v1721 = vpop.permute.xlu0 %1720
        %1722 = vrot.lane.b32.xlu0 %v1719, 126
        %v1723 = vpop.permute.xlu0 %1722
        %v1726 = vadd.f32 %v1634, %v1721
        %v1727 = vadd.f32 %v1635, %v1723
        %s1728 = sld [smem:[#allocation8 + $0x41]]
        %v1729 = vstv %s1728
        %v1730 = vmul.f32 %v1729, %v1411
        %v1731 = vmul.f32 %v1729, %v1412
        %v1732 = vmul.f32 %v1729, %v1413
        %v1736 = vrot.slane %v1730, 1
        %v1737 = vrot.slane %v1731, 1
        %v1738 = vsel %vm471, %v1736, %v1737
        %v1739 = vrot.slane %v1732, 1
        %v1740 = vsel %vm471, %v1737, %v1739
        %1741 = vrot.lane.b32.xlu0 %v1738, 126
        %v1742 = vpop.permute.xlu0 %1741
        %1743 = vrot.lane.b32.xlu0 %v1740, 126
        %v1744 = vpop.permute.xlu0 %1743
        %1745 = vrot.lane.b32.xlu0 %v1739, 126
        %v1746 = vpop.permute.xlu0 %1745
        %v1750 = vadd.f32 %v1658, %v1742
        %v1751 = vadd.f32 %v1659, %v1744
        %v1752 = vadd.f32 %v1660, %v1746
        %s1753 = sld [smem:[#allocation8 + $0x48]]
        %v1754 = vstv %s1753
        %v1755 = vmul.f32 %v1754, %v1411
        %v1756 = vmul.f32 %v1754, %v1412
        %v1757 = vmul.f32 %v1754, %v1413
        %v1761 = vrot.slane %v1755, 1
        %v1762 = vrot.slane %v1756, 1
        %v1763 = vsel %vm471, %v1761, %v1762
        %v1764 = vrot.slane %v1757, 1
        %v1765 = vsel %vm471, %v1762, %v1764
        %1766 = vrot.lane.b32.xlu0 %v1763, 126
        %v1767 = vpop.permute.xlu0 %1766
        %1768 = vrot.lane.b32.xlu0 %v1765, 126
        %v1769 = vpop.permute.xlu0 %1768
        %1770 = vrot.lane.b32.xlu0 %v1764, 126
        %v1771 = vpop.permute.xlu0 %1770
        %v1775 = vadd.f32 %v1683, %v1767
        %v1776 = vadd.f32 %v1684, %v1769
        %v1777 = vadd.f32 %v1685, %v1771
        %s1778 = sld [smem:[#allocation8 + $0x4f]]
        %v1779 = vstv %s1778
        %v1780 = vmul.f32 %v1779, %v1411
        %v1781 = vmul.f32 %v1779, %v1412
        %v1782 = vmul.f32 %v1779, %v1413
        %v1786 = vrot.slane %v1780, 1
        %v1787 = vrot.slane %v1781, 1
        %v1788 = vsel %vm471, %v1786, %v1787
        %v1789 = vrot.slane %v1782, 1
        %v1790 = vsel %vm471, %v1787, %v1789
        %1791 = vrot.lane.b32.xlu0 %v1788, 126
        %v1792 = vpop.permute.xlu0 %1791
        %1793 = vrot.lane.b32.xlu0 %v1790, 126
        %v1794 = vpop.permute.xlu0 %1793
        %1795 = vrot.lane.b32.xlu0 %v1789, 126
        %v1796 = vpop.permute.xlu0 %1795
        %v1800 = vadd.f32 %v1704, %v1792
        %v1801 = vadd.f32 %v1705, %v1794
        %v1802 = vadd.f32 %v1706, %v1796
        %s1803 = sld [smem:[#allocation8 + $0x56]]
        %v1804 = vstv %s1803
        %v1805 = vmul.f32 %v1804, %v1411
        %v1806 = vmul.f32 %v1804, %v1412
        %v1807 = vmul.f32 %v1804, %v1413
        %v1811 = vrot.slane %v1805, 5
        %v1812 = vrot.slane %v1806, 5
        %v1813 = vsel %vm447, %v1811, %v1812
        %v1814 = vrot.slane %v1807, 5
        %v1815 = vsel %vm447, %v1812, %v1814
        %1816 = vrot.lane.b32.xlu0 %v1813, 126
        %v1817 = vpop.permute.xlu0 %1816
        %1818 = vrot.lane.b32.xlu0 %v1815, 126
        %v1819 = vpop.permute.xlu0 %1818
        %v1822 = vadd.f32 %v1726, %v1817
        %v1823 = vadd.f32 %v1727, %v1819
        %s1824 = sld [smem:[#allocation8 + $0x5d]]
        %v1825 = vstv %s1824
        %v1826 = vmul.f32 %v1825, %v1411
        %v1827 = vmul.f32 %v1825, %v1412
        %v1828 = vmul.f32 %v1825, %v1413
        %v1832 = vrot.slane %v1826, 5
        %v1833 = vrot.slane %v1827, 5
        %v1834 = vsel %vm447, %v1832, %v1833
        %v1835 = vrot.slane %v1828, 5
        %v1836 = vsel %vm447, %v1833, %v1835
        %1837 = vrot.lane.b32.xlu0 %v1834, 126
        %v1838 = vpop.permute.xlu0 %1837
        %1839 = vrot.lane.b32.xlu0 %v1836, 126
        %v1840 = vpop.permute.xlu0 %1839
        %1841 = vrot.lane.b32.xlu0 %v1835, 126
        %v1842 = vpop.permute.xlu0 %1841
        %v1846 = vadd.f32 %v1750, %v1838
        %v1847 = vadd.f32 %v1751, %v1840
        %v1848 = vadd.f32 %v1752, %v1842
        %s1849 = sld [smem:[#allocation8 + $0x34]]
        %v1850 = vstv %s1849
        %v1851 = vmul.f32 %v1850, %v1411
        %v1852 = vmul.f32 %v1850, %v1412
        %v1855 = vrot.slane %v1851, 6
        %v1856 = vrot.slane %v1852, 6
        %v1857 = vsel %vm612, %v1855, %v1856
        %1858 = vrot.lane.b32.xlu0 %v1855, 125
        %v1859 = vpop.permute.xlu0 %1858
        %1860 = vrot.lane.b32.xlu0 %v1857, 125
        %v1861 = vpop.permute.xlu0 %1860
        %1862 = vrot.lane.b32.xlu0 %v1856, 125
        %v1863 = vpop.permute.xlu0 %1862
        %v1867 = vadd.f32 %v1775, %v1859
        %v1868 = vadd.f32 %v1776, %v1861
        %v1869 = vadd.f32 %v1777, %v1863
        %s1870 = sld [smem:[#allocation8 + $0x3b]]
        %v1871 = vstv %s1870
        %v1872 = vmul.f32 %v1871, %v1411
        %v1873 = vmul.f32 %v1871, %v1412
        %v1874 = vmul.f32 %v1871, %v1413
        %v1878 = vrot.slane %v1872, 6
        %v1879 = vrot.slane %v1873, 6
        %v1880 = vsel %vm612, %v1878, %v1879
        %v1881 = vrot.slane %v1874, 6
        %v1882 = vsel %vm612, %v1879, %v1881
        %1883 = vrot.lane.b32.xlu0 %v1878, 125
        %v1884 = vpop.permute.xlu0 %1883
        %1885 = vrot.lane.b32.xlu0 %v1880, 125
        %v1886 = vpop.permute.xlu0 %1885
        %1887 = vrot.lane.b32.xlu0 %v1882, 125
        %v1888 = vpop.permute.xlu0 %1887
        %v1892 = vadd.f32 %v1800, %v1884
        %v1893 = vadd.f32 %v1801, %v1886
        %v1894 = vadd.f32 %v1802, %v1888
        %s1895 = sld [smem:[#allocation8 + $0x42]]
        %v1896 = vstv %s1895
        %v1897 = vmul.f32 %v1896, %v1411
        %v1898 = vmul.f32 %v1896, %v1412
        %v1899 = vmul.f32 %v1896, %v1413
        %v1903 = vrot.slane %v1897, 2
        %v1904 = vrot.slane %v1898, 2
        %v1905 = vsel %vm661, %v1903, %v1904
        %v1906 = vrot.slane %v1899, 2
        %v1907 = vsel %vm661, %v1904, %v1906
        %1908 = vrot.lane.b32.xlu0 %v1905, 125
        %v1909 = vpop.permute.xlu0 %1908
        %1910 = vrot.lane.b32.xlu0 %v1907, 125
        %v1911 = vpop.permute.xlu0 %1910
        %v1914 = vadd.f32 %v1822, %v1909
        %v1915 = vadd.f32 %v1823, %v1911
        %s1916 = sld [smem:[#allocation8 + $0x49]]
        %v1917 = vstv %s1916
        %v1918 = vmul.f32 %v1917, %v1411
        %v1919 = vmul.f32 %v1917, %v1412
        %v1920 = vmul.f32 %v1917, %v1413
        %v1924 = vrot.slane %v1918, 2
        %v1925 = vrot.slane %v1919, 2
        %v1926 = vsel %vm661, %v1924, %v1925
        %v1927 = vrot.slane %v1920, 2
        %v1928 = vsel %vm661, %v1925, %v1927
        %1929 = vrot.lane.b32.xlu0 %v1926, 125
        %v1930 = vpop.permute.xlu0 %1929
        %1931 = vrot.lane.b32.xlu0 %v1928, 125
        %v1932 = vpop.permute.xlu0 %1931
        %1933 = vrot.lane.b32.xlu0 %v1927, 125
        %v1934 = vpop.permute.xlu0 %1933
        %v1938 = vadd.f32 %v1846, %v1930
        %v1939 = vadd.f32 %v1847, %v1932
        %v1940 = vadd.f32 %v1848, %v1934
        %s1941 = sld [smem:[#allocation8 + $0x50]]
        %v1942 = vstv %s1941
        %v1943 = vmul.f32 %v1942, %v1411
        %v1944 = vmul.f32 %v1942, %v1412
        %v1945 = vmul.f32 %v1942, %v1413
        %v1949 = vrot.slane %v1943, 2
        %v1950 = vrot.slane %v1944, 2
        %v1951 = vsel %vm661, %v1949, %v1950
        %v1952 = vrot.slane %v1945, 2
        %v1953 = vsel %vm661, %v1950, %v1952
        %1954 = vrot.lane.b32.xlu0 %v1951, 125
        %v1955 = vpop.permute.xlu0 %1954
        %1956 = vrot.lane.b32.xlu0 %v1953, 125
        %v1957 = vpop.permute.xlu0 %1956
        %1958 = vrot.lane.b32.xlu0 %v1952, 125
        %v1959 = vpop.permute.xlu0 %1958
        %v1963 = vadd.f32 %v1867, %v1955
        %v1964 = vadd.f32 %v1868, %v1957
        %v1965 = vadd.f32 %v1869, %v1959
        %s1966 = sld [smem:[#allocation8 + $0x57]]
        %v1967 = vstv %s1966
        %v1968 = vmul.f32 %v1967, %v1411
        %v1969 = vmul.f32 %v1967, %v1412
        %v1970 = vmul.f32 %v1967, %v1413
        %v1974 = vrot.slane %v1968, 2
        %v1975 = vrot.slane %v1969, 2
        %v1976 = vsel %vm661, %v1974, %v1975
        %v1977 = vrot.slane %v1970, 2
        %v1978 = vsel %vm661, %v1975, %v1977
        %1979 = vrot.lane.b32.xlu0 %v1976, 125
        %v1980 = vpop.permute.xlu0 %1979
        %1981 = vrot.lane.b32.xlu0 %v1978, 125
        %v1982 = vpop.permute.xlu0 %1981
        %1983 = vrot.lane.b32.xlu0 %v1977, 125
        %v1984 = vpop.permute.xlu0 %1983
        %v1988 = vadd.f32 %v1892, %v1980
        %v1989 = vadd.f32 %v1893, %v1982
        %v1990 = vadd.f32 %v1894, %v1984
        %s1991 = sld [smem:[#allocation8 + $0x5e]]
        %v1992 = vstv %s1991
        %v1993 = vmul.f32 %v1992, %v1411
        %v1994 = vmul.f32 %v1992, %v1412
        %v1995 = vmul.f32 %v1992, %v1413
        %v1999 = vrot.slane %v1993, 6
        %v2000 = vrot.slane %v1994, 6
        %v2001 = vsel %vm612, %v1999, %v2000
        %v2002 = vrot.slane %v1995, 6
        %v2003 = vsel %vm612, %v2000, %v2002
        %2004 = vrot.lane.b32.xlu0 %v2001, 125
        %v2005 = vpop.permute.xlu0 %2004
        %2006 = vrot.lane.b32.xlu0 %v2003, 125
        %v2007 = vpop.permute.xlu0 %2006
        %v2010 = vadd.f32 %v1914, %v2005
        %v2011 = vadd.f32 %v1915, %v2007
        %s2012 = sld [smem:[#allocation8 + $0x35]]
        %v2013 = vstv %s2012
        %v2014 = vmul.f32 %v2013, %v1411
        %v2015 = vmul.f32 %v2013, %v1412
        %v2018 = vrot.slane %v2014, 7
        %v2019 = vrot.slane %v2015, 7
        %v2020 = vsel %vm777, %v2018, %v2019
        %2021 = vrot.lane.b32.xlu0 %v2018, 124
        %v2022 = vpop.permute.xlu0 %2021
        %2023 = vrot.lane.b32.xlu0 %v2020, 124
        %v2024 = vpop.permute.xlu0 %2023
        %2025 = vrot.lane.b32.xlu0 %v2019, 124
        %v2026 = vpop.permute.xlu0 %2025
        %v2030 = vadd.f32 %v1938, %v2022
        %v2031 = vadd.f32 %v1939, %v2024
        %v2032 = vadd.f32 %v1940, %v2026
        %s2033 = sld [smem:[#allocation8 + $0x3c]]
        %v2034 = vstv %s2033
        %v2035 = vmul.f32 %v2034, %v1411
        %v2036 = vmul.f32 %v2034, %v1412
        %v2037 = vmul.f32 %v2034, %v1413
        %v2041 = vrot.slane %v2035, 7
        %v2042 = vrot.slane %v2036, 7
        %v2043 = vsel %vm777, %v2041, %v2042
        %v2044 = vrot.slane %v2037, 7
        %v2045 = vsel %vm777, %v2042, %v2044
        %2046 = vrot.lane.b32.xlu0 %v2041, 124
        %v2047 = vpop.permute.xlu0 %2046
        %2048 = vrot.lane.b32.xlu0 %v2043, 124
        %v2049 = vpop.permute.xlu0 %2048
        %2050 = vrot.lane.b32.xlu0 %v2045, 124
        %v2051 = vpop.permute.xlu0 %2050
        %v2055 = vadd.f32 %v1963, %v2047
        %v2056 = vadd.f32 %v1964, %v2049
        %v2057 = vadd.f32 %v1965, %v2051
        %s2058 = sld [smem:[#allocation8 + $0x43]]
        %v2059 = vstv %s2058
        %v2060 = vmul.f32 %v2059, %v1411
        %v2061 = vmul.f32 %v2059, %v1412
        %v2062 = vmul.f32 %v2059, %v1413
        %v2066 = vrot.slane %v2060, 7
        %v2067 = vrot.slane %v2061, 7
        %v2068 = vsel %vm777, %v2066, %v2067
        %v2069 = vrot.slane %v2062, 7
        %v2070 = vsel %vm777, %v2067, %v2069
        %2071 = vrot.lane.b32.xlu0 %v2066, 124
        %v2072 = vpop.permute.xlu0 %2071
        %2073 = vrot.lane.b32.xlu0 %v2068, 124
        %v2074 = vpop.permute.xlu0 %2073
        %2075 = vrot.lane.b32.xlu0 %v2070, 124
        %v2076 = vpop.permute.xlu0 %2075
        %v2080 = vadd.f32 %v1988, %v2072
        %v2081 = vadd.f32 %v1989, %v2074
        %v2082 = vadd.f32 %v1990, %v2076
        %s2083 = sld [smem:[#allocation8 + $0x4a]]
        %v2084 = vstv %s2083
        %v2085 = vmul.f32 %v2084, %v1411
        %v2086 = vmul.f32 %v2084, %v1412
        %v2087 = vmul.f32 %v2084, %v1413
        %v2091 = vrot.slane %v2085, 3
        %v2092 = vrot.slane %v2086, 3
        %v2093 = vsel %vm851, %v2091, %v2092
        %v2094 = vrot.slane %v2087, 3
        %v2095 = vsel %vm851, %v2092, %v2094
        %2096 = vrot.lane.b32.xlu0 %v2093, 124
        %v2097 = vpop.permute.xlu0 %2096
        %2098 = vrot.lane.b32.xlu0 %v2095, 124
        %v2099 = vpop.permute.xlu0 %2098
        %v2102 = vadd.f32 %v2010, %v2097
        %v2103 = vadd.f32 %v2011, %v2099
        %s2104 = sld [smem:[#allocation8 + $0x51]]
        %v2105 = vstv %s2104
        %v2106 = vmul.f32 %v2105, %v1411
        %v2107 = vmul.f32 %v2105, %v1412
        %v2108 = vmul.f32 %v2105, %v1413
        %v2112 = vrot.slane %v2106, 3
        %v2113 = vrot.slane %v2107, 3
        %v2114 = vsel %vm851, %v2112, %v2113
        %v2115 = vrot.slane %v2108, 3
        %v2116 = vsel %vm851, %v2113, %v2115
        %2117 = vrot.lane.b32.xlu0 %v2114, 124
        %v2118 = vpop.permute.xlu0 %2117
        %2119 = vrot.lane.b32.xlu0 %v2116, 124
        %v2120 = vpop.permute.xlu0 %2119
        %2121 = vrot.lane.b32.xlu0 %v2115, 124
        %v2122 = vpop.permute.xlu0 %2121
        %v2126 = vadd.f32 %v2030, %v2118
        %v2127 = vadd.f32 %v2031, %v2120
        %v2128 = vadd.f32 %v2032, %v2122
        %s2129 = sld [smem:[#allocation8 + $0x58]]
        %v2130 = vstv %s2129
        %v2131 = vmul.f32 %v2130, %v1411
        %v2132 = vmul.f32 %v2130, %v1412
        %v2133 = vmul.f32 %v2130, %v1413
        %v2137 = vrot.slane %v2131, 3
        %v2138 = vrot.slane %v2132, 3
        %v2139 = vsel %vm851, %v2137, %v2138
        %v2140 = vrot.slane %v2133, 3
        %v2141 = vsel %vm851, %v2138, %v2140
        %2142 = vrot.lane.b32.xlu0 %v2139, 124
        %v2143 = vpop.permute.xlu0 %2142
        %2144 = vrot.lane.b32.xlu0 %v2141, 124
        %v2145 = vpop.permute.xlu0 %2144
        %2146 = vrot.lane.b32.xlu0 %v2140, 124
        %v2147 = vpop.permute.xlu0 %2146
        %v2151 = vadd.f32 %v2055, %v2143
        %v2152 = vadd.f32 %v2056, %v2145
        %v2153 = vadd.f32 %v2057, %v2147
        %s2154 = sld [smem:[#allocation8 + $0x5f]]
        %v2155 = vstv %s2154
        %v2156 = vmul.f32 %v2155, %v1411
        %v2157 = vmul.f32 %v2155, %v1412
        %v2158 = vmul.f32 %v2155, %v1413
        %v2162 = vrot.slane %v2156, 3
        %v2163 = vrot.slane %v2157, 3
        %v2164 = vsel %vm851, %v2162, %v2163
        %v2165 = vrot.slane %v2158, 3
        %v2166 = vsel %vm851, %v2163, %v2165
        %2167 = vrot.lane.b32.xlu0 %v2164, 124
        %v2168 = vpop.permute.xlu0 %2167
        %2169 = vrot.lane.b32.xlu0 %v2166, 124
        %v2170 = vpop.permute.xlu0 %2169
        %2171 = vrot.lane.b32.xlu0 %v2165, 124
        %v2172 = vpop.permute.xlu0 %2171
        %v2176 = vadd.f32 %v2080, %v2168
        %v2177 = vadd.f32 %v2081, %v2170
        %v2178 = vadd.f32 %v2082, %v2172
        %s2179 = sld [smem:[#allocation8 + $0x36]]
        %v2180 = vstv %s2179
        %v2181 = vmul.f32 %v2180, %v1411
        %v2182 = vmul.f32 %v2180, %v1412
        %2185 = vrot.lane.b32.xlu0 %v2181, 123
        %v2186 = vpop.permute.xlu0 %2185
        %2187 = vrot.lane.b32.xlu0 %v2182, 123
        %v2188 = vpop.permute.xlu0 %2187
        %v2191 = vadd.f32 %v2102, %v2186
        %v2192 = vadd.f32 %v2103, %v2188
        %s2193 = sld [smem:[#allocation8 + $0x3d]]
        %v2194 = vstv %s2193
        %v2195 = vmul.f32 %v2194, %v1411
        %v2196 = vmul.f32 %v2194, %v1412
        %v2197 = vmul.f32 %v2194, %v1413
        %2201 = vrot.lane.b32.xlu0 %v2195, 123
        %v2202 = vpop.permute.xlu0 %2201
        %2203 = vrot.lane.b32.xlu0 %v2196, 123
        %v2204 = vpop.permute.xlu0 %2203
        %2205 = vrot.lane.b32.xlu0 %v2197, 123
        %v2206 = vpop.permute.xlu0 %2205
        %v2210 = vadd.f32 %v2126, %v2202
        %v2211 = vadd.f32 %v2127, %v2204
        %v2212 = vadd.f32 %v2128, %v2206
        %s2213 = sld [smem:[#allocation8 + $0x44]]
        %v2214 = vstv %s2213
        %v2215 = vmul.f32 %v2214, %v1411
        %v2216 = vmul.f32 %v2214, %v1412
        %v2217 = vmul.f32 %v2214, %v1413
        %2221 = vrot.lane.b32.xlu0 %v2215, 123
        %v2222 = vpop.permute.xlu0 %2221
        %2223 = vrot.lane.b32.xlu0 %v2216, 123
        %v2224 = vpop.permute.xlu0 %2223
        %2225 = vrot.lane.b32.xlu0 %v2217, 123
        %v2226 = vpop.permute.xlu0 %2225
        %v2230 = vadd.f32 %v2151, %v2222
        %v2231 = vadd.f32 %v2152, %v2224
        %v2232 = vadd.f32 %v2153, %v2226
        %s2233 = sld [smem:[#allocation8 + $0x4b]]
        %v2234 = vstv %s2233
        %v2235 = vmul.f32 %v2234, %v1411
        %v2236 = vmul.f32 %v2234, %v1412
        %v2237 = vmul.f32 %v2234, %v1413
        %2241 = vrot.lane.b32.xlu0 %v2235, 123
        %v2242 = vpop.permute.xlu0 %2241
        %2243 = vrot.lane.b32.xlu0 %v2236, 123
        %v2244 = vpop.permute.xlu0 %2243
        %2245 = vrot.lane.b32.xlu0 %v2237, 123
        %v2246 = vpop.permute.xlu0 %2245
        %v2250 = vadd.f32 %v2176, %v2242
        %v2251 = vadd.f32 %v2177, %v2244
        %v2252 = vadd.f32 %v2178, %v2246
        %s2253 = sld [smem:[#allocation8 + $0x52]]
        %v2254 = vstv %s2253
        %v2255 = vmul.f32 %v2254, %v1411
        %v2256 = vmul.f32 %v2254, %v1412
        %v2257 = vmul.f32 %v2254, %v1413
        %v2261 = vrot.slane %v2255, 4
        %v2262 = vrot.slane %v2256, 4
        %v2263 = vsel %vm178, %v2261, %v2262
        %v2264 = vrot.slane %v2257, 4
        %v2265 = vsel %vm178, %v2262, %v2264
        %2266 = vrot.lane.b32.xlu0 %v2263, 123
        %v2267 = vpop.permute.xlu0 %2266
        %2268 = vrot.lane.b32.xlu0 %v2265, 123
        %v2269 = vpop.permute.xlu0 %2268
        %v2272 = vadd.f32 %v2191, %v2267
        %v2273 = vadd.f32 %v2192, %v2269
        %s2274 = sld [smem:[#allocation8 + $0x59]]
        %v2275 = vstv %s2274
        %v2276 = vmul.f32 %v2275, %v1411
        %v2277 = vmul.f32 %v2275, %v1412
        %v2278 = vmul.f32 %v2275, %v1413
        %v2282 = vrot.slane %v2276, 4
        %v2283 = vrot.slane %v2277, 4
        %v2284 = vsel %vm178, %v2282, %v2283
        %v2285 = vrot.slane %v2278, 4
        %v2286 = vsel %vm178, %v2283, %v2285
        %2287 = vrot.lane.b32.xlu0 %v2284, 123
        %v2288 = vpop.permute.xlu0 %2287
        %2289 = vrot.lane.b32.xlu0 %v2286, 123
        %v2290 = vpop.permute.xlu0 %2289
        %2291 = vrot.lane.b32.xlu0 %v2285, 123
        %v2292 = vpop.permute.xlu0 %2291
        %v2296 = vadd.f32 %v2210, %v2288
        %v2297 = vadd.f32 %v2211, %v2290
        %v2298 = vadd.f32 %v2212, %v2292
        %s2299 = sld [smem:[#allocation8 + $0x60]]
        %v2300 = vstv %s2299
        %v2301 = vmul.f32 %v2300, %v1411
        %v2302 = vmul.f32 %v2300, %v1412
        %v2303 = vmul.f32 %v2300, %v1413
        %v2307 = vrot.slane %v2301, 4
        %v2308 = vrot.slane %v2302, 4
        %v2309 = vsel %vm178, %v2307, %v2308
        %v2310 = vrot.slane %v2303, 4
        %v2311 = vsel %vm178, %v2308, %v2310
        %2312 = vrot.lane.b32.xlu0 %v2309, 123
        %v2313 = vpop.permute.xlu0 %2312
        %2314 = vrot.lane.b32.xlu0 %v2311, 123
        %v2315 = vpop.permute.xlu0 %2314
        %2316 = vrot.lane.b32.xlu0 %v2310, 123
        %v2317 = vpop.permute.xlu0 %2316
        %v2321 = vadd.f32 %v2230, %v2313
        %v2322 = vadd.f32 %v2231, %v2315
        %v2323 = vadd.f32 %v2232, %v2317
        %s2324 = sld [smem:[#allocation8 + $0x37]]
        %v2325 = vstv %s2324
        %v2326 = vmul.f32 %v2325, %v1411
        %v2327 = vmul.f32 %v2325, %v1412
        %v2330 = vrot.slane %v2326, 5
        %v2331 = vrot.slane %v2327, 5
        %v2332 = vsel %vm447, %v2330, %v2331
        %2333 = vrot.lane.b32.xlu0 %v2330, 122
        %v2334 = vpop.permute.xlu0 %2333
        %2335 = vrot.lane.b32.xlu0 %v2332, 122
        %v2336 = vpop.permute.xlu0 %2335
        %2337 = vrot.lane.b32.xlu0 %v2331, 122
        %v2338 = vpop.permute.xlu0 %2337
        %v2342 = vadd.f32 %v2250, %v2334
        %v2343 = vadd.f32 %v2251, %v2336
        %v2344 = vadd.f32 %v2252, %v2338
        %s2345 = sld [smem:[#allocation8 + $0x3e]]
        %v2346 = vstv %s2345
        %v2347 = vmul.f32 %v2346, %v1411
        %v2348 = vmul.f32 %v2346, %v1412
        %v2349 = vmul.f32 %v2346, %v1413
        %v2353 = vrot.slane %v2347, 1
        %v2354 = vrot.slane %v2348, 1
        %v2355 = vsel %vm471, %v2353, %v2354
        %v2356 = vrot.slane %v2349, 1
        %v2357 = vsel %vm471, %v2354, %v2356
        %2358 = vrot.lane.b32.xlu0 %v2355, 122
        %v2359 = vpop.permute.xlu0 %2358
        %2360 = vrot.lane.b32.xlu0 %v2357, 122
        %v2361 = vpop.permute.xlu0 %2360
        %v2364 = vadd.f32 %v2272, %v2359
        %v2365 = vadd.f32 %v2273, %v2361
        %s2366 = sld [smem:[#allocation8 + $0x45]]
        %v2367 = vstv %s2366
        %v2368 = vmul.f32 %v2367, %v1411
        %v2369 = vmul.f32 %v2367, %v1412
        %v2370 = vmul.f32 %v2367, %v1413
        %v2374 = vrot.slane %v2368, 1
        %v2375 = vrot.slane %v2369, 1
        %v2376 = vsel %vm471, %v2374, %v2375
        %v2377 = vrot.slane %v2370, 1
        %v2378 = vsel %vm471, %v2375, %v2377
        %2379 = vrot.lane.b32.xlu0 %v2376, 122
        %v2380 = vpop.permute.xlu0 %2379
        %2381 = vrot.lane.b32.xlu0 %v2378, 122
        %v2382 = vpop.permute.xlu0 %2381
        %2383 = vrot.lane.b32.xlu0 %v2377, 122
        %v2384 = vpop.permute.xlu0 %2383
        %v2388 = vadd.f32 %v2296, %v2380
        %v2389 = vadd.f32 %v2297, %v2382
        %v2390 = vadd.f32 %v2298, %v2384
        %s2391 = sld [smem:[#allocation8 + $0x4c]]
        %v2392 = vstv %s2391
        %v2393 = vmul.f32 %v2392, %v1411
        %v2394 = vmul.f32 %v2392, %v1412
        %v2395 = vmul.f32 %v2392, %v1413
        %v2399 = vrot.slane %v2393, 1
        %v2400 = vrot.slane %v2394, 1
        %v2401 = vsel %vm471, %v2399, %v2400
        %v2402 = vrot.slane %v2395, 1
        %v2403 = vsel %vm471, %v2400, %v2402
        %2404 = vrot.lane.b32.xlu0 %v2401, 122
        %v2405 = vpop.permute.xlu0 %2404
        %2406 = vrot.lane.b32.xlu0 %v2403, 122
        %v2407 = vpop.permute.xlu0 %2406
        %2408 = vrot.lane.b32.xlu0 %v2402, 122
        %v2409 = vpop.permute.xlu0 %2408
        %v2413 = vadd.f32 %v2321, %v2405
        %v2414 = vadd.f32 %v2322, %v2407
        %v2415 = vadd.f32 %v2323, %v2409
        %s2416 = sld [smem:[#allocation8 + $0x53]]
        %v2417 = vstv %s2416
        %v2418 = vmul.f32 %v2417, %v1411
        %v2419 = vmul.f32 %v2417, %v1412
        %v2420 = vmul.f32 %v2417, %v1413
        %v2424 = vrot.slane %v2418, 1
        %v2425 = vrot.slane %v2419, 1
        %v2426 = vsel %vm471, %v2424, %v2425
        %v2427 = vrot.slane %v2420, 1
        %v2428 = vsel %vm471, %v2425, %v2427
        %2429 = vrot.lane.b32.xlu0 %v2426, 122
        %v2430 = vpop.permute.xlu0 %2429
        %2431 = vrot.lane.b32.xlu0 %v2428, 122
        %v2432 = vpop.permute.xlu0 %2431
        %2433 = vrot.lane.b32.xlu0 %v2427, 122
        %v2434 = vpop.permute.xlu0 %2433
        %v2438 = vadd.f32 %v2342, %v2430
        %v2439 = vadd.f32 %v2343, %v2432
        %v2440 = vadd.f32 %v2344, %v2434
        %s2441 = sld [smem:[#allocation8 + $0x5a]]
        %v2442 = vstv %s2441
        %v2443 = vmul.f32 %v2442, %v1411
        %v2444 = vmul.f32 %v2442, %v1412
        %v2445 = vmul.f32 %v2442, %v1413
        %v2449 = vrot.slane %v2443, 5
        %v2450 = vrot.slane %v2444, 5
        %v2451 = vsel %vm447, %v2449, %v2450
        %v2452 = vrot.slane %v2445, 5
        %v2453 = vsel %vm447, %v2450, %v2452
        %2454 = vrot.lane.b32.xlu0 %v2451, 122
        %v2455 = vpop.permute.xlu0 %2454
        %2456 = vrot.lane.b32.xlu0 %v2453, 122
        %v2457 = vpop.permute.xlu0 %2456
        %v2460 = vadd.f32 %v2364, %v2455
        %v2461 = vadd.f32 %v2365, %v2457
        %s2462 = sld [smem:[#allocation8 + $0x61]]
        %v2463 = vstv %s2462
        %v2464 = vmul.f32 %v2463, %v1411
        %v2465 = vmul.f32 %v2463, %v1412
        %v2466 = vmul.f32 %v2463, %v1413
        %v2470 = vrot.slane %v2464, 5
        %v2471 = vrot.slane %v2465, 5
        %v2472 = vsel %vm447, %v2470, %v2471
        %v2473 = vrot.slane %v2466, 5
        %v2474 = vsel %vm447, %v2471, %v2473
        %2475 = vrot.lane.b32.xlu0 %v2472, 122
        %v2476 = vpop.permute.xlu0 %2475
        %2477 = vrot.lane.b32.xlu0 %v2474, 122
        %v2478 = vpop.permute.xlu0 %2477
        %2479 = vrot.lane.b32.xlu0 %v2473, 122
        %v2480 = vpop.permute.xlu0 %2479
        %v2484 = vadd.f32 %v2388, %v2476
        %v2485 = vadd.f32 %v2389, %v2478
        %v2486 = vadd.f32 %v2390, %v2480
        %v2490 = vrot.slane %v2484, 1
        %v2491 = vrot.slane %v2485, 1
        %v2492 = vsel %vm471, %v2490, %v2491
        %v2493 = vrot.slane %v2486, 1
        %v2494 = vsel %vm471, %v2491, %v2493
        %v2497 = vadd.f32 %v2460, %v2492
        %v2498 = vadd.f32 %v2461, %v2494
        %v2502 = vrot.slane %v2438, 1
        %v2503 = vrot.slane %v2439, 1
        %v2504 = vsel %vm471, %v2502, %v2503
        %v2505 = vrot.slane %v2440, 1
        %v2506 = vsel %vm471, %v2503, %v2505
        %v2510 = vadd.f32 %v2413, %v2504
        %v2511 = vadd.f32 %v2414, %v2506
        %v2512 = vadd.f32 %v2415, %v2505
        %v2516 = vrot.slane %v2510, 2
        %v2517 = vrot.slane %v2511, 2
        %v2518 = vsel %vm661, %v2516, %v2517
        %v2519 = vrot.slane %v2512, 2
        %v2520 = vsel %vm661, %v2517, %v2519
        %v2523 = vadd.f32 %v2497, %v2518
        %v2524 = vadd.f32 %v2498, %v2520
        %v2525 = vmul.f32 %v2523, 0.5
        %v2526 = vmul.f32 %v2524, 0.5
        %v2527 = vtanh.pop %v2525
        %v2528 = vtanh.pop %v2526
        %v2529 = vmul.f32 %v2527, 0.5
        %v2530 = vmul.f32 %v2528, 0.5
        %v2531 = vadd.f32 %v2529, 0.5
        %v2532 = vadd.f32 %v2530, 0.5
        %v2533 = vlaneseq
        %vm2534 = vcmp.ge.s32.totalorder %v2533, 0
        %vm2535 = vcmp.lt.s32.totalorder %v2533, 16
        %vm2536 = vmand %vm2534, %vm2535
        %2537 = vst.msk [vmem:[#allocation3] sm:$0x1] %vm2536, %v2531
        %v2540 = vunpack.c.l.s4 1966171168
        %v2541 = vunpack.c.0.s8 %v2540
        %v2542 = vlaneseq
        %v2543 = vshrl.u32 %v2542, 7
        %v2544 = vsub.s32 %v2541, %v2543
        %v2545 = vrot.slane %v2531, %v2544
        %v2546 = vcombine.high %v2545, %v2545
        %v2548 = vunpack.c.l.s4 1966171168
        %v2549 = vunpack.c.0.s8 %v2548
        %v2550 = vlaneseq
        %v2551 = vshrl.u32 %v2550, 7
        %v2552 = vsub.s32 %v2549, %v2551
        %v2553 = vrot.slane %v2545, %v2552
        %v2555 = vunpack.c.l.s4 1966171168
        %v2556 = vunpack.c.0.s8 %v2555
        %v2557 = vlaneseq
        %v2558 = vshrl.u32 %v2557, 7
        %v2559 = vsub.s32 %v2556, %v2558
        %v2560 = vrot.slane %v2546, %v2559
        %2561 = vrot.lane.b32.xlu0 %v2560, 16
        %v2562 = vpop.permute.xlu0 %2561
        %vm2564 = vcmp.ge.s32.totalorder %v2533, 16
        %vm2565 = vcmp.lt.s32.totalorder %v2533, 32
        %vm2566 = vmand %vm2564, %vm2565
        %2567 = vst.msk [vmem:[#allocation3] sm:$0x1] %vm2566, %v2562
        %v2568 = vcombine.high %v2553, %v2553
        %2569 = vrot.lane.b32.xlu0 %v2568, 32
        %v2570 = vpop.permute.xlu0 %2569
        %vm2572 = vcmp.ge.s32.totalorder %v2533, 32
        %vm2573 = vcmp.lt.s32.totalorder %v2533, 48
        %vm2574 = vmand %vm2572, %vm2573
        %2575 = vst.msk [vmem:[#allocation3] sm:$0x1] %vm2574, %v2570
        %v2576 = vcombine.high %v2560, %v2560
        %2577 = vrot.lane.b32.xlu0 %v2576, 48
        %v2578 = vpop.permute.xlu0 %2577
        %vm2580 = vcmp.ge.s32.totalorder %v2533, 48
        %vm2581 = vcmp.lt.s32.totalorder %v2533, 64
        %vm2582 = vmand %vm2580, %vm2581
        %2583 = vst.msk [vmem:[#allocation3] sm:$0x1] %vm2582, %v2578
        %v2584 = vcombine.high %v2531, %v2531
        %v2586 = vunpack.c.l.s4 1966171168
        %v2587 = vunpack.c.0.s8 %v2586
        %v2588 = vlaneseq
        %v2589 = vshrl.u32 %v2588, 7
        %v2590 = vsub.s32 %v2587, %v2589
        %v2591 = vrot.slane %v2584, %v2590
        %v2593 = vunpack.c.l.s4 1966171168
        %v2594 = vunpack.c.0.s8 %v2593
        %v2595 = vlaneseq
        %v2596 = vshrl.u32 %v2595, 7
        %v2597 = vsub.s32 %v2594, %v2596
        %v2598 = vrot.slane %v2591, %v2597
        %2599 = vrot.lane.b32.xlu0 %v2598, 64
        %v2600 = vpop.permute.xlu0 %2599
        %vm2602 = vcmp.ge.s32.totalorder %v2533, 64
        %vm2603 = vcmp.lt.s32.totalorder %v2533, 80
        %vm2604 = vmand %vm2602, %vm2603
        %2605 = vst.msk [vmem:[#allocation3] sm:$0x1] %vm2604, %v2600
        %v2606 = vcombine.high %v2591, %v2591
        %v2608 = vunpack.c.l.s4 1966171168
        %v2609 = vunpack.c.0.s8 %v2608
        %v2610 = vlaneseq
        %v2611 = vshrl.u32 %v2610, 7
        %v2612 = vsub.s32 %v2609, %v2611
        %v2613 = vrot.slane %v2606, %v2612
        %2614 = vrot.lane.b32.xlu0 %v2613, 80
        %v2615 = vpop.permute.xlu0 %2614
        %vm2617 = vcmp.ge.s32.totalorder %v2533, 80
        %vm2618 = vcmp.lt.s32.totalorder %v2533, 96
        %vm2619 = vmand %vm2617, %vm2618
        %2620 = vst.msk [vmem:[#allocation3] sm:$0x1] %vm2619, %v2615
        %v2621 = vcombine.high %v2598, %v2598
        %2622 = vrot.lane.b32.xlu0 %v2621, 96
        %v2623 = vpop.permute.xlu0 %2622
        %vm2625 = vcmp.ge.s32.totalorder %v2533, 96
        %vm2626 = vcmp.lt.s32.totalorder %v2533, 112
        %vm2627 = vmand %vm2625, %vm2626
        %2628 = vst.msk [vmem:[#allocation3] sm:$0x1] %vm2627, %v2623
        %v2629 = vcombine.high %v2613, %v2613
        %2630 = vrot.lane.b32.xlu0 %v2629, 112
        %v2631 = vpop.permute.xlu0 %2630
        %vm2633 = vcmp.ge.s32.totalorder %v2533, 112
        %vm2634 = vcmp.lt.s32.totalorder %v2533, 128
        %vm2635 = vmand %vm2633, %vm2634
        %2636 = vst.msk [vmem:[#allocation3] sm:$0x1] %vm2635, %v2631
        %2637 = vst.msk [vmem:[#allocation3 + $0x1] sm:$0x1] %vm2536, %v2532
        %v2640 = vunpack.c.l.s4 1966171168
        %v2641 = vunpack.c.0.s8 %v2640
        %v2642 = vlaneseq
        %v2643 = vshrl.u32 %v2642, 7
        %v2644 = vsub.s32 %v2641, %v2643
        %v2645 = vrot.slane %v2532, %v2644
        %v2646 = vcombine.high %v2645, %v2645
        %v2648 = vunpack.c.l.s4 1966171168
        %v2649 = vunpack.c.0.s8 %v2648
        %v2650 = vlaneseq
        %v2651 = vshrl.u32 %v2650, 7
        %v2652 = vsub.s32 %v2649, %v2651
        %v2653 = vrot.slane %v2645, %v2652
        %v2655 = vunpack.c.l.s4 1966171168
        %v2656 = vunpack.c.0.s8 %v2655
        %v2657 = vlaneseq
        %v2658 = vshrl.u32 %v2657, 7
        %v2659 = vsub.s32 %v2656, %v2658
        %v2660 = vrot.slane %v2646, %v2659
        %2661 = vrot.lane.b32.xlu0 %v2660, 16
        %v2662 = vpop.permute.xlu0 %2661
        %2664 = vst.msk [vmem:[#allocation3 + $0x1] sm:$0x1] %vm2566, %v2662
        %v2665 = vcombine.high %v2653, %v2653
        %2666 = vrot.lane.b32.xlu0 %v2665, 32
        %v2667 = vpop.permute.xlu0 %2666
        %2669 = vst.msk [vmem:[#allocation3 + $0x1] sm:$0x1] %vm2574, %v2667
        %v2670 = vcombine.high %v2660, %v2660
        %2671 = vrot.lane.b32.xlu0 %v2670, 48
        %v2672 = vpop.permute.xlu0 %2671
        %2674 = vst.msk [vmem:[#allocation3 + $0x1] sm:$0x1] %vm2582, %v2672
        %v2675 = vcombine.high %v2532, %v2532
        %v2677 = vunpack.c.l.s4 1966171168
        %v2678 = vunpack.c.0.s8 %v2677
        %v2679 = vlaneseq
        %v2680 = vshrl.u32 %v2679, 7
        %v2681 = vsub.s32 %v2678, %v2680
        %v2682 = vrot.slane %v2675, %v2681
        %v2684 = vunpack.c.l.s4 1966171168
        %v2685 = vunpack.c.0.s8 %v2684
        %v2686 = vlaneseq
        %v2687 = vshrl.u32 %v2686, 7
        %v2688 = vsub.s32 %v2685, %v2687
        %v2689 = vrot.slane %v2682, %v2688
        %2690 = vrot.lane.b32.xlu0 %v2689, 64
        %v2691 = vpop.permute.xlu0 %2690
        %2693 = vst.msk [vmem:[#allocation3 + $0x1] sm:$0x1] %vm2604, %v2691
        %v2694 = vcombine.high %v2682, %v2682
        %v2696 = vunpack.c.l.s4 1966171168
        %v2697 = vunpack.c.0.s8 %v2696
        %v2698 = vlaneseq
        %v2699 = vshrl.u32 %v2698, 7
        %v2700 = vsub.s32 %v2697, %v2699
        %v2701 = vrot.slane %v2694, %v2700
        %2702 = vrot.lane.b32.xlu0 %v2701, 80
        %v2703 = vpop.permute.xlu0 %2702
        %2705 = vst.msk [vmem:[#allocation3 + $0x1] sm:$0x1] %vm2619, %v2703
        %v2706 = vcombine.high %v2689, %v2689
        %2707 = vrot.lane.b32.xlu0 %v2706, 96
        %v2708 = vpop.permute.xlu0 %2707
        %2710 = vst.msk [vmem:[#allocation3 + $0x1] sm:$0x1] %vm2627, %v2708
        %v2711 = vcombine.high %v2701, %v2701
        %2712 = vrot.lane.b32.xlu0 %v2711, 112
        %v2713 = vpop.permute.xlu0 %2712
        %2715 = vst.msk [vmem:[#allocation3 + $0x1] sm:$0x1] %vm2635, %v2713
        %v2716 = vld [vmem:[#allocation3] sm:$0x3]
        %v2718 = vlaneseq
        %v2719 = vshrl.u32 %v2718, 7
        %v2720 = vsub.s32 0, %v2719
        %v2721 = vrot.slane %v2716, %v2720
        %v2722 = vlaneseq
        %v2723 = vshrl.u32 %v2722, 7
        %v2724 = vsub.s32 1, %v2723
        %v2725 = vrot.slane %v2716, %v2724
        %v2726 = vld [vmem:[%s148] sm:$0xff]
        %v2727 = vcombine.low %v2721, %v2725
        %v2729 = vmul.f32 %v2726, %v2727
        %2730 = vst [vmem:[%s173] sm:$0xff] %v2729
        %s2731 = sand.u32 %s75, 1
        %s2732 = scalar_lea.sflag [#allocation6], %s2731
        %s2733 = sand.u32 %s75, 1
        %s2734 = smul.addr %s2733, 8
        %s2735 = scalar_lea.vmem [#allocation9], %s2734
        // Predicated region
        $region37: #{tpu_custom_call.1} parent=27 // pred_check
          %p2736 = pneg %p85
        $region38: #{tpu_custom_call.1} parent=27 // pred_check_branch
          %2738 = sbr.rel (%p2736) target = $region40
        $region39: #{tpu_custom_call.1} parent=27 // pred_region
          %s2740 = ssub.s32 128, 128
          %2741 = vsyncadd %s2732, %s2740
          %s2742 = smul.addr %s20, 2
          %s2743 = smul.addr %s2742, 64
          %s2744 = scalar_lea.hbm %s2, %s2743
          %s2746 = sshll.u32 %s2735, 4
          %s2747 = int_to_ptr.vmem [resolvable:$true] %s2746
          %2749 = dma.vmem_to_hbm [thread:$0]  %s2747, 128, %s2744, %s2732
        $region40: #{tpu_custom_call.1} parent=27 // pred_fallthru
          _
      $region28: #{tpu_custom_call.1} parent=5 // pred_fallthru
        _
      %p2750 = scmp.le.s32.totalorder 2, %s15
      // Predicated region
      $region41: #{tpu_custom_call.1} parent=5 // pred_check
        %p2751 = pneg %p2750
      $region42: #{tpu_custom_call.1} parent=5 // pred_check_branch
        %2753 = sbr.rel (%p2751) target = $region44
      $region43: #{tpu_custom_call.1} parent=5 // pred_region
        %s2754 = ssub.s32 %s15, 2
        // Predicated region
        $region45: #{tpu_custom_call.1} parent=43 // pred_check
          %p2755 = pneg %p91
        $region46: #{tpu_custom_call.1} parent=43 // pred_check_branch
          %2757 = sbr.rel (%p2755) target = $region48
        $region47: #{tpu_custom_call.1} parent=43 // pred_region
          %s2758 = sand.u32 %s76, 1
          %s2759 = scalar_lea.sflag [#allocation6], %s2758
          %s2760 = sand.u32 %s76, 1
          %s2761 = smul.addr %s2760, 8
          %s2762 = scalar_lea.vmem [#allocation9], %s2761
          %2763 = dma.done %s2759, 128
        $region48: #{tpu_custom_call.1} parent=43 // pred_fallthru
          _
      $region44: #{tpu_custom_call.1} parent=5 // pred_fallthru
        _
    $region6: #{tpu_custom_call.1} parent=1 // loop_footer
      %s19 = sadd.s32 1, %s15
    $region7: #{tpu_custom_call.1} parent=1 // loop_footer_branch
      %14 = sbr.rel target = $region3
    $region8: #{tpu_custom_call.1} parent=1 // loop_exit
      _
    %2764 = vsyncpa [#allocation5], 1
    %s2765 = scalar_lea.sflag [#allocation5], 1
    %2766 = vsyncpa %s2765, 1
    %2767 = vsyncpa [#allocation6], 1
    %s2768 = scalar_lea.sflag [#allocation6], 1
    %2769 = vsyncpa %s2768, 1
    %2770 = vsyncpa [#allocation7], 1
    %s2771 = scalar_lea.sflag [#allocation7], 1
    %2772 = vsyncpa %s2771, 1

</llo_original>
